<compile_context>
chip_gen: v7x
topology: tpu7x:2x2x1
jax: 0.10.0
libtpu: 0.0.40
codegen_flags: <defaults>
</compile_context>

<pallas_src>
import numpy as np
import jax
import jax.numpy as jnp
from jax import lax
from jax.experimental import pallas as pl
from jax.experimental.pallas import tpu as pltpu

EPS = 1e-5
LANE = 128
MXU_DTYPE = jnp.bfloat16              # MXU operand dtype for layers 2-4 (f32 accum)
SLOPES = (0.1, 0.1, 0.1, 0.01, 0.01)  # LeakyReLU slopes per layer
USE_BN = (True, True, True, True, False)


# ------------------------------ fused kernel ------------------------------- #
def _build_kernel(M5, cpads, slopes):
    C1, C2, C3, C4 = cpads            # lane-padded channel widths of layers 1..4
    s1, s2, s3, s4, s5 = slopes
    f32 = jnp.float32

    def fold_bn(sum_v, sumsq_v, count, g, bt):
        # Train-mode BatchNorm1d (biased variance) folded to one scale/shift FMA.
        # Single-pass E[x^2]-E[x]^2 form, f32 accumulation (cancellation benign here).
        mean = sum_v * (1.0 / count)
        var = sumsq_v * (1.0 / count) - mean * mean
        scale = g * lax.rsqrt(var + EPS)   # padded channels: gamma=0 -> scale=0
        shift = bt - mean * scale          # padded channels: beta=0  -> shift=0
        return scale, shift

    def kernel(x_ref, w1_ref, g1_ref, bt1_ref,
               w2_ref, g2_ref, bt2_ref,
               w3_ref, g3_ref, bt3_ref,
               w4_ref, g4_ref, bt4_ref,
               w5_ref, b5_ref,
               o_ref, a1, a2, a3, a4):

        # ---- layer 1: Conv1d(1 -> 64) as VPU broadcast FMA (MXU-free).  Raw outputs
        # stored position-packed in a1; BN1 stats accumulated in the same pass.
        x = x_ref[...]                               # (M5, 32)
        w1k0 = w1_ref[0:1, :]                        # (1, C1)
        w1k1 = w1_ref[1:2, :]
        sum1 = jnp.zeros((1, C1), f32)
        ssq1 = jnp.zeros((1, C1), f32)
        for j in range(16):
            y = x[:, 2 * j:2 * j + 1] * w1k0 + x[:, 2 * j + 1:2 * j + 2] * w1k1
            sum1 = sum1 + jnp.sum(y, axis=0, keepdims=True)
            ssq1 = ssq1 + jnp.sum(y * y, axis=0, keepdims=True)
            a1[:, j * C1:(j + 1) * C1] = y           # (M5, C1) slot j
        sc, sh = fold_bn(sum1, ssq1, 16.0 * M5, g1_ref[...], bt1_ref[...])
        sc_p = jnp.concatenate([sc, sc], axis=1)     # same per-channel BN for both
        sh_p = jnp.concatenate([sh, sh], axis=1)     # halves of a position pair

        # ---- layers 2-4: one K=2*C MXU dot per output position (bf16 operands,
        # f32 accumulation).  The previous layer's BN + LeakyReLU is applied lazily
        # on the contiguous pair slice right before the dot (no second stats pass).
        def mxu_layer(prev, n_out, Cprev, scp, shp, slope, w_ref, nxt, Cout,
                      g_ref, bt_ref):
            wmat = w_ref[...]                        # (2*Cprev, Cout) bf16, hoisted
            sum_v = jnp.zeros((1, Cout), f32)
            ssq_v = jnp.zeros((1, Cout), f32)
            for j in range(n_out):
                pair = prev[:, 2 * j * Cprev:(2 * j + 2) * Cprev]   # (M5, 2*Cprev)
                z = pair * scp + shp
                z = jnp.where(z >= 0.0, z, slope * z)
                y = jnp.dot(z.astype(MXU_DTYPE), wmat,
                            preferred_element_type=f32)             # (M5, Cout)
                sum_v = sum_v + jnp.sum(y, axis=0, keepdims=True)
                ssq_v = ssq_v + jnp.sum(y * y, axis=0, keepdims=True)
                nxt[:, j * Cout:(j + 1) * Cout] = y
            sc, sh = fold_bn(sum_v, ssq_v, float(n_out) * M5,
                             g_ref[...], bt_ref[...])
            return (jnp.concatenate([sc, sc], axis=1),
                    jnp.concatenate([sh, sh], axis=1))

        sc_p, sh_p = mxu_layer(a1, 8, C1, sc_p, sh_p, s1, w2_ref, a2, C2, g2_ref, bt2_ref)
        sc_p, sh_p = mxu_layer(a2, 4, C2, sc_p, sh_p, s2, w3_ref, a3, C3, g3_ref, bt3_ref)
        sc_p, sh_p = mxu_layer(a3, 2, C3, sc_p, sh_p, s3, w4_ref, a4, C4, g4_ref, bt4_ref)

        # ---- layer 5: Conv1d(256 -> 1), no BN.  VPU multiply + lane reduce, keep bias.
        z = a4[...] * sc_p + sh_p                    # apply BN4 + LeakyReLU(s4) lazily
        z = jnp.where(z >= 0.0, z, s4 * z)
        y = jnp.sum(z * w5_ref[...], axis=1, keepdims=True) + b5_ref[...]   # (M5, 1)
        o_ref[...] = jnp.where(y >= 0.0, y, s5 * y)

    return kernel


# ------------------------------ host helpers ------------------------------- #
def _round_up(x, m):
    return (x + m - 1) // m * m


def _pad2(a, rows, cols):
    r, c = a.shape
    return jnp.pad(a.astype(jnp.float32), ((0, rows - r), (0, cols - c)))


def _pack_pair_weight(w, cin_pad, cout_pad, dtype):
    # w: (Cout, Cin, 2) PyTorch Conv1d layout -> (2*cin_pad, cout_pad):
    # rows [0:cin_pad] = k=0 weights (earlier sample of the pair), rows [cin_pad:] = k=1.
    w0 = _pad2(w[:, :, 0].T, cin_pad, cout_pad)
    w1 = _pad2(w[:, :, 1].T, cin_pad, cout_pad)
    return jnp.concatenate([w0, w1], axis=0).astype(dtype)


def _vmem_limit_bytes(M5, C1, C2, C3, C4):
    f32, bf16 = 4, 2
    scratch = f32 * M5 * (16 * C1 + 8 * C2 + 4 * C3 + 2 * C4)
    io = 2 * f32 * M5 * (LANE + LANE)                 # lane-padded in/out blocks, 2 bufs
    weights = (f32 * 2 * C1 + bf16 * 2 * C1 * C2 + bf16 * 2 * C2 * C3
               + bf16 * 2 * C3 * C4 + f32 * 2 * C4
               + f32 * 2 * (C1 + C2 + C3 + C4) + f32)
    temps = 8 * f32 * M5 * 2 * max(C1, C2, C3, C4)    # live dot/normalize temporaries
    need = scratch + 2 * weights + io + temps + (4 << 20)
    return int(min(max(need, 32 << 20), 128 << 20))


# ------------------------------- full forward ------------------------------ #
@jax.jit
def discriminator_forward(x_ncl, params):
    N, Cin, L = x_ncl.shape
    assert Cin == 1, "kernel specializes the module default in_channel=1"
    assert L % 32 == 0 and L >= 32, "need 5 exact stride-2 halvings"
    (w1, _b1, g1, bt1), (w2, _b2, g2, bt2), (w3, _b3, g3, bt3), \
        (w4, _b4, g4, bt4), (w5, b5, _g5, _bt5) = params

    couts = (w1.shape[0], w2.shape[0], w3.shape[0], w4.shape[0])   # 64, 85, 128, 256
    C1, C2, C3, C4 = (_round_up(c, LANE) for c in couts)
    L5 = L // 32
    M5 = N * L5

    # Window-major input: each row holds the 32 consecutive samples that feed exactly
    # one final output element (no window straddles a row or a batch element).
    xr = x_ncl.reshape(M5, 32).astype(jnp.float32)

    # Packed, lane-padded parameters.  Bias dropped for BN layers (BN cancels it).
    w1p = _pack_pair_weight(w1, 1, C1, jnp.float32)        # (2, C1)      VPU FMA
    w2p = _pack_pair_weight(w2, C1, C2, MXU_DTYPE)         # (2*C1, C2)   bf16 MXU
    w3p = _pack_pair_weight(w3, C2, C3, MXU_DTYPE)
    w4p = _pack_pair_weight(w4, C3, C4, MXU_DTYPE)
    w5p = jnp.concatenate([_pad2(w5[:, :, 0], 1, C4),
                           _pad2(w5[:, :, 1], 1, C4)], axis=1)  # (1, 2*C4) VPU reduce
    g1p, bt1p = _pad2(g1.reshape(1, -1), 1, C1), _pad2(bt1.reshape(1, -1), 1, C1)
    g2p, bt2p = _pad2(g2.reshape(1, -1), 1, C2), _pad2(bt2.reshape(1, -1), 1, C2)
    g3p, bt3p = _pad2(g3.reshape(1, -1), 1, C3), _pad2(bt3.reshape(1, -1), 1, C3)
    g4p, bt4p = _pad2(g4.reshape(1, -1), 1, C4), _pad2(bt4.reshape(1, -1), 1, C4)
    b5p = b5.reshape(1, 1).astype(jnp.float32)

    kernel = _build_kernel(M5, (C1, C2, C3, C4), SLOPES)

    out = pl.pallas_call(
        kernel,
        out_shape=jax.ShapeDtypeStruct((M5, 1), jnp.float32),
        scratch_shapes=[
            pltpu.VMEM((M5, 16 * C1), jnp.float32),   # layer-1 raw outputs, pos-packed
            pltpu.VMEM((M5, 8 * C2), jnp.float32),
            pltpu.VMEM((M5, 4 * C3), jnp.float32),
            pltpu.VMEM((M5, 2 * C4), jnp.float32),
        ],
        compiler_params=pltpu.CompilerParams(
            vmem_limit_bytes=_vmem_limit_bytes(M5, C1, C2, C3, C4)),
    )(xr, w1p, g1p, bt1p, w2p, g2p, bt2p, w3p, g3p, bt3p, w4p, g4p, bt4p, w5p, b5p)

    res = out.reshape(N, 1, L5)                  # back to NCL with C = 1
    return jnp.squeeze(res)                      # matches torch .squeeze()


# --------------------------- pure-JAX reference ----------------------------- #
def reference_forward(x_ncl, params):
    # Layers 2-4 mirror the kernel's bf16 MXU operands (f32 accumulation); BN stats,
    # LeakyReLU and layers 1 & 5 are f32, matching the kernel's numerics.
    x = x_ncl.astype(jnp.float32)
    for li, ((w, b, g, bt), s, ub) in enumerate(zip(params, SLOPES, USE_BN)):
        if li in (1, 2, 3):
            lhs, rhs = x.astype(jnp.bfloat16), w.astype(jnp.bfloat16)
        else:
            lhs, rhs = x, w.astype(jnp.float32)
        y = lax.conv_general_dilated(
            lhs, rhs, window_strides=(2,), padding="VALID",
            dimension_numbers=("NCH", "OIH", "NCH"),
            preferred_element_type=jnp.float32)
        y = y + b[None, :, None]
        if ub:
            mean = jnp.mean(y, axis=(0, 2), keepdims=True)
            var = jnp.mean((y - mean) ** 2, axis=(0, 2), keepdims=True)
            y = (y - mean) / jnp.sqrt(var + EPS) * g[None, :, None] + bt[None, :, None]
        x = jnp.where(y >= 0.0, y, s * y)
    return jnp.squeeze(x)


# ---------------------------- deterministic params -------------------------- #
def make_params(key, in_channel=1, out_channel=256):
    chans = [in_channel, out_channel // 4, out_channel // 3, out_channel // 2,
             out_channel, 1]
    params = []
    for li in range(5):
        cin, cout = chans[li], chans[li + 1]
        key, kw, kb, kg, kbt = jax.random.split(key, 5)
        scale = 1.0 / np.sqrt(cin * 2)
        w = jax.random.uniform(kw, (cout, cin, 2), jnp.float32, -scale, scale)
        b = jax.random.uniform(kb, (cout,), jnp.float32, -scale, scale)
        if USE_BN[li]:
            g = 1.0 + 0.1 * jax.random.normal(kg, (cout,), jnp.float32)
            bt = 0.1 * jax.random.normal(kbt, (cout,), jnp.float32)
        else:
            g = jnp.ones((cout,), jnp.float32)
            bt = jnp.zeros((cout,), jnp.float32)
        params.append((w, b, g, bt))
    return params


if __name__ == "__main__":
    key = jax.random.PRNGKey(0)
    kx, kp = jax.random.split(key)

    N, C_IN, L = 2, 1, 128                       # 5 halvings: 128 -> 4, output (2, 4)
    x = jax.random.normal(kx, (N, C_IN, L), jnp.float32)
    params = make_params(kp, in_channel=C_IN, out_channel=256)

    out = jax.block_until_ready(discriminator_forward(x, params))
    ref = jax.block_until_ready(reference_forward(x, params))

    np.testing.assert_allclose(np.asarray(out), np.asarray(ref), rtol=3e-3, atol=3e-3)
    assert out.shape == (N, L // 32), out.shape

    print("KERNEL_OK")
</pallas_src>

<mosaic_0001>
module attributes {stable_mosaic.version = 11 : i64} {
  func.func @kernel(%arg0: memref<8x32xf32, #tpu.memory_space<vmem>>, %arg1: memref<2x128xf32, #tpu.memory_space<vmem>>, %arg2: memref<1x128xf32, #tpu.memory_space<vmem>>, %arg3: memref<1x128xf32, #tpu.memory_space<vmem>>, %arg4: memref<256x128xbf16, #tpu.memory_space<vmem>>, %arg5: memref<1x128xf32, #tpu.memory_space<vmem>>, %arg6: memref<1x128xf32, #tpu.memory_space<vmem>>, %arg7: memref<256x128xbf16, #tpu.memory_space<vmem>>, %arg8: memref<1x128xf32, #tpu.memory_space<vmem>>, %arg9: memref<1x128xf32, #tpu.memory_space<vmem>>, %arg10: memref<256x256xbf16, #tpu.memory_space<vmem>>, %arg11: memref<1x256xf32, #tpu.memory_space<vmem>>, %arg12: memref<1x256xf32, #tpu.memory_space<vmem>>, %arg13: memref<1x512xf32, #tpu.memory_space<vmem>>, %arg14: memref<1x1xf32, #tpu.memory_space<vmem>>, %arg15: memref<8x1xf32, #tpu.memory_space<vmem>>, %arg16: memref<8x2048xf32, #tpu.memory_space<vmem>>, %arg17: memref<8x1024xf32, #tpu.memory_space<vmem>>, %arg18: memref<8x512xf32, #tpu.memory_space<vmem>>, %arg19: memref<8x512xf32, #tpu.memory_space<vmem>>) attributes {dimension_semantics = [], scalar_prefetch = 0 : i64, scratch_operands = 4 : i64, tpu.core_type = #tpu.core_type<tc>} {
    %c0 = arith.constant 0 : index
    %c0_0 = arith.constant 0 : index
    %0 = vector.load %arg0[%c0, %c0_0] : memref<8x32xf32, #tpu.memory_space<vmem>>, vector<8x32xf32>
    %c0_1 = arith.constant 0 : index
    %c0_2 = arith.constant 0 : index
    %1 = vector.load %arg1[%c0_1, %c0_2] : memref<2x128xf32, #tpu.memory_space<vmem>>, vector<1x128xf32>
    %c1 = arith.constant 1 : index
    %c0_3 = arith.constant 0 : index
    %2 = vector.load %arg1[%c1, %c0_3] : memref<2x128xf32, #tpu.memory_space<vmem>>, vector<1x128xf32>
    %cst = arith.constant 0.000000e+00 : f32
    %3 = vector.broadcast %cst : f32 to vector<1x128xf32>
    %cst_4 = arith.constant 0.000000e+00 : f32
    %4 = vector.broadcast %cst_4 : f32 to vector<1x128xf32>
    %5 = vector.extract_strided_slice %0 {offsets = [0, 0], sizes = [8, 1], strides = [1, 1]} : vector<8x32xf32> to vector<8x1xf32>
    %6 = vector.broadcast %5 : vector<8x1xf32> to vector<8x128xf32>
    %7 = vector.broadcast %1 : vector<1x128xf32> to vector<8x128xf32>
    %8 = arith.mulf %6, %7 : vector<8x128xf32>
    %9 = vector.extract_strided_slice %0 {offsets = [0, 1], sizes = [8, 1], strides = [1, 1]} : vector<8x32xf32> to vector<8x1xf32>
    %10 = vector.broadcast %9 : vector<8x1xf32> to vector<8x128xf32>
    %11 = vector.broadcast %2 : vector<1x128xf32> to vector<8x128xf32>
    %12 = arith.mulf %10, %11 : vector<8x128xf32>
    %13 = arith.addf %8, %12 : vector<8x128xf32>
    %cst_5 = arith.constant dense<0.000000e+00> : vector<128xf32>
    %14 = vector.multi_reduction <add>, %13, %cst_5 [0] : vector<8x128xf32> to vector<128xf32>
    %15 = vector.shape_cast %14 : vector<128xf32> to vector<1x128xf32>
    %16 = arith.addf %3, %15 : vector<1x128xf32>
    %17 = arith.mulf %13, %13 : vector<8x128xf32>
    %cst_6 = arith.constant dense<0.000000e+00> : vector<128xf32>
    %18 = vector.multi_reduction <add>, %17, %cst_6 [0] : vector<8x128xf32> to vector<128xf32>
    %19 = vector.shape_cast %18 : vector<128xf32> to vector<1x128xf32>
    %20 = arith.addf %4, %19 : vector<1x128xf32>
    %c0_7 = arith.constant 0 : index
    %c0_8 = arith.constant 0 : index
    %21 = vector.load %arg16[%c0_7, %c0_8] : memref<8x2048xf32, #tpu.memory_space<vmem>>, vector<8x128xf32>
    tpu.vector_store %arg16[%c0_7, %c0_8], %13 {strides = array<i32>} : memref<8x2048xf32, #tpu.memory_space<vmem>>, vector<8x128xf32>,
    %22 = vector.extract_strided_slice %0 {offsets = [0, 2], sizes = [8, 1], strides = [1, 1]} : vector<8x32xf32> to vector<8x1xf32>
    %23 = vector.broadcast %22 : vector<8x1xf32> to vector<8x128xf32>
    %24 = vector.broadcast %1 : vector<1x128xf32> to vector<8x128xf32>
    %25 = arith.mulf %23, %24 : vector<8x128xf32>
    %26 = vector.extract_strided_slice %0 {offsets = [0, 3], sizes = [8, 1], strides = [1, 1]} : vector<8x32xf32> to vector<8x1xf32>
    %27 = vector.broadcast %26 : vector<8x1xf32> to vector<8x128xf32>
    %28 = vector.broadcast %2 : vector<1x128xf32> to vector<8x128xf32>
    %29 = arith.mulf %27, %28 : vector<8x128xf32>
    %30 = arith.addf %25, %29 : vector<8x128xf32>
    %cst_9 = arith.constant dense<0.000000e+00> : vector<128xf32>
    %31 = vector.multi_reduction <add>, %30, %cst_9 [0] : vector<8x128xf32> to vector<128xf32>
    %32 = vector.shape_cast %31 : vector<128xf32> to vector<1x128xf32>
    %33 = arith.addf %16, %32 : vector<1x128xf32>
    %34 = arith.mulf %30, %30 : vector<8x128xf32>
    %cst_10 = arith.constant dense<0.000000e+00> : vector<128xf32>
    %35 = vector.multi_reduction <add>, %34, %cst_10 [0] : vector<8x128xf32> to vector<128xf32>
    %36 = vector.shape_cast %35 : vector<128xf32> to vector<1x128xf32>
    %37 = arith.addf %20, %36 : vector<1x128xf32>
    %c0_11 = arith.constant 0 : index
    %c128 = arith.constant 128 : index
    %38 = vector.load %arg16[%c0_11, %c128] : memref<8x2048xf32, #tpu.memory_space<vmem>>, vector<8x128xf32>
    tpu.vector_store %arg16[%c0_11, %c128], %30 {strides = array<i32>} : memref<8x2048xf32, #tpu.memory_space<vmem>>, vector<8x128xf32>,
    %39 = vector.extract_strided_slice %0 {offsets = [0, 4], sizes = [8, 1], strides = [1, 1]} : vector<8x32xf32> to vector<8x1xf32>
    %40 = vector.broadcast %39 : vector<8x1xf32> to vector<8x128xf32>
    %41 = vector.broadcast %1 : vector<1x128xf32> to vector<8x128xf32>
    %42 = arith.mulf %40, %41 : vector<8x128xf32>
    %43 = vector.extract_strided_slice %0 {offsets = [0, 5], sizes = [8, 1], strides = [1, 1]} : vector<8x32xf32> to vector<8x1xf32>
    %44 = vector.broadcast %43 : vector<8x1xf32> to vector<8x128xf32>
    %45 = vector.broadcast %2 : vector<1x128xf32> to vector<8x128xf32>
    %46 = arith.mulf %44, %45 : vector<8x128xf32>
    %47 = arith.addf %42, %46 : vector<8x128xf32>
    %cst_12 = arith.constant dense<0.000000e+00> : vector<128xf32>
    %48 = vector.multi_reduction <add>, %47, %cst_12 [0] : vector<8x128xf32> to vector<128xf32>
    %49 = vector.shape_cast %48 : vector<128xf32> to vector<1x128xf32>
    %50 = arith.addf %33, %49 : vector<1x128xf32>
    %51 = arith.mulf %47, %47 : vector<8x128xf32>
    %cst_13 = arith.constant dense<0.000000e+00> : vector<128xf32>
    %52 = vector.multi_reduction <add>, %51, %cst_13 [0] : vector<8x128xf32> to vector<128xf32>
    %53 = vector.shape_cast %52 : vector<128xf32> to vector<1x128xf32>
    %54 = arith.addf %37, %53 : vector<1x128xf32>
    %c0_14 = arith.constant 0 : index
    %c256 = arith.constant 256 : index
    %55 = vector.load %arg16[%c0_14, %c256] : memref<8x2048xf32, #tpu.memory_space<vmem>>, vector<8x128xf32>
    tpu.vector_store %arg16[%c0_14, %c256], %47 {strides = array<i32>} : memref<8x2048xf32, #tpu.memory_space<vmem>>, vector<8x128xf32>,
    %56 = vector.extract_strided_slice %0 {offsets = [0, 6], sizes = [8, 1], strides = [1, 1]} : vector<8x32xf32> to vector<8x1xf32>
    %57 = vector.broadcast %56 : vector<8x1xf32> to vector<8x128xf32>
    %58 = vector.broadcast %1 : vector<1x128xf32> to vector<8x128xf32>
    %59 = arith.mulf %57, %58 : vector<8x128xf32>
    %60 = vector.extract_strided_slice %0 {offsets = [0, 7], sizes = [8, 1], strides = [1, 1]} : vector<8x32xf32> to vector<8x1xf32>
    %61 = vector.broadcast %60 : vector<8x1xf32> to vector<8x128xf32>
    %62 = vector.broadcast %2 : vector<1x128xf32> to vector<8x128xf32>
    %63 = arith.mulf %61, %62 : vector<8x128xf32>
    %64 = arith.addf %59, %63 : vector<8x128xf32>
    %cst_15 = arith.constant dense<0.000000e+00> : vector<128xf32>
    %65 = vector.multi_reduction <add>, %64, %cst_15 [0] : vector<8x128xf32> to vector<128xf32>
    %66 = vector.shape_cast %65 : vector<128xf32> to vector<1x128xf32>
    %67 = arith.addf %50, %66 : vector<1x128xf32>
    %68 = arith.mulf %64, %64 : vector<8x128xf32>
    %cst_16 = arith.constant dense<0.000000e+00> : vector<128xf32>
    %69 = vector.multi_reduction <add>, %68, %cst_16 [0] : vector<8x128xf32> to vector<128xf32>
    %70 = vector.shape_cast %69 : vector<128xf32> to vector<1x128xf32>
    %71 = arith.addf %54, %70 : vector<1x128xf32>
    %c0_17 = arith.constant 0 : index
    %c384 = arith.constant 384 : index
    %72 = vector.load %arg16[%c0_17, %c384] : memref<8x2048xf32, #tpu.memory_space<vmem>>, vector<8x128xf32>
    tpu.vector_store %arg16[%c0_17, %c384], %64 {strides = array<i32>} : memref<8x2048xf32, #tpu.memory_space<vmem>>, vector<8x128xf32>,
    %73 = vector.extract_strided_slice %0 {offsets = [0, 8], sizes = [8, 1], strides = [1, 1]} : vector<8x32xf32> to vector<8x1xf32>
    %74 = vector.broadcast %73 : vector<8x1xf32> to vector<8x128xf32>
    %75 = vector.broadcast %1 : vector<1x128xf32> to vector<8x128xf32>
    %76 = arith.mulf %74, %75 : vector<8x128xf32>
    %77 = vector.extract_strided_slice %0 {offsets = [0, 9], sizes = [8, 1], strides = [1, 1]} : vector<8x32xf32> to vector<8x1xf32>
    %78 = vector.broadcast %77 : vector<8x1xf32> to vector<8x128xf32>
    %79 = vector.broadcast %2 : vector<1x128xf32> to vector<8x128xf32>
    %80 = arith.mulf %78, %79 : vector<8x128xf32>
    %81 = arith.addf %76, %80 : vector<8x128xf32>
    %cst_18 = arith.constant dense<0.000000e+00> : vector<128xf32>
    %82 = vector.multi_reduction <add>, %81, %cst_18 [0] : vector<8x128xf32> to vector<128xf32>
    %83 = vector.shape_cast %82 : vector<128xf32> to vector<1x128xf32>
    %84 = arith.addf %67, %83 : vector<1x128xf32>
    %85 = arith.mulf %81, %81 : vector<8x128xf32>
    %cst_19 = arith.constant dense<0.000000e+00> : vector<128xf32>
    %86 = vector.multi_reduction <add>, %85, %cst_19 [0] : vector<8x128xf32> to vector<128xf32>
    %87 = vector.shape_cast %86 : vector<128xf32> to vector<1x128xf32>
    %88 = arith.addf %71, %87 : vector<1x128xf32>
    %c0_20 = arith.constant 0 : index
    %c512 = arith.constant 512 : index
    %89 = vector.load %arg16[%c0_20, %c512] : memref<8x2048xf32, #tpu.memory_space<vmem>>, vector<8x128xf32>
    tpu.vector_store %arg16[%c0_20, %c512], %81 {strides = array<i32>} : memref<8x2048xf32, #tpu.memory_space<vmem>>, vector<8x128xf32>,
    %90 = vector.extract_strided_slice %0 {offsets = [0, 10], sizes = [8, 1], strides = [1, 1]} : vector<8x32xf32> to vector<8x1xf32>
    %91 = vector.broadcast %90 : vector<8x1xf32> to vector<8x128xf32>
    %92 = vector.broadcast %1 : vector<1x128xf32> to vector<8x128xf32>
    %93 = arith.mulf %91, %92 : vector<8x128xf32>
    %94 = vector.extract_strided_slice %0 {offsets = [0, 11], sizes = [8, 1], strides = [1, 1]} : vector<8x32xf32> to vector<8x1xf32>
    %95 = vector.broadcast %94 : vector<8x1xf32> to vector<8x128xf32>
    %96 = vector.broadcast %2 : vector<1x128xf32> to vector<8x128xf32>
    %97 = arith.mulf %95, %96 : vector<8x128xf32>
    %98 = arith.addf %93, %97 : vector<8x128xf32>
    %cst_21 = arith.constant dense<0.000000e+00> : vector<128xf32>
    %99 = vector.multi_reduction <add>, %98, %cst_21 [0] : vector<8x128xf32> to vector<128xf32>
    %100 = vector.shape_cast %99 : vector<128xf32> to vector<1x128xf32>
    %101 = arith.addf %84, %100 : vector<1x128xf32>
    %102 = arith.mulf %98, %98 : vector<8x128xf32>
    %cst_22 = arith.constant dense<0.000000e+00> : vector<128xf32>
    %103 = vector.multi_reduction <add>, %102, %cst_22 [0] : vector<8x128xf32> to vector<128xf32>
    %104 = vector.shape_cast %103 : vector<128xf32> to vector<1x128xf32>
    %105 = arith.addf %88, %104 : vector<1x128xf32>
    %c0_23 = arith.constant 0 : index
    %c640 = arith.constant 640 : index
    %106 = vector.load %arg16[%c0_23, %c640] : memref<8x2048xf32, #tpu.memory_space<vmem>>, vector<8x128xf32>
    tpu.vector_store %arg16[%c0_23, %c640], %98 {strides = array<i32>} : memref<8x2048xf32, #tpu.memory_space<vmem>>, vector<8x128xf32>,
    %107 = vector.extract_strided_slice %0 {offsets = [0, 12], sizes = [8, 1], strides = [1, 1]} : vector<8x32xf32> to vector<8x1xf32>
    %108 = vector.broadcast %107 : vector<8x1xf32> to vector<8x128xf32>
    %109 = vector.broadcast %1 : vector<1x128xf32> to vector<8x128xf32>
    %110 = arith.mulf %108, %109 : vector<8x128xf32>
    %111 = vector.extract_strided_slice %0 {offsets = [0, 13], sizes = [8, 1], strides = [1, 1]} : vector<8x32xf32> to vector<8x1xf32>
    %112 = vector.broadcast %111 : vector<8x1xf32> to vector<8x128xf32>
    %113 = vector.broadcast %2 : vector<1x128xf32> to vector<8x128xf32>
    %114 = arith.mulf %112, %113 : vector<8x128xf32>
    %115 = arith.addf %110, %114 : vector<8x128xf32>
    %cst_24 = arith.constant dense<0.000000e+00> : vector<128xf32>
    %116 = vector.multi_reduction <add>, %115, %cst_24 [0] : vector<8x128xf32> to vector<128xf32>
    %117 = vector.shape_cast %116 : vector<128xf32> to vector<1x128xf32>
    %118 = arith.addf %101, %117 : vector<1x128xf32>
    %119 = arith.mulf %115, %115 : vector<8x128xf32>
    %cst_25 = arith.constant dense<0.000000e+00> : vector<128xf32>
    %120 = vector.multi_reduction <add>, %119, %cst_25 [0] : vector<8x128xf32> to vector<128xf32>
    %121 = vector.shape_cast %120 : vector<128xf32> to vector<1x128xf32>
    %122 = arith.addf %105, %121 : vector<1x128xf32>
    %c0_26 = arith.constant 0 : index
    %c768 = arith.constant 768 : index
    %123 = vector.load %arg16[%c0_26, %c768] : memref<8x2048xf32, #tpu.memory_space<vmem>>, vector<8x128xf32>
    tpu.vector_store %arg16[%c0_26, %c768], %115 {strides = array<i32>} : memref<8x2048xf32, #tpu.memory_space<vmem>>, vector<8x128xf32>,
    %124 = vector.extract_strided_slice %0 {offsets = [0, 14], sizes = [8, 1], strides = [1, 1]} : vector<8x32xf32> to vector<8x1xf32>
    %125 = vector.broadcast %124 : vector<8x1xf32> to vector<8x128xf32>
    %126 = vector.broadcast %1 : vector<1x128xf32> to vector<8x128xf32>
    %127 = arith.mulf %125, %126 : vector<8x128xf32>
    %128 = vector.extract_strided_slice %0 {offsets = [0, 15], sizes = [8, 1], strides = [1, 1]} : vector<8x32xf32> to vector<8x1xf32>
    %129 = vector.broadcast %128 : vector<8x1xf32> to vector<8x128xf32>
    %130 = vector.broadcast %2 : vector<1x128xf32> to vector<8x128xf32>
    %131 = arith.mulf %129, %130 : vector<8x128xf32>
    %132 = arith.addf %127, %131 : vector<8x128xf32>
    %cst_27 = arith.constant dense<0.000000e+00> : vector<128xf32>
    %133 = vector.multi_reduction <add>, %132, %cst_27 [0] : vector<8x128xf32> to vector<128xf32>
    %134 = vector.shape_cast %133 : vector<128xf32> to vector<1x128xf32>
    %135 = arith.addf %118, %134 : vector<1x128xf32>
    %136 = arith.mulf %132, %132 : vector<8x128xf32>
    %cst_28 = arith.constant dense<0.000000e+00> : vector<128xf32>
    %137 = vector.multi_reduction <add>, %136, %cst_28 [0] : vector<8x128xf32> to vector<128xf32>
    %138 = vector.shape_cast %137 : vector<128xf32> to vector<1x128xf32>
    %139 = arith.addf %122, %138 : vector<1x128xf32>
    %c0_29 = arith.constant 0 : index
    %c896 = arith.constant 896 : index
    %140 = vector.load %arg16[%c0_29, %c896] : memref<8x2048xf32, #tpu.memory_space<vmem>>, vector<8x128xf32>
    tpu.vector_store %arg16[%c0_29, %c896], %132 {strides = array<i32>} : memref<8x2048xf32, #tpu.memory_space<vmem>>, vector<8x128xf32>,
    %141 = vector.extract_strided_slice %0 {offsets = [0, 16], sizes = [8, 1], strides = [1, 1]} : vector<8x32xf32> to vector<8x1xf32>
    %142 = vector.broadcast %141 : vector<8x1xf32> to vector<8x128xf32>
    %143 = vector.broadcast %1 : vector<1x128xf32> to vector<8x128xf32>
    %144 = arith.mulf %142, %143 : vector<8x128xf32>
    %145 = vector.extract_strided_slice %0 {offsets = [0, 17], sizes = [8, 1], strides = [1, 1]} : vector<8x32xf32> to vector<8x1xf32>
    %146 = vector.broadcast %145 : vector<8x1xf32> to vector<8x128xf32>
    %147 = vector.broadcast %2 : vector<1x128xf32> to vector<8x128xf32>
    %148 = arith.mulf %146, %147 : vector<8x128xf32>
    %149 = arith.addf %144, %148 : vector<8x128xf32>
    %cst_30 = arith.constant dense<0.000000e+00> : vector<128xf32>
    %150 = vector.multi_reduction <add>, %149, %cst_30 [0] : vector<8x128xf32> to vector<128xf32>
    %151 = vector.shape_cast %150 : vector<128xf32> to vector<1x128xf32>
    %152 = arith.addf %135, %151 : vector<1x128xf32>
    %153 = arith.mulf %149, %149 : vector<8x128xf32>
    %cst_31 = arith.constant dense<0.000000e+00> : vector<128xf32>
    %154 = vector.multi_reduction <add>, %153, %cst_31 [0] : vector<8x128xf32> to vector<128xf32>
    %155 = vector.shape_cast %154 : vector<128xf32> to vector<1x128xf32>
    %156 = arith.addf %139, %155 : vector<1x128xf32>
    %c0_32 = arith.constant 0 : index
    %c1024 = arith.constant 1024 : index
    %157 = vector.load %arg16[%c0_32, %c1024] : memref<8x2048xf32, #tpu.memory_space<vmem>>, vector<8x128xf32>
    tpu.vector_store %arg16[%c0_32, %c1024], %149 {strides = array<i32>} : memref<8x2048xf32, #tpu.memory_space<vmem>>, vector<8x128xf32>,
    %158 = vector.extract_strided_slice %0 {offsets = [0, 18], sizes = [8, 1], strides = [1, 1]} : vector<8x32xf32> to vector<8x1xf32>
    %159 = vector.broadcast %158 : vector<8x1xf32> to vector<8x128xf32>
    %160 = vector.broadcast %1 : vector<1x128xf32> to vector<8x128xf32>
    %161 = arith.mulf %159, %160 : vector<8x128xf32>
    %162 = vector.extract_strided_slice %0 {offsets = [0, 19], sizes = [8, 1], strides = [1, 1]} : vector<8x32xf32> to vector<8x1xf32>
    %163 = vector.broadcast %162 : vector<8x1xf32> to vector<8x128xf32>
    %164 = vector.broadcast %2 : vector<1x128xf32> to vector<8x128xf32>
    %165 = arith.mulf %163, %164 : vector<8x128xf32>
    %166 = arith.addf %161, %165 : vector<8x128xf32>
    %cst_33 = arith.constant dense<0.000000e+00> : vector<128xf32>
    %167 = vector.multi_reduction <add>, %166, %cst_33 [0] : vector<8x128xf32> to vector<128xf32>
    %168 = vector.shape_cast %167 : vector<128xf32> to vector<1x128xf32>
    %169 = arith.addf %152, %168 : vector<1x128xf32>
    %170 = arith.mulf %166, %166 : vector<8x128xf32>
    %cst_34 = arith.constant dense<0.000000e+00> : vector<128xf32>
    %171 = vector.multi_reduction <add>, %170, %cst_34 [0] : vector<8x128xf32> to vector<128xf32>
    %172 = vector.shape_cast %171 : vector<128xf32> to vector<1x128xf32>
    %173 = arith.addf %156, %172 : vector<1x128xf32>
    %c0_35 = arith.constant 0 : index
    %c1152 = arith.constant 1152 : index
    %174 = vector.load %arg16[%c0_35, %c1152] : memref<8x2048xf32, #tpu.memory_space<vmem>>, vector<8x128xf32>
    tpu.vector_store %arg16[%c0_35, %c1152], %166 {strides = array<i32>} : memref<8x2048xf32, #tpu.memory_space<vmem>>, vector<8x128xf32>,
    %175 = vector.extract_strided_slice %0 {offsets = [0, 20], sizes = [8, 1], strides = [1, 1]} : vector<8x32xf32> to vector<8x1xf32>
    %176 = vector.broadcast %175 : vector<8x1xf32> to vector<8x128xf32>
    %177 = vector.broadcast %1 : vector<1x128xf32> to vector<8x128xf32>
    %178 = arith.mulf %176, %177 : vector<8x128xf32>
    %179 = vector.extract_strided_slice %0 {offsets = [0, 21], sizes = [8, 1], strides = [1, 1]} : vector<8x32xf32> to vector<8x1xf32>
    %180 = vector.broadcast %179 : vector<8x1xf32> to vector<8x128xf32>
    %181 = vector.broadcast %2 : vector<1x128xf32> to vector<8x128xf32>
    %182 = arith.mulf %180, %181 : vector<8x128xf32>
    %183 = arith.addf %178, %182 : vector<8x128xf32>
    %cst_36 = arith.constant dense<0.000000e+00> : vector<128xf32>
    %184 = vector.multi_reduction <add>, %183, %cst_36 [0] : vector<8x128xf32> to vector<128xf32>
    %185 = vector.shape_cast %184 : vector<128xf32> to vector<1x128xf32>
    %186 = arith.addf %169, %185 : vector<1x128xf32>
    %187 = arith.mulf %183, %183 : vector<8x128xf32>
    %cst_37 = arith.constant dense<0.000000e+00> : vector<128xf32>
    %188 = vector.multi_reduction <add>, %187, %cst_37 [0] : vector<8x128xf32> to vector<128xf32>
    %189 = vector.shape_cast %188 : vector<128xf32> to vector<1x128xf32>
    %190 = arith.addf %173, %189 : vector<1x128xf32>
    %c0_38 = arith.constant 0 : index
    %c1280 = arith.constant 1280 : index
    %191 = vector.load %arg16[%c0_38, %c1280] : memref<8x2048xf32, #tpu.memory_space<vmem>>, vector<8x128xf32>
    tpu.vector_store %arg16[%c0_38, %c1280], %183 {strides = array<i32>} : memref<8x2048xf32, #tpu.memory_space<vmem>>, vector<8x128xf32>,
    %192 = vector.extract_strided_slice %0 {offsets = [0, 22], sizes = [8, 1], strides = [1, 1]} : vector<8x32xf32> to vector<8x1xf32>
    %193 = vector.broadcast %192 : vector<8x1xf32> to vector<8x128xf32>
    %194 = vector.broadcast %1 : vector<1x128xf32> to vector<8x128xf32>
    %195 = arith.mulf %193, %194 : vector<8x128xf32>
    %196 = vector.extract_strided_slice %0 {offsets = [0, 23], sizes = [8, 1], strides = [1, 1]} : vector<8x32xf32> to vector<8x1xf32>
    %197 = vector.broadcast %196 : vector<8x1xf32> to vector<8x128xf32>
    %198 = vector.broadcast %2 : vector<1x128xf32> to vector<8x128xf32>
    %199 = arith.mulf %197, %198 : vector<8x128xf32>
    %200 = arith.addf %195, %199 : vector<8x128xf32>
    %cst_39 = arith.constant dense<0.000000e+00> : vector<128xf32>
    %201 = vector.multi_reduction <add>, %200, %cst_39 [0] : vector<8x128xf32> to vector<128xf32>
    %202 = vector.shape_cast %201 : vector<128xf32> to vector<1x128xf32>
    %203 = arith.addf %186, %202 : vector<1x128xf32>
    %204 = arith.mulf %200, %200 : vector<8x128xf32>
    %cst_40 = arith.constant dense<0.000000e+00> : vector<128xf32>
    %205 = vector.multi_reduction <add>, %204, %cst_40 [0] : vector<8x128xf32> to vector<128xf32>
    %206 = vector.shape_cast %205 : vector<128xf32> to vector<1x128xf32>
    %207 = arith.addf %190, %206 : vector<1x128xf32>
    %c0_41 = arith.constant 0 : index
    %c1408 = arith.constant 1408 : index
    %208 = vector.load %arg16[%c0_41, %c1408] : memref<8x2048xf32, #tpu.memory_space<vmem>>, vector<8x128xf32>
    tpu.vector_store %arg16[%c0_41, %c1408], %200 {strides = array<i32>} : memref<8x2048xf32, #tpu.memory_space<vmem>>, vector<8x128xf32>,
    %209 = vector.extract_strided_slice %0 {offsets = [0, 24], sizes = [8, 1], strides = [1, 1]} : vector<8x32xf32> to vector<8x1xf32>
    %210 = vector.broadcast %209 : vector<8x1xf32> to vector<8x128xf32>
    %211 = vector.broadcast %1 : vector<1x128xf32> to vector<8x128xf32>
    %212 = arith.mulf %210, %211 : vector<8x128xf32>
    %213 = vector.extract_strided_slice %0 {offsets = [0, 25], sizes = [8, 1], strides = [1, 1]} : vector<8x32xf32> to vector<8x1xf32>
    %214 = vector.broadcast %213 : vector<8x1xf32> to vector<8x128xf32>
    %215 = vector.broadcast %2 : vector<1x128xf32> to vector<8x128xf32>
    %216 = arith.mulf %214, %215 : vector<8x128xf32>
    %217 = arith.addf %212, %216 : vector<8x128xf32>
    %cst_42 = arith.constant dense<0.000000e+00> : vector<128xf32>
    %218 = vector.multi_reduction <add>, %217, %cst_42 [0] : vector<8x128xf32> to vector<128xf32>
    %219 = vector.shape_cast %218 : vector<128xf32> to vector<1x128xf32>
    %220 = arith.addf %203, %219 : vector<1x128xf32>
    %221 = arith.mulf %217, %217 : vector<8x128xf32>
    %cst_43 = arith.constant dense<0.000000e+00> : vector<128xf32>
    %222 = vector.multi_reduction <add>, %221, %cst_43 [0] : vector<8x128xf32> to vector<128xf32>
    %223 = vector.shape_cast %222 : vector<128xf32> to vector<1x128xf32>
    %224 = arith.addf %207, %223 : vector<1x128xf32>
    %c0_44 = arith.constant 0 : index
    %c1536 = arith.constant 1536 : index
    %225 = vector.load %arg16[%c0_44, %c1536] : memref<8x2048xf32, #tpu.memory_space<vmem>>, vector<8x128xf32>
    tpu.vector_store %arg16[%c0_44, %c1536], %217 {strides = array<i32>} : memref<8x2048xf32, #tpu.memory_space<vmem>>, vector<8x128xf32>,
    %226 = vector.extract_strided_slice %0 {offsets = [0, 26], sizes = [8, 1], strides = [1, 1]} : vector<8x32xf32> to vector<8x1xf32>
    %227 = vector.broadcast %226 : vector<8x1xf32> to vector<8x128xf32>
    %228 = vector.broadcast %1 : vector<1x128xf32> to vector<8x128xf32>
    %229 = arith.mulf %227, %228 : vector<8x128xf32>
    %230 = vector.extract_strided_slice %0 {offsets = [0, 27], sizes = [8, 1], strides = [1, 1]} : vector<8x32xf32> to vector<8x1xf32>
    %231 = vector.broadcast %230 : vector<8x1xf32> to vector<8x128xf32>
    %232 = vector.broadcast %2 : vector<1x128xf32> to vector<8x128xf32>
    %233 = arith.mulf %231, %232 : vector<8x128xf32>
    %234 = arith.addf %229, %233 : vector<8x128xf32>
    %cst_45 = arith.constant dense<0.000000e+00> : vector<128xf32>
    %235 = vector.multi_reduction <add>, %234, %cst_45 [0] : vector<8x128xf32> to vector<128xf32>
    %236 = vector.shape_cast %235 : vector<128xf32> to vector<1x128xf32>
    %237 = arith.addf %220, %236 : vector<1x128xf32>
    %238 = arith.mulf %234, %234 : vector<8x128xf32>
    %cst_46 = arith.constant dense<0.000000e+00> : vector<128xf32>
    %239 = vector.multi_reduction <add>, %238, %cst_46 [0] : vector<8x128xf32> to vector<128xf32>
    %240 = vector.shape_cast %239 : vector<128xf32> to vector<1x128xf32>
    %241 = arith.addf %224, %240 : vector<1x128xf32>
    %c0_47 = arith.constant 0 : index
    %c1664 = arith.constant 1664 : index
    %242 = vector.load %arg16[%c0_47, %c1664] : memref<8x2048xf32, #tpu.memory_space<vmem>>, vector<8x128xf32>
    tpu.vector_store %arg16[%c0_47, %c1664], %234 {strides = array<i32>} : memref<8x2048xf32, #tpu.memory_space<vmem>>, vector<8x128xf32>,
    %243 = vector.extract_strided_slice %0 {offsets = [0, 28], sizes = [8, 1], strides = [1, 1]} : vector<8x32xf32> to vector<8x1xf32>
    %244 = vector.broadcast %243 : vector<8x1xf32> to vector<8x128xf32>
    %245 = vector.broadcast %1 : vector<1x128xf32> to vector<8x128xf32>
    %246 = arith.mulf %244, %245 : vector<8x128xf32>
    %247 = vector.extract_strided_slice %0 {offsets = [0, 29], sizes = [8, 1], strides = [1, 1]} : vector<8x32xf32> to vector<8x1xf32>
    %248 = vector.broadcast %247 : vector<8x1xf32> to vector<8x128xf32>
    %249 = vector.broadcast %2 : vector<1x128xf32> to vector<8x128xf32>
    %250 = arith.mulf %248, %249 : vector<8x128xf32>
    %251 = arith.addf %246, %250 : vector<8x128xf32>
    %cst_48 = arith.constant dense<0.000000e+00> : vector<128xf32>
    %252 = vector.multi_reduction <add>, %251, %cst_48 [0] : vector<8x128xf32> to vector<128xf32>
    %253 = vector.shape_cast %252 : vector<128xf32> to vector<1x128xf32>
    %254 = arith.addf %237, %253 : vector<1x128xf32>
    %255 = arith.mulf %251, %251 : vector<8x128xf32>
    %cst_49 = arith.constant dense<0.000000e+00> : vector<128xf32>
    %256 = vector.multi_reduction <add>, %255, %cst_49 [0] : vector<8x128xf32> to vector<128xf32>
    %257 = vector.shape_cast %256 : vector<128xf32> to vector<1x128xf32>
    %258 = arith.addf %241, %257 : vector<1x128xf32>
    %c0_50 = arith.constant 0 : index
    %c1792 = arith.constant 1792 : index
    %259 = vector.load %arg16[%c0_50, %c1792] : memref<8x2048xf32, #tpu.memory_space<vmem>>, vector<8x128xf32>
    tpu.vector_store %arg16[%c0_50, %c1792], %251 {strides = array<i32>} : memref<8x2048xf32, #tpu.memory_space<vmem>>, vector<8x128xf32>,
    %260 = vector.extract_strided_slice %0 {offsets = [0, 30], sizes = [8, 1], strides = [1, 1]} : vector<8x32xf32> to vector<8x1xf32>
    %261 = vector.broadcast %260 : vector<8x1xf32> to vector<8x128xf32>
    %262 = vector.broadcast %1 : vector<1x128xf32> to vector<8x128xf32>
    %263 = arith.mulf %261, %262 : vector<8x128xf32>
    %264 = vector.extract_strided_slice %0 {offsets = [0, 31], sizes = [8, 1], strides = [1, 1]} : vector<8x32xf32> to vector<8x1xf32>
    %265 = vector.broadcast %264 : vector<8x1xf32> to vector<8x128xf32>
    %266 = vector.broadcast %2 : vector<1x128xf32> to vector<8x128xf32>
    %267 = arith.mulf %265, %266 : vector<8x128xf32>
    %268 = arith.addf %263, %267 : vector<8x128xf32>
    %cst_51 = arith.constant dense<0.000000e+00> : vector<128xf32>
    %269 = vector.multi_reduction <add>, %268, %cst_51 [0] : vector<8x128xf32> to vector<128xf32>
    %270 = vector.shape_cast %269 : vector<128xf32> to vector<1x128xf32>
    %271 = arith.addf %254, %270 : vector<1x128xf32>
    %272 = arith.mulf %268, %268 : vector<8x128xf32>
    %cst_52 = arith.constant dense<0.000000e+00> : vector<128xf32>
    %273 = vector.multi_reduction <add>, %272, %cst_52 [0] : vector<8x128xf32> to vector<128xf32>
    %274 = vector.shape_cast %273 : vector<128xf32> to vector<1x128xf32>
    %275 = arith.addf %258, %274 : vector<1x128xf32>
    %c0_53 = arith.constant 0 : index
    %c1920 = arith.constant 1920 : index
    %276 = vector.load %arg16[%c0_53, %c1920] : memref<8x2048xf32, #tpu.memory_space<vmem>>, vector<8x128xf32>
    tpu.vector_store %arg16[%c0_53, %c1920], %268 {strides = array<i32>} : memref<8x2048xf32, #tpu.memory_space<vmem>>, vector<8x128xf32>,
    %c0_54 = arith.constant 0 : index
    %c0_55 = arith.constant 0 : index
    %277 = vector.load %arg2[%c0_54, %c0_55] : memref<1x128xf32, #tpu.memory_space<vmem>>, vector<1x128xf32>
    %c0_56 = arith.constant 0 : index
    %c0_57 = arith.constant 0 : index
    %278 = vector.load %arg3[%c0_56, %c0_57] : memref<1x128xf32, #tpu.memory_space<vmem>>, vector<1x128xf32>
    %cst_58 = arith.constant 7.812500e-03 : f32
    %279 = vector.broadcast %cst_58 : f32 to vector<1x128xf32>
    %280 = arith.mulf %271, %279 : vector<1x128xf32>
    %cst_59 = arith.constant 7.812500e-03 : f32
    %281 = vector.broadcast %cst_59 : f32 to vector<1x128xf32>
    %282 = arith.mulf %275, %281 : vector<1x128xf32>
    %283 = arith.mulf %280, %280 : vector<1x128xf32>
    %284 = arith.subf %282, %283 : vector<1x128xf32>
    %cst_60 = arith.constant 9.99999974E-6 : f32
    %285 = vector.broadcast %cst_60 : f32 to vector<1x128xf32>
    %286 = arith.addf %284, %285 : vector<1x128xf32>
    %287 = math.rsqrt %286 : vector<1x128xf32>
    %288 = arith.mulf %277, %287 : vector<1x128xf32>
    %289 = arith.mulf %280, %288 : vector<1x128xf32>
    %290 = arith.subf %278, %289 : vector<1x128xf32>
    %291 = tpu.concatenate %288, %288 in 1 : vector<1x128xf32>, vector<1x128xf32> -> vector<1x256xf32>
    %292 = tpu.concatenate %290, %290 in 1 : vector<1x128xf32>, vector<1x128xf32> -> vector<1x256xf32>
    %c0_61 = arith.constant 0 : index
    %c0_62 = arith.constant 0 : index
    %293 = vector.load %arg4[%c0_61, %c0_62] : memref<256x128xbf16, #tpu.memory_space<vmem>>, vector<256x128xbf16>
    %cst_63 = arith.constant 0.000000e+00 : f32
    %294 = vector.broadcast %cst_63 : f32 to vector<1x128xf32>
    %cst_64 = arith.constant 0.000000e+00 : f32
    %295 = vector.broadcast %cst_64 : f32 to vector<1x128xf32>
    %c0_65 = arith.constant 0 : index
    %c0_66 = arith.constant 0 : index
    %296 = vector.load %arg16[%c0_65, %c0_66] : memref<8x2048xf32, #tpu.memory_space<vmem>>, vector<8x256xf32>
    %297 = vector.broadcast %291 : vector<1x256xf32> to vector<8x256xf32>
    %298 = arith.mulf %296, %297 : vector<8x256xf32>
    %299 = vector.broadcast %292 : vector<1x256xf32> to vector<8x256xf32>
    %300 = arith.addf %298, %299 : vector<8x256xf32>
    %cst_67 = arith.constant 0.000000e+00 : f32
    %301 = vector.broadcast %cst_67 : f32 to vector<8x256xf32>
    %302 = arith.cmpf oge, %300, %301 : vector<8x256xf32>
    %cst_68 = arith.constant 1.000000e-01 : f32
    %303 = vector.broadcast %cst_68 : f32 to vector<8x256xf32>
    %304 = arith.mulf %303, %300 : vector<8x256xf32>
    %305 = arith.select %302, %300, %304 : vector<8x256xi1>, vector<8x256xf32>
    %306 = arith.truncf %305 : vector<8x256xf32> to vector<8x256xbf16>
    %cst_69 = arith.constant dense<0.000000e+00> : vector<8x128xf32>
    %307 = tpu.matmul %306, %293, %cst_69 {dimension_numbers = #tpu.dot_dimension_numbers<[1], [0], [0], [1], [0, 0, 1, 1], [], []>} : vector<8x256xbf16>, vector<256x128xbf16>, vector<8x128xf32> -> vector<8x128xf32>
    %cst_70 = arith.constant dense<0.000000e+00> : vector<128xf32>
    %308 = vector.multi_reduction <add>, %307, %cst_70 [0] : vector<8x128xf32> to vector<128xf32>
    %309 = vector.shape_cast %308 : vector<128xf32> to vector<1x128xf32>
    %310 = arith.addf %294, %309 : vector<1x128xf32>
    %311 = arith.mulf %307, %307 : vector<8x128xf32>
    %cst_71 = arith.constant dense<0.000000e+00> : vector<128xf32>
    %312 = vector.multi_reduction <add>, %311, %cst_71 [0] : vector<8x128xf32> to vector<128xf32>
    %313 = vector.shape_cast %312 : vector<128xf32> to vector<1x128xf32>
    %314 = arith.addf %295, %313 : vector<1x128xf32>
    %c0_72 = arith.constant 0 : index
    %c0_73 = arith.constant 0 : index
    %315 = vector.load %arg17[%c0_72, %c0_73] : memref<8x1024xf32, #tpu.memory_space<vmem>>, vector<8x128xf32>
    tpu.vector_store %arg17[%c0_72, %c0_73], %307 {strides = array<i32>} : memref<8x1024xf32, #tpu.memory_space<vmem>>, vector<8x128xf32>,
    %c0_74 = arith.constant 0 : index
    %c256_75 = arith.constant 256 : index
    %316 = vector.load %arg16[%c0_74, %c256_75] : memref<8x2048xf32, #tpu.memory_space<vmem>>, vector<8x256xf32>
    %317 = vector.broadcast %291 : vector<1x256xf32> to vector<8x256xf32>
    %318 = arith.mulf %316, %317 : vector<8x256xf32>
    %319 = vector.broadcast %292 : vector<1x256xf32> to vector<8x256xf32>
    %320 = arith.addf %318, %319 : vector<8x256xf32>
    %cst_76 = arith.constant 0.000000e+00 : f32
    %321 = vector.broadcast %cst_76 : f32 to vector<8x256xf32>
    %322 = arith.cmpf oge, %320, %321 : vector<8x256xf32>
    %cst_77 = arith.constant 1.000000e-01 : f32
    %323 = vector.broadcast %cst_77 : f32 to vector<8x256xf32>
    %324 = arith.mulf %323, %320 : vector<8x256xf32>
    %325 = arith.select %322, %320, %324 : vector<8x256xi1>, vector<8x256xf32>
    %326 = arith.truncf %325 : vector<8x256xf32> to vector<8x256xbf16>
    %cst_78 = arith.constant dense<0.000000e+00> : vector<8x128xf32>
    %327 = tpu.matmul %326, %293, %cst_78 {dimension_numbers = #tpu.dot_dimension_numbers<[1], [0], [0], [1], [0, 0, 1, 1], [], []>} : vector<8x256xbf16>, vector<256x128xbf16>, vector<8x128xf32> -> vector<8x128xf32>
    %cst_79 = arith.constant dense<0.000000e+00> : vector<128xf32>
    %328 = vector.multi_reduction <add>, %327, %cst_79 [0] : vector<8x128xf32> to vector<128xf32>
    %329 = vector.shape_cast %328 : vector<128xf32> to vector<1x128xf32>
    %330 = arith.addf %310, %329 : vector<1x128xf32>
    %331 = arith.mulf %327, %327 : vector<8x128xf32>
    %cst_80 = arith.constant dense<0.000000e+00> : vector<128xf32>
    %332 = vector.multi_reduction <add>, %331, %cst_80 [0] : vector<8x128xf32> to vector<128xf32>
    %333 = vector.shape_cast %332 : vector<128xf32> to vector<1x128xf32>
    %334 = arith.addf %314, %333 : vector<1x128xf32>
    %c0_81 = arith.constant 0 : index
    %c128_82 = arith.constant 128 : index
    %335 = vector.load %arg17[%c0_81, %c128_82] : memref<8x1024xf32, #tpu.memory_space<vmem>>, vector<8x128xf32>
    tpu.vector_store %arg17[%c0_81, %c128_82], %327 {strides = array<i32>} : memref<8x1024xf32, #tpu.memory_space<vmem>>, vector<8x128xf32>,
    %c0_83 = arith.constant 0 : index
    %c512_84 = arith.constant 512 : index
    %336 = vector.load %arg16[%c0_83, %c512_84] : memref<8x2048xf32, #tpu.memory_space<vmem>>, vector<8x256xf32>
    %337 = vector.broadcast %291 : vector<1x256xf32> to vector<8x256xf32>
    %338 = arith.mulf %336, %337 : vector<8x256xf32>
    %339 = vector.broadcast %292 : vector<1x256xf32> to vector<8x256xf32>
    %340 = arith.addf %338, %339 : vector<8x256xf32>
    %cst_85 = arith.constant 0.000000e+00 : f32
    %341 = vector.broadcast %cst_85 : f32 to vector<8x256xf32>
    %342 = arith.cmpf oge, %340, %341 : vector<8x256xf32>
    %cst_86 = arith.constant 1.000000e-01 : f32
    %343 = vector.broadcast %cst_86 : f32 to vector<8x256xf32>
    %344 = arith.mulf %343, %340 : vector<8x256xf32>
    %345 = arith.select %342, %340, %344 : vector<8x256xi1>, vector<8x256xf32>
    %346 = arith.truncf %345 : vector<8x256xf32> to vector<8x256xbf16>
    %cst_87 = arith.constant dense<0.000000e+00> : vector<8x128xf32>
    %347 = tpu.matmul %346, %293, %cst_87 {dimension_numbers = #tpu.dot_dimension_numbers<[1], [0], [0], [1], [0, 0, 1, 1], [], []>} : vector<8x256xbf16>, vector<256x128xbf16>, vector<8x128xf32> -> vector<8x128xf32>
    %cst_88 = arith.constant dense<0.000000e+00> : vector<128xf32>
    %348 = vector.multi_reduction <add>, %347, %cst_88 [0] : vector<8x128xf32> to vector<128xf32>
    %349 = vector.shape_cast %348 : vector<128xf32> to vector<1x128xf32>
    %350 = arith.addf %330, %349 : vector<1x128xf32>
    %351 = arith.mulf %347, %347 : vector<8x128xf32>
    %cst_89 = arith.constant dense<0.000000e+00> : vector<128xf32>
    %352 = vector.multi_reduction <add>, %351, %cst_89 [0] : vector<8x128xf32> to vector<128xf32>
    %353 = vector.shape_cast %352 : vector<128xf32> to vector<1x128xf32>
    %354 = arith.addf %334, %353 : vector<1x128xf32>
    %c0_90 = arith.constant 0 : index
    %c256_91 = arith.constant 256 : index
    %355 = vector.load %arg17[%c0_90, %c256_91] : memref<8x1024xf32, #tpu.memory_space<vmem>>, vector<8x128xf32>
    tpu.vector_store %arg17[%c0_90, %c256_91], %347 {strides = array<i32>} : memref<8x1024xf32, #tpu.memory_space<vmem>>, vector<8x128xf32>,
    %c0_92 = arith.constant 0 : index
    %c768_93 = arith.constant 768 : index
    %356 = vector.load %arg16[%c0_92, %c768_93] : memref<8x2048xf32, #tpu.memory_space<vmem>>, vector<8x256xf32>
    %357 = vector.broadcast %291 : vector<1x256xf32> to vector<8x256xf32>
    %358 = arith.mulf %356, %357 : vector<8x256xf32>
    %359 = vector.broadcast %292 : vector<1x256xf32> to vector<8x256xf32>
    %360 = arith.addf %358, %359 : vector<8x256xf32>
    %cst_94 = arith.constant 0.000000e+00 : f32
    %361 = vector.broadcast %cst_94 : f32 to vector<8x256xf32>
    %362 = arith.cmpf oge, %360, %361 : vector<8x256xf32>
    %cst_95 = arith.constant 1.000000e-01 : f32
    %363 = vector.broadcast %cst_95 : f32 to vector<8x256xf32>
    %364 = arith.mulf %363, %360 : vector<8x256xf32>
    %365 = arith.select %362, %360, %364 : vector<8x256xi1>, vector<8x256xf32>
    %366 = arith.truncf %365 : vector<8x256xf32> to vector<8x256xbf16>
    %cst_96 = arith.constant dense<0.000000e+00> : vector<8x128xf32>
    %367 = tpu.matmul %366, %293, %cst_96 {dimension_numbers = #tpu.dot_dimension_numbers<[1], [0], [0], [1], [0, 0, 1, 1], [], []>} : vector<8x256xbf16>, vector<256x128xbf16>, vector<8x128xf32> -> vector<8x128xf32>
    %cst_97 = arith.constant dense<0.000000e+00> : vector<128xf32>
    %368 = vector.multi_reduction <add>, %367, %cst_97 [0] : vector<8x128xf32> to vector<128xf32>
    %369 = vector.shape_cast %368 : vector<128xf32> to vector<1x128xf32>
    %370 = arith.addf %350, %369 : vector<1x128xf32>
    %371 = arith.mulf %367, %367 : vector<8x128xf32>
    %cst_98 = arith.constant dense<0.000000e+00> : vector<128xf32>
    %372 = vector.multi_reduction <add>, %371, %cst_98 [0] : vector<8x128xf32> to vector<128xf32>
    %373 = vector.shape_cast %372 : vector<128xf32> to vector<1x128xf32>
    %374 = arith.addf %354, %373 : vector<1x128xf32>
    %c0_99 = arith.constant 0 : index
    %c384_100 = arith.constant 384 : index
    %375 = vector.load %arg17[%c0_99, %c384_100] : memref<8x1024xf32, #tpu.memory_space<vmem>>, vector<8x128xf32>
    tpu.vector_store %arg17[%c0_99, %c384_100], %367 {strides = array<i32>} : memref<8x1024xf32, #tpu.memory_space<vmem>>, vector<8x128xf32>,
    %c0_101 = arith.constant 0 : index
    %c1024_102 = arith.constant 1024 : index
    %376 = vector.load %arg16[%c0_101, %c1024_102] : memref<8x2048xf32, #tpu.memory_space<vmem>>, vector<8x256xf32>
    %377 = vector.broadcast %291 : vector<1x256xf32> to vector<8x256xf32>
    %378 = arith.mulf %376, %377 : vector<8x256xf32>
    %379 = vector.broadcast %292 : vector<1x256xf32> to vector<8x256xf32>
    %380 = arith.addf %378, %379 : vector<8x256xf32>
    %cst_103 = arith.constant 0.000000e+00 : f32
    %381 = vector.broadcast %cst_103 : f32 to vector<8x256xf32>
    %382 = arith.cmpf oge, %380, %381 : vector<8x256xf32>
    %cst_104 = arith.constant 1.000000e-01 : f32
    %383 = vector.broadcast %cst_104 : f32 to vector<8x256xf32>
    %384 = arith.mulf %383, %380 : vector<8x256xf32>
    %385 = arith.select %382, %380, %384 : vector<8x256xi1>, vector<8x256xf32>
    %386 = arith.truncf %385 : vector<8x256xf32> to vector<8x256xbf16>
    %cst_105 = arith.constant dense<0.000000e+00> : vector<8x128xf32>
    %387 = tpu.matmul %386, %293, %cst_105 {dimension_numbers = #tpu.dot_dimension_numbers<[1], [0], [0], [1], [0, 0, 1, 1], [], []>} : vector<8x256xbf16>, vector<256x128xbf16>, vector<8x128xf32> -> vector<8x128xf32>
    %cst_106 = arith.constant dense<0.000000e+00> : vector<128xf32>
    %388 = vector.multi_reduction <add>, %387, %cst_106 [0] : vector<8x128xf32> to vector<128xf32>
    %389 = vector.shape_cast %388 : vector<128xf32> to vector<1x128xf32>
    %390 = arith.addf %370, %389 : vector<1x128xf32>
    %391 = arith.mulf %387, %387 : vector<8x128xf32>
    %cst_107 = arith.constant dense<0.000000e+00> : vector<128xf32>
    %392 = vector.multi_reduction <add>, %391, %cst_107 [0] : vector<8x128xf32> to vector<128xf32>
    %393 = vector.shape_cast %392 : vector<128xf32> to vector<1x128xf32>
    %394 = arith.addf %374, %393 : vector<1x128xf32>
    %c0_108 = arith.constant 0 : index
    %c512_109 = arith.constant 512 : index
    %395 = vector.load %arg17[%c0_108, %c512_109] : memref<8x1024xf32, #tpu.memory_space<vmem>>, vector<8x128xf32>
    tpu.vector_store %arg17[%c0_108, %c512_109], %387 {strides = array<i32>} : memref<8x1024xf32, #tpu.memory_space<vmem>>, vector<8x128xf32>,
    %c0_110 = arith.constant 0 : index
    %c1280_111 = arith.constant 1280 : index
    %396 = vector.load %arg16[%c0_110, %c1280_111] : memref<8x2048xf32, #tpu.memory_space<vmem>>, vector<8x256xf32>
    %397 = vector.broadcast %291 : vector<1x256xf32> to vector<8x256xf32>
    %398 = arith.mulf %396, %397 : vector<8x256xf32>
    %399 = vector.broadcast %292 : vector<1x256xf32> to vector<8x256xf32>
    %400 = arith.addf %398, %399 : vector<8x256xf32>
    %cst_112 = arith.constant 0.000000e+00 : f32
    %401 = vector.broadcast %cst_112 : f32 to vector<8x256xf32>
    %402 = arith.cmpf oge, %400, %401 : vector<8x256xf32>
    %cst_113 = arith.constant 1.000000e-01 : f32
    %403 = vector.broadcast %cst_113 : f32 to vector<8x256xf32>
    %404 = arith.mulf %403, %400 : vector<8x256xf32>
    %405 = arith.select %402, %400, %404 : vector<8x256xi1>, vector<8x256xf32>
    %406 = arith.truncf %405 : vector<8x256xf32> to vector<8x256xbf16>
    %cst_114 = arith.constant dense<0.000000e+00> : vector<8x128xf32>
    %407 = tpu.matmul %406, %293, %cst_114 {dimension_numbers = #tpu.dot_dimension_numbers<[1], [0], [0], [1], [0, 0, 1, 1], [], []>} : vector<8x256xbf16>, vector<256x128xbf16>, vector<8x128xf32> -> vector<8x128xf32>
    %cst_115 = arith.constant dense<0.000000e+00> : vector<128xf32>
    %408 = vector.multi_reduction <add>, %407, %cst_115 [0] : vector<8x128xf32> to vector<128xf32>
    %409 = vector.shape_cast %408 : vector<128xf32> to vector<1x128xf32>
    %410 = arith.addf %390, %409 : vector<1x128xf32>
    %411 = arith.mulf %407, %407 : vector<8x128xf32>
    %cst_116 = arith.constant dense<0.000000e+00> : vector<128xf32>
    %412 = vector.multi_reduction <add>, %411, %cst_116 [0] : vector<8x128xf32> to vector<128xf32>
    %413 = vector.shape_cast %412 : vector<128xf32> to vector<1x128xf32>
    %414 = arith.addf %394, %413 : vector<1x128xf32>
    %c0_117 = arith.constant 0 : index
    %c640_118 = arith.constant 640 : index
    %415 = vector.load %arg17[%c0_117, %c640_118] : memref<8x1024xf32, #tpu.memory_space<vmem>>, vector<8x128xf32>
    tpu.vector_store %arg17[%c0_117, %c640_118], %407 {strides = array<i32>} : memref<8x1024xf32, #tpu.memory_space<vmem>>, vector<8x128xf32>,
    %c0_119 = arith.constant 0 : index
    %c1536_120 = arith.constant 1536 : index
    %416 = vector.load %arg16[%c0_119, %c1536_120] : memref<8x2048xf32, #tpu.memory_space<vmem>>, vector<8x256xf32>
    %417 = vector.broadcast %291 : vector<1x256xf32> to vector<8x256xf32>
    %418 = arith.mulf %416, %417 : vector<8x256xf32>
    %419 = vector.broadcast %292 : vector<1x256xf32> to vector<8x256xf32>
    %420 = arith.addf %418, %419 : vector<8x256xf32>
    %cst_121 = arith.constant 0.000000e+00 : f32
    %421 = vector.broadcast %cst_121 : f32 to vector<8x256xf32>
    %422 = arith.cmpf oge, %420, %421 : vector<8x256xf32>
    %cst_122 = arith.constant 1.000000e-01 : f32
    %423 = vector.broadcast %cst_122 : f32 to vector<8x256xf32>
    %424 = arith.mulf %423, %420 : vector<8x256xf32>
    %425 = arith.select %422, %420, %424 : vector<8x256xi1>, vector<8x256xf32>
    %426 = arith.truncf %425 : vector<8x256xf32> to vector<8x256xbf16>
    %cst_123 = arith.constant dense<0.000000e+00> : vector<8x128xf32>
    %427 = tpu.matmul %426, %293, %cst_123 {dimension_numbers = #tpu.dot_dimension_numbers<[1], [0], [0], [1], [0, 0, 1, 1], [], []>} : vector<8x256xbf16>, vector<256x128xbf16>, vector<8x128xf32> -> vector<8x128xf32>
    %cst_124 = arith.constant dense<0.000000e+00> : vector<128xf32>
    %428 = vector.multi_reduction <add>, %427, %cst_124 [0] : vector<8x128xf32> to vector<128xf32>
    %429 = vector.shape_cast %428 : vector<128xf32> to vector<1x128xf32>
    %430 = arith.addf %410, %429 : vector<1x128xf32>
    %431 = arith.mulf %427, %427 : vector<8x128xf32>
    %cst_125 = arith.constant dense<0.000000e+00> : vector<128xf32>
    %432 = vector.multi_reduction <add>, %431, %cst_125 [0] : vector<8x128xf32> to vector<128xf32>
    %433 = vector.shape_cast %432 : vector<128xf32> to vector<1x128xf32>
    %434 = arith.addf %414, %433 : vector<1x128xf32>
    %c0_126 = arith.constant 0 : index
    %c768_127 = arith.constant 768 : index
    %435 = vector.load %arg17[%c0_126, %c768_127] : memref<8x1024xf32, #tpu.memory_space<vmem>>, vector<8x128xf32>
    tpu.vector_store %arg17[%c0_126, %c768_127], %427 {strides = array<i32>} : memref<8x1024xf32, #tpu.memory_space<vmem>>, vector<8x128xf32>,
    %c0_128 = arith.constant 0 : index
    %c1792_129 = arith.constant 1792 : index
    %436 = vector.load %arg16[%c0_128, %c1792_129] : memref<8x2048xf32, #tpu.memory_space<vmem>>, vector<8x256xf32>
    %437 = vector.broadcast %291 : vector<1x256xf32> to vector<8x256xf32>
    %438 = arith.mulf %436, %437 : vector<8x256xf32>
    %439 = vector.broadcast %292 : vector<1x256xf32> to vector<8x256xf32>
    %440 = arith.addf %438, %439 : vector<8x256xf32>
    %cst_130 = arith.constant 0.000000e+00 : f32
    %441 = vector.broadcast %cst_130 : f32 to vector<8x256xf32>
    %442 = arith.cmpf oge, %440, %441 : vector<8x256xf32>
    %cst_131 = arith.constant 1.000000e-01 : f32
    %443 = vector.broadcast %cst_131 : f32 to vector<8x256xf32>
    %444 = arith.mulf %443, %440 : vector<8x256xf32>
    %445 = arith.select %442, %440, %444 : vector<8x256xi1>, vector<8x256xf32>
    %446 = arith.truncf %445 : vector<8x256xf32> to vector<8x256xbf16>
    %cst_132 = arith.constant dense<0.000000e+00> : vector<8x128xf32>
    %447 = tpu.matmul %446, %293, %cst_132 {dimension_numbers = #tpu.dot_dimension_numbers<[1], [0], [0], [1], [0, 0, 1, 1], [], []>} : vector<8x256xbf16>, vector<256x128xbf16>, vector<8x128xf32> -> vector<8x128xf32>
    %cst_133 = arith.constant dense<0.000000e+00> : vector<128xf32>
    %448 = vector.multi_reduction <add>, %447, %cst_133 [0] : vector<8x128xf32> to vector<128xf32>
    %449 = vector.shape_cast %448 : vector<128xf32> to vector<1x128xf32>
    %450 = arith.addf %430, %449 : vector<1x128xf32>
    %451 = arith.mulf %447, %447 : vector<8x128xf32>
    %cst_134 = arith.constant dense<0.000000e+00> : vector<128xf32>
    %452 = vector.multi_reduction <add>, %451, %cst_134 [0] : vector<8x128xf32> to vector<128xf32>
    %453 = vector.shape_cast %452 : vector<128xf32> to vector<1x128xf32>
    %454 = arith.addf %434, %453 : vector<1x128xf32>
    %c0_135 = arith.constant 0 : index
    %c896_136 = arith.constant 896 : index
    %455 = vector.load %arg17[%c0_135, %c896_136] : memref<8x1024xf32, #tpu.memory_space<vmem>>, vector<8x128xf32>
    tpu.vector_store %arg17[%c0_135, %c896_136], %447 {strides = array<i32>} : memref<8x1024xf32, #tpu.memory_space<vmem>>, vector<8x128xf32>,
    %c0_137 = arith.constant 0 : index
    %c0_138 = arith.constant 0 : index
    %456 = vector.load %arg5[%c0_137, %c0_138] : memref<1x128xf32, #tpu.memory_space<vmem>>, vector<1x128xf32>
    %c0_139 = arith.constant 0 : index
    %c0_140 = arith.constant 0 : index
    %457 = vector.load %arg6[%c0_139, %c0_140] : memref<1x128xf32, #tpu.memory_space<vmem>>, vector<1x128xf32>
    %cst_141 = arith.constant 1.562500e-02 : f32
    %458 = vector.broadcast %cst_141 : f32 to vector<1x128xf32>
    %459 = arith.mulf %450, %458 : vector<1x128xf32>
    %cst_142 = arith.constant 1.562500e-02 : f32
    %460 = vector.broadcast %cst_142 : f32 to vector<1x128xf32>
    %461 = arith.mulf %454, %460 : vector<1x128xf32>
    %462 = arith.mulf %459, %459 : vector<1x128xf32>
    %463 = arith.subf %461, %462 : vector<1x128xf32>
    %cst_143 = arith.constant 9.99999974E-6 : f32
    %464 = vector.broadcast %cst_143 : f32 to vector<1x128xf32>
    %465 = arith.addf %463, %464 : vector<1x128xf32>
    %466 = math.rsqrt %465 : vector<1x128xf32>
    %467 = arith.mulf %456, %466 : vector<1x128xf32>
    %468 = arith.mulf %459, %467 : vector<1x128xf32>
    %469 = arith.subf %457, %468 : vector<1x128xf32>
    %470 = tpu.concatenate %467, %467 in 1 : vector<1x128xf32>, vector<1x128xf32> -> vector<1x256xf32>
    %471 = tpu.concatenate %469, %469 in 1 : vector<1x128xf32>, vector<1x128xf32> -> vector<1x256xf32>
    %c0_144 = arith.constant 0 : index
    %c0_145 = arith.constant 0 : index
    %472 = vector.load %arg7[%c0_144, %c0_145] : memref<256x128xbf16, #tpu.memory_space<vmem>>, vector<256x128xbf16>
    %cst_146 = arith.constant 0.000000e+00 : f32
    %473 = vector.broadcast %cst_146 : f32 to vector<1x128xf32>
    %cst_147 = arith.constant 0.000000e+00 : f32
    %474 = vector.broadcast %cst_147 : f32 to vector<1x128xf32>
    %c0_148 = arith.constant 0 : index
    %c0_149 = arith.constant 0 : index
    %475 = vector.load %arg17[%c0_148, %c0_149] : memref<8x1024xf32, #tpu.memory_space<vmem>>, vector<8x256xf32>
    %476 = vector.broadcast %470 : vector<1x256xf32> to vector<8x256xf32>
    %477 = arith.mulf %475, %476 : vector<8x256xf32>
    %478 = vector.broadcast %471 : vector<1x256xf32> to vector<8x256xf32>
    %479 = arith.addf %477, %478 : vector<8x256xf32>
    %cst_150 = arith.constant 0.000000e+00 : f32
    %480 = vector.broadcast %cst_150 : f32 to vector<8x256xf32>
    %481 = arith.cmpf oge, %479, %480 : vector<8x256xf32>
    %cst_151 = arith.constant 1.000000e-01 : f32
    %482 = vector.broadcast %cst_151 : f32 to vector<8x256xf32>
    %483 = arith.mulf %482, %479 : vector<8x256xf32>
    %484 = arith.select %481, %479, %483 : vector<8x256xi1>, vector<8x256xf32>
    %485 = arith.truncf %484 : vector<8x256xf32> to vector<8x256xbf16>
    %cst_152 = arith.constant dense<0.000000e+00> : vector<8x128xf32>
    %486 = tpu.matmul %485, %472, %cst_152 {dimension_numbers = #tpu.dot_dimension_numbers<[1], [0], [0], [1], [0, 0, 1, 1], [], []>} : vector<8x256xbf16>, vector<256x128xbf16>, vector<8x128xf32> -> vector<8x128xf32>
    %cst_153 = arith.constant dense<0.000000e+00> : vector<128xf32>
    %487 = vector.multi_reduction <add>, %486, %cst_153 [0] : vector<8x128xf32> to vector<128xf32>
    %488 = vector.shape_cast %487 : vector<128xf32> to vector<1x128xf32>
    %489 = arith.addf %473, %488 : vector<1x128xf32>
    %490 = arith.mulf %486, %486 : vector<8x128xf32>
    %cst_154 = arith.constant dense<0.000000e+00> : vector<128xf32>
    %491 = vector.multi_reduction <add>, %490, %cst_154 [0] : vector<8x128xf32> to vector<128xf32>
    %492 = vector.shape_cast %491 : vector<128xf32> to vector<1x128xf32>
    %493 = arith.addf %474, %492 : vector<1x128xf32>
    %c0_155 = arith.constant 0 : index
    %c0_156 = arith.constant 0 : index
    %494 = vector.load %arg18[%c0_155, %c0_156] : memref<8x512xf32, #tpu.memory_space<vmem>>, vector<8x128xf32>
    tpu.vector_store %arg18[%c0_155, %c0_156], %486 {strides = array<i32>} : memref<8x512xf32, #tpu.memory_space<vmem>>, vector<8x128xf32>,
    %c0_157 = arith.constant 0 : index
    %c256_158 = arith.constant 256 : index
    %495 = vector.load %arg17[%c0_157, %c256_158] : memref<8x1024xf32, #tpu.memory_space<vmem>>, vector<8x256xf32>
    %496 = vector.broadcast %470 : vector<1x256xf32> to vector<8x256xf32>
    %497 = arith.mulf %495, %496 : vector<8x256xf32>
    %498 = vector.broadcast %471 : vector<1x256xf32> to vector<8x256xf32>
    %499 = arith.addf %497, %498 : vector<8x256xf32>
    %cst_159 = arith.constant 0.000000e+00 : f32
    %500 = vector.broadcast %cst_159 : f32 to vector<8x256xf32>
    %501 = arith.cmpf oge, %499, %500 : vector<8x256xf32>
    %cst_160 = arith.constant 1.000000e-01 : f32
    %502 = vector.broadcast %cst_160 : f32 to vector<8x256xf32>
    %503 = arith.mulf %502, %499 : vector<8x256xf32>
    %504 = arith.select %501, %499, %503 : vector<8x256xi1>, vector<8x256xf32>
    %505 = arith.truncf %504 : vector<8x256xf32> to vector<8x256xbf16>
    %cst_161 = arith.constant dense<0.000000e+00> : vector<8x128xf32>
    %506 = tpu.matmul %505, %472, %cst_161 {dimension_numbers = #tpu.dot_dimension_numbers<[1], [0], [0], [1], [0, 0, 1, 1], [], []>} : vector<8x256xbf16>, vector<256x128xbf16>, vector<8x128xf32> -> vector<8x128xf32>
    %cst_162 = arith.constant dense<0.000000e+00> : vector<128xf32>
    %507 = vector.multi_reduction <add>, %506, %cst_162 [0] : vector<8x128xf32> to vector<128xf32>
    %508 = vector.shape_cast %507 : vector<128xf32> to vector<1x128xf32>
    %509 = arith.addf %489, %508 : vector<1x128xf32>
    %510 = arith.mulf %506, %506 : vector<8x128xf32>
    %cst_163 = arith.constant dense<0.000000e+00> : vector<128xf32>
    %511 = vector.multi_reduction <add>, %510, %cst_163 [0] : vector<8x128xf32> to vector<128xf32>
    %512 = vector.shape_cast %511 : vector<128xf32> to vector<1x128xf32>
    %513 = arith.addf %493, %512 : vector<1x128xf32>
    %c0_164 = arith.constant 0 : index
    %c128_165 = arith.constant 128 : index
    %514 = vector.load %arg18[%c0_164, %c128_165] : memref<8x512xf32, #tpu.memory_space<vmem>>, vector<8x128xf32>
    tpu.vector_store %arg18[%c0_164, %c128_165], %506 {strides = array<i32>} : memref<8x512xf32, #tpu.memory_space<vmem>>, vector<8x128xf32>,
    %c0_166 = arith.constant 0 : index
    %c512_167 = arith.constant 512 : index
    %515 = vector.load %arg17[%c0_166, %c512_167] : memref<8x1024xf32, #tpu.memory_space<vmem>>, vector<8x256xf32>
    %516 = vector.broadcast %470 : vector<1x256xf32> to vector<8x256xf32>
    %517 = arith.mulf %515, %516 : vector<8x256xf32>
    %518 = vector.broadcast %471 : vector<1x256xf32> to vector<8x256xf32>
    %519 = arith.addf %517, %518 : vector<8x256xf32>
    %cst_168 = arith.constant 0.000000e+00 : f32
    %520 = vector.broadcast %cst_168 : f32 to vector<8x256xf32>
    %521 = arith.cmpf oge, %519, %520 : vector<8x256xf32>
    %cst_169 = arith.constant 1.000000e-01 : f32
    %522 = vector.broadcast %cst_169 : f32 to vector<8x256xf32>
    %523 = arith.mulf %522, %519 : vector<8x256xf32>
    %524 = arith.select %521, %519, %523 : vector<8x256xi1>, vector<8x256xf32>
    %525 = arith.truncf %524 : vector<8x256xf32> to vector<8x256xbf16>
    %cst_170 = arith.constant dense<0.000000e+00> : vector<8x128xf32>
    %526 = tpu.matmul %525, %472, %cst_170 {dimension_numbers = #tpu.dot_dimension_numbers<[1], [0], [0], [1], [0, 0, 1, 1], [], []>} : vector<8x256xbf16>, vector<256x128xbf16>, vector<8x128xf32> -> vector<8x128xf32>
    %cst_171 = arith.constant dense<0.000000e+00> : vector<128xf32>
    %527 = vector.multi_reduction <add>, %526, %cst_171 [0] : vector<8x128xf32> to vector<128xf32>
    %528 = vector.shape_cast %527 : vector<128xf32> to vector<1x128xf32>
    %529 = arith.addf %509, %528 : vector<1x128xf32>
    %530 = arith.mulf %526, %526 : vector<8x128xf32>
    %cst_172 = arith.constant dense<0.000000e+00> : vector<128xf32>
    %531 = vector.multi_reduction <add>, %530, %cst_172 [0] : vector<8x128xf32> to vector<128xf32>
    %532 = vector.shape_cast %531 : vector<128xf32> to vector<1x128xf32>
    %533 = arith.addf %513, %532 : vector<1x128xf32>
    %c0_173 = arith.constant 0 : index
    %c256_174 = arith.constant 256 : index
    %534 = vector.load %arg18[%c0_173, %c256_174] : memref<8x512xf32, #tpu.memory_space<vmem>>, vector<8x128xf32>
    tpu.vector_store %arg18[%c0_173, %c256_174], %526 {strides = array<i32>} : memref<8x512xf32, #tpu.memory_space<vmem>>, vector<8x128xf32>,
    %c0_175 = arith.constant 0 : index
    %c768_176 = arith.constant 768 : index
    %535 = vector.load %arg17[%c0_175, %c768_176] : memref<8x1024xf32, #tpu.memory_space<vmem>>, vector<8x256xf32>
    %536 = vector.broadcast %470 : vector<1x256xf32> to vector<8x256xf32>
    %537 = arith.mulf %535, %536 : vector<8x256xf32>
    %538 = vector.broadcast %471 : vector<1x256xf32> to vector<8x256xf32>
    %539 = arith.addf %537, %538 : vector<8x256xf32>
    %cst_177 = arith.constant 0.000000e+00 : f32
    %540 = vector.broadcast %cst_177 : f32 to vector<8x256xf32>
    %541 = arith.cmpf oge, %539, %540 : vector<8x256xf32>
    %cst_178 = arith.constant 1.000000e-01 : f32
    %542 = vector.broadcast %cst_178 : f32 to vector<8x256xf32>
    %543 = arith.mulf %542, %539 : vector<8x256xf32>
    %544 = arith.select %541, %539, %543 : vector<8x256xi1>, vector<8x256xf32>
    %545 = arith.truncf %544 : vector<8x256xf32> to vector<8x256xbf16>
    %cst_179 = arith.constant dense<0.000000e+00> : vector<8x128xf32>
    %546 = tpu.matmul %545, %472, %cst_179 {dimension_numbers = #tpu.dot_dimension_numbers<[1], [0], [0], [1], [0, 0, 1, 1], [], []>} : vector<8x256xbf16>, vector<256x128xbf16>, vector<8x128xf32> -> vector<8x128xf32>
    %cst_180 = arith.constant dense<0.000000e+00> : vector<128xf32>
    %547 = vector.multi_reduction <add>, %546, %cst_180 [0] : vector<8x128xf32> to vector<128xf32>
    %548 = vector.shape_cast %547 : vector<128xf32> to vector<1x128xf32>
    %549 = arith.addf %529, %548 : vector<1x128xf32>
    %550 = arith.mulf %546, %546 : vector<8x128xf32>
    %cst_181 = arith.constant dense<0.000000e+00> : vector<128xf32>
    %551 = vector.multi_reduction <add>, %550, %cst_181 [0] : vector<8x128xf32> to vector<128xf32>
    %552 = vector.shape_cast %551 : vector<128xf32> to vector<1x128xf32>
    %553 = arith.addf %533, %552 : vector<1x128xf32>
    %c0_182 = arith.constant 0 : index
    %c384_183 = arith.constant 384 : index
    %554 = vector.load %arg18[%c0_182, %c384_183] : memref<8x512xf32, #tpu.memory_space<vmem>>, vector<8x128xf32>
    tpu.vector_store %arg18[%c0_182, %c384_183], %546 {strides = array<i32>} : memref<8x512xf32, #tpu.memory_space<vmem>>, vector<8x128xf32>,
    %c0_184 = arith.constant 0 : index
    %c0_185 = arith.constant 0 : index
    %555 = vector.load %arg8[%c0_184, %c0_185] : memref<1x128xf32, #tpu.memory_space<vmem>>, vector<1x128xf32>
    %c0_186 = arith.constant 0 : index
    %c0_187 = arith.constant 0 : index
    %556 = vector.load %arg9[%c0_186, %c0_187] : memref<1x128xf32, #tpu.memory_space<vmem>>, vector<1x128xf32>
    %cst_188 = arith.constant 3.125000e-02 : f32
    %557 = vector.broadcast %cst_188 : f32 to vector<1x128xf32>
    %558 = arith.mulf %549, %557 : vector<1x128xf32>
    %cst_189 = arith.constant 3.125000e-02 : f32
    %559 = vector.broadcast %cst_189 : f32 to vector<1x128xf32>
    %560 = arith.mulf %553, %559 : vector<1x128xf32>
    %561 = arith.mulf %558, %558 : vector<1x128xf32>
    %562 = arith.subf %560, %561 : vector<1x128xf32>
    %cst_190 = arith.constant 9.99999974E-6 : f32
    %563 = vector.broadcast %cst_190 : f32 to vector<1x128xf32>
    %564 = arith.addf %562, %563 : vector<1x128xf32>
    %565 = math.rsqrt %564 : vector<1x128xf32>
    %566 = arith.mulf %555, %565 : vector<1x128xf32>
    %567 = arith.mulf %558, %566 : vector<1x128xf32>
    %568 = arith.subf %556, %567 : vector<1x128xf32>
    %569 = tpu.concatenate %566, %566 in 1 : vector<1x128xf32>, vector<1x128xf32> -> vector<1x256xf32>
    %570 = tpu.concatenate %568, %568 in 1 : vector<1x128xf32>, vector<1x128xf32> -> vector<1x256xf32>
    %c0_191 = arith.constant 0 : index
    %c0_192 = arith.constant 0 : index
    %571 = vector.load %arg10[%c0_191, %c0_192] : memref<256x256xbf16, #tpu.memory_space<vmem>>, vector<256x256xbf16>
    %cst_193 = arith.constant 0.000000e+00 : f32
    %572 = vector.broadcast %cst_193 : f32 to vector<1x256xf32>
    %cst_194 = arith.constant 0.000000e+00 : f32
    %573 = vector.broadcast %cst_194 : f32 to vector<1x256xf32>
    %c0_195 = arith.constant 0 : index
    %c0_196 = arith.constant 0 : index
    %574 = vector.load %arg18[%c0_195, %c0_196] : memref<8x512xf32, #tpu.memory_space<vmem>>, vector<8x256xf32>
    %575 = vector.broadcast %569 : vector<1x256xf32> to vector<8x256xf32>
    %576 = arith.mulf %574, %575 : vector<8x256xf32>
    %577 = vector.broadcast %570 : vector<1x256xf32> to vector<8x256xf32>
    %578 = arith.addf %576, %577 : vector<8x256xf32>
    %cst_197 = arith.constant 0.000000e+00 : f32
    %579 = vector.broadcast %cst_197 : f32 to vector<8x256xf32>
    %580 = arith.cmpf oge, %578, %579 : vector<8x256xf32>
    %cst_198 = arith.constant 1.000000e-01 : f32
    %581 = vector.broadcast %cst_198 : f32 to vector<8x256xf32>
    %582 = arith.mulf %581, %578 : vector<8x256xf32>
    %583 = arith.select %580, %578, %582 : vector<8x256xi1>, vector<8x256xf32>
    %584 = arith.truncf %583 : vector<8x256xf32> to vector<8x256xbf16>
    %cst_199 = arith.constant dense<0.000000e+00> : vector<8x256xf32>
    %585 = tpu.matmul %584, %571, %cst_199 {dimension_numbers = #tpu.dot_dimension_numbers<[1], [0], [0], [1], [0, 0, 1, 1], [], []>} : vector<8x256xbf16>, vector<256x256xbf16>, vector<8x256xf32> -> vector<8x256xf32>
    %cst_200 = arith.constant dense<0.000000e+00> : vector<256xf32>
    %586 = vector.multi_reduction <add>, %585, %cst_200 [0] : vector<8x256xf32> to vector<256xf32>
    %587 = vector.shape_cast %586 : vector<256xf32> to vector<1x256xf32>
    %588 = arith.addf %572, %587 : vector<1x256xf32>
    %589 = arith.mulf %585, %585 : vector<8x256xf32>
    %cst_201 = arith.constant dense<0.000000e+00> : vector<256xf32>
    %590 = vector.multi_reduction <add>, %589, %cst_201 [0] : vector<8x256xf32> to vector<256xf32>
    %591 = vector.shape_cast %590 : vector<256xf32> to vector<1x256xf32>
    %592 = arith.addf %573, %591 : vector<1x256xf32>
    %c0_202 = arith.constant 0 : index
    %c0_203 = arith.constant 0 : index
    %593 = vector.load %arg19[%c0_202, %c0_203] : memref<8x512xf32, #tpu.memory_space<vmem>>, vector<8x256xf32>
    tpu.vector_store %arg19[%c0_202, %c0_203], %585 {strides = array<i32>} : memref<8x512xf32, #tpu.memory_space<vmem>>, vector<8x256xf32>,
    %c0_204 = arith.constant 0 : index
    %c256_205 = arith.constant 256 : index
    %594 = vector.load %arg18[%c0_204, %c256_205] : memref<8x512xf32, #tpu.memory_space<vmem>>, vector<8x256xf32>
    %595 = vector.broadcast %569 : vector<1x256xf32> to vector<8x256xf32>
    %596 = arith.mulf %594, %595 : vector<8x256xf32>
    %597 = vector.broadcast %570 : vector<1x256xf32> to vector<8x256xf32>
    %598 = arith.addf %596, %597 : vector<8x256xf32>
    %cst_206 = arith.constant 0.000000e+00 : f32
    %599 = vector.broadcast %cst_206 : f32 to vector<8x256xf32>
    %600 = arith.cmpf oge, %598, %599 : vector<8x256xf32>
    %cst_207 = arith.constant 1.000000e-01 : f32
    %601 = vector.broadcast %cst_207 : f32 to vector<8x256xf32>
    %602 = arith.mulf %601, %598 : vector<8x256xf32>
    %603 = arith.select %600, %598, %602 : vector<8x256xi1>, vector<8x256xf32>
    %604 = arith.truncf %603 : vector<8x256xf32> to vector<8x256xbf16>
    %cst_208 = arith.constant dense<0.000000e+00> : vector<8x256xf32>
    %605 = tpu.matmul %604, %571, %cst_208 {dimension_numbers = #tpu.dot_dimension_numbers<[1], [0], [0], [1], [0, 0, 1, 1], [], []>} : vector<8x256xbf16>, vector<256x256xbf16>, vector<8x256xf32> -> vector<8x256xf32>
    %cst_209 = arith.constant dense<0.000000e+00> : vector<256xf32>
    %606 = vector.multi_reduction <add>, %605, %cst_209 [0] : vector<8x256xf32> to vector<256xf32>
    %607 = vector.shape_cast %606 : vector<256xf32> to vector<1x256xf32>
    %608 = arith.addf %588, %607 : vector<1x256xf32>
    %609 = arith.mulf %605, %605 : vector<8x256xf32>
    %cst_210 = arith.constant dense<0.000000e+00> : vector<256xf32>
    %610 = vector.multi_reduction <add>, %609, %cst_210 [0] : vector<8x256xf32> to vector<256xf32>
    %611 = vector.shape_cast %610 : vector<256xf32> to vector<1x256xf32>
    %612 = arith.addf %592, %611 : vector<1x256xf32>
    %c0_211 = arith.constant 0 : index
    %c256_212 = arith.constant 256 : index
    %613 = vector.load %arg19[%c0_211, %c256_212] : memref<8x512xf32, #tpu.memory_space<vmem>>, vector<8x256xf32>
    tpu.vector_store %arg19[%c0_211, %c256_212], %605 {strides = array<i32>} : memref<8x512xf32, #tpu.memory_space<vmem>>, vector<8x256xf32>,
    %c0_213 = arith.constant 0 : index
    %c0_214 = arith.constant 0 : index
    %614 = vector.load %arg11[%c0_213, %c0_214] : memref<1x256xf32, #tpu.memory_space<vmem>>, vector<1x256xf32>
    %c0_215 = arith.constant 0 : index
    %c0_216 = arith.constant 0 : index
    %615 = vector.load %arg12[%c0_215, %c0_216] : memref<1x256xf32, #tpu.memory_space<vmem>>, vector<1x256xf32>
    %cst_217 = arith.constant 6.250000e-02 : f32
    %616 = vector.broadcast %cst_217 : f32 to vector<1x256xf32>
    %617 = arith.mulf %608, %616 : vector<1x256xf32>
    %cst_218 = arith.constant 6.250000e-02 : f32
    %618 = vector.broadcast %cst_218 : f32 to vector<1x256xf32>
    %619 = arith.mulf %612, %618 : vector<1x256xf32>
    %620 = arith.mulf %617, %617 : vector<1x256xf32>
    %621 = arith.subf %619, %620 : vector<1x256xf32>
    %cst_219 = arith.constant 9.99999974E-6 : f32
    %622 = vector.broadcast %cst_219 : f32 to vector<1x256xf32>
    %623 = arith.addf %621, %622 : vector<1x256xf32>
    %624 = math.rsqrt %623 : vector<1x256xf32>
    %625 = arith.mulf %614, %624 : vector<1x256xf32>
    %626 = arith.mulf %617, %625 : vector<1x256xf32>
    %627 = arith.subf %615, %626 : vector<1x256xf32>
    %628 = tpu.concatenate %625, %625 in 1 : vector<1x256xf32>, vector<1x256xf32> -> vector<1x512xf32>
    %629 = tpu.concatenate %627, %627 in 1 : vector<1x256xf32>, vector<1x256xf32> -> vector<1x512xf32>
    %c0_220 = arith.constant 0 : index
    %c0_221 = arith.constant 0 : index
    %630 = vector.load %arg19[%c0_220, %c0_221] : memref<8x512xf32, #tpu.memory_space<vmem>>, vector<8x512xf32>
    %631 = vector.broadcast %628 : vector<1x512xf32> to vector<8x512xf32>
    %632 = arith.mulf %630, %631 : vector<8x512xf32>
    %633 = vector.broadcast %629 : vector<1x512xf32> to vector<8x512xf32>
    %634 = arith.addf %632, %633 : vector<8x512xf32>
    %cst_222 = arith.constant 0.000000e+00 : f32
    %635 = vector.broadcast %cst_222 : f32 to vector<8x512xf32>
    %636 = arith.cmpf oge, %634, %635 : vector<8x512xf32>
    %cst_223 = arith.constant 0.00999999977 : f32
    %637 = vector.broadcast %cst_223 : f32 to vector<8x512xf32>
    %638 = arith.mulf %637, %634 : vector<8x512xf32>
    %639 = arith.select %636, %634, %638 : vector<8x512xi1>, vector<8x512xf32>
    %c0_224 = arith.constant 0 : index
    %c0_225 = arith.constant 0 : index
    %640 = vector.load %arg13[%c0_224, %c0_225] : memref<1x512xf32, #tpu.memory_space<vmem>>, vector<1x512xf32>
    %641 = vector.broadcast %640 : vector<1x512xf32> to vector<8x512xf32>
    %642 = arith.mulf %639, %641 : vector<8x512xf32>
    %cst_226 = arith.constant dense<0.000000e+00> : vector<8xf32>
    %643 = vector.multi_reduction <add>, %642, %cst_226 [1] : vector<8x512xf32> to vector<8xf32>
    %644 = vector.shape_cast %643 : vector<8xf32> to vector<8x1xf32>
    %c0_227 = arith.constant 0 : index
    %c0_228 = arith.constant 0 : index
    %645 = vector.load %arg14[%c0_227, %c0_228] : memref<1x1xf32, #tpu.memory_space<vmem>>, vector<1x1xf32>
    %646 = vector.broadcast %645 : vector<1x1xf32> to vector<8x1xf32>
    %647 = arith.addf %644, %646 : vector<8x1xf32>
    %cst_229 = arith.constant 0.000000e+00 : f32
    %648 = vector.broadcast %cst_229 : f32 to vector<8x1xf32>
    %649 = arith.cmpf oge, %647, %648 : vector<8x1xf32>
    %cst_230 = arith.constant 0.00999999977 : f32
    %650 = vector.broadcast %cst_230 : f32 to vector<8x1xf32>
    %651 = arith.mulf %650, %647 : vector<8x1xf32>
    %652 = arith.select %649, %647, %651 : vector<8x1xi1>, vector<8x1xf32>
    %c0_231 = arith.constant 0 : index
    %c0_232 = arith.constant 0 : index
    %653 = vector.load %arg15[%c0_231, %c0_232] : memref<8x1xf32, #tpu.memory_space<vmem>>, vector<8x1xf32>
    tpu.vector_store %arg15[%c0_231, %c0_232], %652 {strides = array<i32>} : memref<8x1xf32, #tpu.memory_space<vmem>>, vector<8x1xf32>,
    return
  }
}

</mosaic_0001>

<llo_original>
// kernel: discriminator_forward.1
$region0: #{discriminator_forward.1}
  #allocation0 [shape = 'u32[]', space=smem, size = 0x4, offset = 0x4, fixed_abs, tag = 'smem constant byte address 0x4 - core index']
  #allocation1 [shape = 'u32[144,128]{1,0:T(1,128)}', space=vmem, size = 0x12000, scoped, tag = 'internal scratch']
  #allocation2 [shape = 'f32[8,2048]{1,0:T(8,128)}', space=vmem, size = 0x10000, scoped, tag = 'scratch operand']
  #allocation3 [shape = 'f32[8,1024]{1,0:T(8,128)}', space=vmem, size = 0x8000, scoped, tag = 'scratch operand']
  #allocation4 [shape = 'f32[8,512]{1,0:T(8,128)}', space=vmem, size = 0x4000, scoped, tag = 'scratch operand']
  #allocation5 [shape = 'f32[8,512]{1,0:T(8,128)}', space=vmem, size = 0x4000, scoped, tag = 'scratch operand']
  #allocation6 [shape = 'f32[1,1]{1,0:T(1,128)S(1)}', space=vmem, size = 0x200, scoped, tag = 'scoped memory for discriminator_forward.1']
  %s0 = inlined_call_operand.vmem [shape: f32[8,32], index: 0, kind: input, shape index: {}]
  %s1 = inlined_call_operand.vmem [shape: f32[2,128], index: 1, kind: input, shape index: {}]
  %s2 = inlined_call_operand.vmem [shape: f32[1,128], index: 2, kind: input, shape index: {}]
  %s3 = inlined_call_operand.vmem [shape: f32[1,128], index: 3, kind: input, shape index: {}]
  %s4 = inlined_call_operand.vmem [shape: bf16[256,128], index: 4, kind: input, shape index: {}]
  %s5 = inlined_call_operand.vmem [shape: f32[1,128], index: 5, kind: input, shape index: {}]
  %s6 = inlined_call_operand.vmem [shape: f32[1,128], index: 6, kind: input, shape index: {}]
  %s7 = inlined_call_operand.vmem [shape: bf16[256,128], index: 7, kind: input, shape index: {}]
  %s8 = inlined_call_operand.vmem [shape: f32[1,128], index: 8, kind: input, shape index: {}]
  %s9 = inlined_call_operand.vmem [shape: f32[1,128], index: 9, kind: input, shape index: {}]
  %s10 = inlined_call_operand.vmem [shape: bf16[256,256], index: 10, kind: input, shape index: {}]
  %s11 = inlined_call_operand.vmem [shape: f32[1,256], index: 11, kind: input, shape index: {}]
  %s12 = inlined_call_operand.vmem [shape: f32[1,256], index: 12, kind: input, shape index: {}]
  %s13 = inlined_call_operand.vmem [shape: f32[1,512], index: 13, kind: input, shape index: {}]
  %s14 = inlined_call_operand.<no memory space> [shape: f32[1,1], index: 14, kind: input, shape index: {}]
  %s15 = inlined_call_operand.vmem [shape: f32[8,1], index: 15, kind: output, shape index: {}]
  %s16 = sld [smem:[#allocation0]]
  $region70: #{discriminator_forward.1} parent=0
    _
  %s18 = ssub.s32 1, %s16
  %s19 = scalar_select 0, %s18, %s16
  %v20 = vstv %s14
  %21 = vst [vmem:[#allocation6] sm:$0x1] %v20
  // Predicated region
  $region2: #{discriminator_forward.1} parent=0 // pred_check
    _
  $region3: #{discriminator_forward.1} parent=0 // pred_check_branch
    %23 = sbr.rel (0) target = $region5
  $region4: #{discriminator_forward.1} parent=0 // pred_region
    _
  $region5: #{discriminator_forward.1} parent=0 // pred_fallthru
    _
  // Predicated region
  $region6: #{discriminator_forward.1} parent=0 // pred_check
    _
  $region7: #{discriminator_forward.1} parent=0 // pred_check_branch
    %25 = sbr.rel (0) target = $region9
  $region8: #{discriminator_forward.1} parent=0 // pred_region
    _
  $region9: #{discriminator_forward.1} parent=0 // pred_fallthru
    _
  // Predicated region
  $region10: #{discriminator_forward.1} parent=0 // pred_check
    _
  $region11: #{discriminator_forward.1} parent=0 // pred_check_branch
    %27 = sbr.rel (0) target = $region13
  $region12: #{discriminator_forward.1} parent=0 // pred_region
    _
  $region13: #{discriminator_forward.1} parent=0 // pred_fallthru
    _
  // Predicated region
  $region14: #{discriminator_forward.1} parent=0 // pred_check
    _
  $region15: #{discriminator_forward.1} parent=0 // pred_check_branch
    %29 = sbr.rel (0) target = $region17
  $region16: #{discriminator_forward.1} parent=0 // pred_region
    _
  $region17: #{discriminator_forward.1} parent=0 // pred_fallthru
    _
  // Predicated region
  $region18: #{discriminator_forward.1} parent=0 // pred_check
    _
  $region19: #{discriminator_forward.1} parent=0 // pred_check_branch
    %31 = sbr.rel (0) target = $region21
  $region20: #{discriminator_forward.1} parent=0 // pred_region
    _
  $region21: #{discriminator_forward.1} parent=0 // pred_fallthru
    _
  // Predicated region
  $region22: #{discriminator_forward.1} parent=0 // pred_check
    _
  $region23: #{discriminator_forward.1} parent=0 // pred_check_branch
    %33 = sbr.rel (0) target = $region25
  $region24: #{discriminator_forward.1} parent=0 // pred_region
    _
  $region25: #{discriminator_forward.1} parent=0 // pred_fallthru
    _
  // Predicated region
  $region26: #{discriminator_forward.1} parent=0 // pred_check
    _
  $region27: #{discriminator_forward.1} parent=0 // pred_check_branch
    %35 = sbr.rel (0) target = $region29
  $region28: #{discriminator_forward.1} parent=0 // pred_region
    _
  $region29: #{discriminator_forward.1} parent=0 // pred_fallthru
    _
  // Predicated region
  $region30: #{discriminator_forward.1} parent=0 // pred_check
    _
  $region31: #{discriminator_forward.1} parent=0 // pred_check_branch
    %37 = sbr.rel (0) target = $region33
  $region32: #{discriminator_forward.1} parent=0 // pred_region
    _
  $region33: #{discriminator_forward.1} parent=0 // pred_fallthru
    _
  // Predicated region
  $region34: #{discriminator_forward.1} parent=0 // pred_check
    _
  $region35: #{discriminator_forward.1} parent=0 // pred_check_branch
    %39 = sbr.rel (0) target = $region37
  $region36: #{discriminator_forward.1} parent=0 // pred_region
    _
  $region37: #{discriminator_forward.1} parent=0 // pred_fallthru
    _
  // Predicated region
  $region38: #{discriminator_forward.1} parent=0 // pred_check
    _
  $region39: #{discriminator_forward.1} parent=0 // pred_check_branch
    %41 = sbr.rel (0) target = $region41
  $region40: #{discriminator_forward.1} parent=0 // pred_region
    _
  $region41: #{discriminator_forward.1} parent=0 // pred_fallthru
    _
  // Predicated region
  $region42: #{discriminator_forward.1} parent=0 // pred_check
    _
  $region43: #{discriminator_forward.1} parent=0 // pred_check_branch
    %43 = sbr.rel (0) target = $region45
  $region44: #{discriminator_forward.1} parent=0 // pred_region
    _
  $region45: #{discriminator_forward.1} parent=0 // pred_fallthru
    _
  // Predicated region
  $region46: #{discriminator_forward.1} parent=0 // pred_check
    _
  $region47: #{discriminator_forward.1} parent=0 // pred_check_branch
    %45 = sbr.rel (0) target = $region49
  $region48: #{discriminator_forward.1} parent=0 // pred_region
    _
  $region49: #{discriminator_forward.1} parent=0 // pred_fallthru
    _
  // Predicated region
  $region50: #{discriminator_forward.1} parent=0 // pred_check
    _
  $region51: #{discriminator_forward.1} parent=0 // pred_check_branch
    %47 = sbr.rel (0) target = $region53
  $region52: #{discriminator_forward.1} parent=0 // pred_region
    _
  $region53: #{discriminator_forward.1} parent=0 // pred_fallthru
    _
  // Predicated region
  $region54: #{discriminator_forward.1} parent=0 // pred_check
    _
  $region55: #{discriminator_forward.1} parent=0 // pred_check_branch
    %49 = sbr.rel (0) target = $region57
  $region56: #{discriminator_forward.1} parent=0 // pred_region
    _
  $region57: #{discriminator_forward.1} parent=0 // pred_fallthru
    _
  // Predicated region
  $region58: #{discriminator_forward.1} parent=0 // pred_check
    _
  $region59: #{discriminator_forward.1} parent=0 // pred_check_branch
    %51 = sbr.rel (0) target = $region61
  $region60: #{discriminator_forward.1} parent=0 // pred_region
    _
  $region61: #{discriminator_forward.1} parent=0 // pred_fallthru
    _
  %v53 = vld [vmem:[%s0] sm:$0xff]
  %v54 = vld [vmem:[%s1] sm:$0x1]
  %v55 = vld [vmem:[%s1 + $0x1] sm:$0x1]
  %57 = vset.pattern.permute.xlu0 0
  %58 = vperm.xlu0 %57, %v53
  %v59 = vpop.permute.xlu0 %58
  %v61 = vlaneseq
  %v62 = vshrl.u32 %v61, 7
  %v63 = vsub.s32 0, %v62
  %v64 = vrot.slane %v54, %v63
  %v65 = vmul.f32 %v59, %v64
  %66 = vset.pattern.permute.xlu0 1
  %67 = vperm.xlu0 %66, %v53
  %v68 = vpop.permute.xlu0 %67
  %v70 = vlaneseq
  %v71 = vshrl.u32 %v70, 7
  %v72 = vsub.s32 0, %v71
  %v73 = vrot.slane %v55, %v72
  %v74 = vmul.f32 %v68, %v73
  %v75 = vadd.f32 %v65, %v74
  %v76 = vrot.slane %v75, 4
  %v77 = vadd.f32 %v75, %v76
  %v78 = vrot.slane %v77, 2
  %v79 = vadd.f32 %v77, %v78
  %v80 = vrot.slane %v79, 1
  %v81 = vadd.f32 %v79, %v80
  %v82 = vadd.f32 %v81, 0.0
  %v83 = vmul.f32 %v75, %v75
  %v84 = vrot.slane %v83, 4
  %v85 = vadd.f32 %v83, %v84
  %v86 = vrot.slane %v85, 2
  %v87 = vadd.f32 %v85, %v86
  %v88 = vrot.slane %v87, 1
  %v89 = vadd.f32 %v87, %v88
  %v90 = vadd.f32 %v89, 0.0
  %91 = vst [vmem:[#allocation2] sm:$0xff] %v75
  %92 = vset.pattern.permute.xlu0 2
  %93 = vperm.xlu0 %92, %v53
  %v94 = vpop.permute.xlu0 %93
  %v96 = vmul.f32 %v94, %v64
  %97 = vset.pattern.permute.xlu0 3
  %98 = vperm.xlu0 %97, %v53
  %v99 = vpop.permute.xlu0 %98
  %v101 = vmul.f32 %v99, %v73
  %v102 = vadd.f32 %v96, %v101
  %v103 = vrot.slane %v102, 4
  %v104 = vadd.f32 %v102, %v103
  %v105 = vrot.slane %v104, 2
  %v106 = vadd.f32 %v104, %v105
  %v107 = vrot.slane %v106, 1
  %v108 = vadd.f32 %v106, %v107
  %v109 = vadd.f32 %v82, %v108
  %v110 = vmul.f32 %v102, %v102
  %v111 = vrot.slane %v110, 4
  %v112 = vadd.f32 %v110, %v111
  %v113 = vrot.slane %v112, 2
  %v114 = vadd.f32 %v112, %v113
  %v115 = vrot.slane %v114, 1
  %v116 = vadd.f32 %v114, %v115
  %v117 = vadd.f32 %v90, %v116
  %118 = vst [vmem:[#allocation2 + $0x8] sm:$0xff] %v102
  %119 = vset.pattern.permute.xlu0 4
  %120 = vperm.xlu0 %119, %v53
  %v121 = vpop.permute.xlu0 %120
  %v123 = vmul.f32 %v121, %v64
  %124 = vset.pattern.permute.xlu0 5
  %125 = vperm.xlu0 %124, %v53
  %v126 = vpop.permute.xlu0 %125
  %v128 = vmul.f32 %v126, %v73
  %v129 = vadd.f32 %v123, %v128
  %v130 = vrot.slane %v129, 4
  %v131 = vadd.f32 %v129, %v130
  %v132 = vrot.slane %v131, 2
  %v133 = vadd.f32 %v131, %v132
  %v134 = vrot.slane %v133, 1
  %v135 = vadd.f32 %v133, %v134
  %v136 = vadd.f32 %v109, %v135
  %v137 = vmul.f32 %v129, %v129
  %v138 = vrot.slane %v137, 4
  %v139 = vadd.f32 %v137, %v138
  %v140 = vrot.slane %v139, 2
  %v141 = vadd.f32 %v139, %v140
  %v142 = vrot.slane %v141, 1
  %v143 = vadd.f32 %v141, %v142
  %v144 = vadd.f32 %v117, %v143
  %145 = vst [vmem:[#allocation2 + $0x10] sm:$0xff] %v129
  %146 = vset.pattern.permute.xlu0 6
  %147 = vperm.xlu0 %146, %v53
  %v148 = vpop.permute.xlu0 %147
  %v150 = vmul.f32 %v148, %v64
  %151 = vset.pattern.permute.xlu0 7
  %152 = vperm.xlu0 %151, %v53
  %v153 = vpop.permute.xlu0 %152
  %v155 = vmul.f32 %v153, %v73
  %v156 = vadd.f32 %v150, %v155
  %v157 = vrot.slane %v156, 4
  %v158 = vadd.f32 %v156, %v157
  %v159 = vrot.slane %v158, 2
  %v160 = vadd.f32 %v158, %v159
  %v161 = vrot.slane %v160, 1
  %v162 = vadd.f32 %v160, %v161
  %v163 = vadd.f32 %v136, %v162
  %v164 = vmul.f32 %v156, %v156
  %v165 = vrot.slane %v164, 4
  %v166 = vadd.f32 %v164, %v165
  %v167 = vrot.slane %v166, 2
  %v168 = vadd.f32 %v166, %v167
  %v169 = vrot.slane %v168, 1
  %v170 = vadd.f32 %v168, %v169
  %v171 = vadd.f32 %v144, %v170
  %172 = vst [vmem:[#allocation2 + $0x18] sm:$0xff] %v156
  %173 = vset.pattern.permute.xlu0 8
  %174 = vperm.xlu0 %173, %v53
  %v175 = vpop.permute.xlu0 %174
  %v177 = vmul.f32 %v175, %v64
  %178 = vset.pattern.permute.xlu0 9
  %179 = vperm.xlu0 %178, %v53
  %v180 = vpop.permute.xlu0 %179
  %v182 = vmul.f32 %v180, %v73
  %v183 = vadd.f32 %v177, %v182
  %v184 = vrot.slane %v183, 4
  %v185 = vadd.f32 %v183, %v184
  %v186 = vrot.slane %v185, 2
  %v187 = vadd.f32 %v185, %v186
  %v188 = vrot.slane %v187, 1
  %v189 = vadd.f32 %v187, %v188
  %v190 = vadd.f32 %v163, %v189
  %v191 = vmul.f32 %v183, %v183
  %v192 = vrot.slane %v191, 4
  %v193 = vadd.f32 %v191, %v192
  %v194 = vrot.slane %v193, 2
  %v195 = vadd.f32 %v193, %v194
  %v196 = vrot.slane %v195, 1
  %v197 = vadd.f32 %v195, %v196
  %v198 = vadd.f32 %v171, %v197
  %199 = vst [vmem:[#allocation2 + $0x20] sm:$0xff] %v183
  %200 = vset.pattern.permute.xlu0 10
  %201 = vperm.xlu0 %200, %v53
  %v202 = vpop.permute.xlu0 %201
  %v204 = vmul.f32 %v202, %v64
  %205 = vset.pattern.permute.xlu0 11
  %206 = vperm.xlu0 %205, %v53
  %v207 = vpop.permute.xlu0 %206
  %v209 = vmul.f32 %v207, %v73
  %v210 = vadd.f32 %v204, %v209
  %v211 = vrot.slane %v210, 4
  %v212 = vadd.f32 %v210, %v211
  %v213 = vrot.slane %v212, 2
  %v214 = vadd.f32 %v212, %v213
  %v215 = vrot.slane %v214, 1
  %v216 = vadd.f32 %v214, %v215
  %v217 = vadd.f32 %v190, %v216
  %v218 = vmul.f32 %v210, %v210
  %v219 = vrot.slane %v218, 4
  %v220 = vadd.f32 %v218, %v219
  %v221 = vrot.slane %v220, 2
  %v222 = vadd.f32 %v220, %v221
  %v223 = vrot.slane %v222, 1
  %v224 = vadd.f32 %v222, %v223
  %v225 = vadd.f32 %v198, %v224
  %226 = vst [vmem:[#allocation2 + $0x28] sm:$0xff] %v210
  %227 = vset.pattern.permute.xlu0 12
  %228 = vperm.xlu0 %227, %v53
  %v229 = vpop.permute.xlu0 %228
  %v231 = vmul.f32 %v229, %v64
  %232 = vset.pattern.permute.xlu0 13
  %233 = vperm.xlu0 %232, %v53
  %v234 = vpop.permute.xlu0 %233
  %v236 = vmul.f32 %v234, %v73
  %v237 = vadd.f32 %v231, %v236
  %v238 = vrot.slane %v237, 4
  %v239 = vadd.f32 %v237, %v238
  %v240 = vrot.slane %v239, 2
  %v241 = vadd.f32 %v239, %v240
  %v242 = vrot.slane %v241, 1
  %v243 = vadd.f32 %v241, %v242
  %v244 = vadd.f32 %v217, %v243
  %v245 = vmul.f32 %v237, %v237
  %v246 = vrot.slane %v245, 4
  %v247 = vadd.f32 %v245, %v246
  %v248 = vrot.slane %v247, 2
  %v249 = vadd.f32 %v247, %v248
  %v250 = vrot.slane %v249, 1
  %v251 = vadd.f32 %v249, %v250
  %v252 = vadd.f32 %v225, %v251
  %253 = vst [vmem:[#allocation2 + $0x30] sm:$0xff] %v237
  %254 = vset.pattern.permute.xlu0 14
  %255 = vperm.xlu0 %254, %v53
  %v256 = vpop.permute.xlu0 %255
  %v258 = vmul.f32 %v256, %v64
  %259 = vset.pattern.permute.xlu0 15
  %260 = vperm.xlu0 %259, %v53
  %v261 = vpop.permute.xlu0 %260
  %v263 = vmul.f32 %v261, %v73
  %v264 = vadd.f32 %v258, %v263
  %v265 = vrot.slane %v264, 4
  %v266 = vadd.f32 %v264, %v265
  %v267 = vrot.slane %v266, 2
  %v268 = vadd.f32 %v266, %v267
  %v269 = vrot.slane %v268, 1
  %v270 = vadd.f32 %v268, %v269
  %v271 = vadd.f32 %v244, %v270
  %v272 = vmul.f32 %v264, %v264
  %v273 = vrot.slane %v272, 4
  %v274 = vadd.f32 %v272, %v273
  %v275 = vrot.slane %v274, 2
  %v276 = vadd.f32 %v274, %v275
  %v277 = vrot.slane %v276, 1
  %v278 = vadd.f32 %v276, %v277
  %v279 = vadd.f32 %v252, %v278
  %280 = vst [vmem:[#allocation2 + $0x38] sm:$0xff] %v264
  %281 = vset.pattern.permute.xlu0 16
  %282 = vperm.xlu0 %281, %v53
  %v283 = vpop.permute.xlu0 %282
  %v285 = vmul.f32 %v283, %v64
  %286 = vset.pattern.permute.xlu0 17
  %287 = vperm.xlu0 %286, %v53
  %v288 = vpop.permute.xlu0 %287
  %v290 = vmul.f32 %v288, %v73
  %v291 = vadd.f32 %v285, %v290
  %v292 = vrot.slane %v291, 4
  %v293 = vadd.f32 %v291, %v292
  %v294 = vrot.slane %v293, 2
  %v295 = vadd.f32 %v293, %v294
  %v296 = vrot.slane %v295, 1
  %v297 = vadd.f32 %v295, %v296
  %v298 = vadd.f32 %v271, %v297
  %v299 = vmul.f32 %v291, %v291
  %v300 = vrot.slane %v299, 4
  %v301 = vadd.f32 %v299, %v300
  %v302 = vrot.slane %v301, 2
  %v303 = vadd.f32 %v301, %v302
  %v304 = vrot.slane %v303, 1
  %v305 = vadd.f32 %v303, %v304
  %v306 = vadd.f32 %v279, %v305
  %307 = vst [vmem:[#allocation2 + $0x40] sm:$0xff] %v291
  %308 = vset.pattern.permute.xlu0 18
  %309 = vperm.xlu0 %308, %v53
  %v310 = vpop.permute.xlu0 %309
  %v312 = vmul.f32 %v310, %v64
  %313 = vset.pattern.permute.xlu0 19
  %314 = vperm.xlu0 %313, %v53
  %v315 = vpop.permute.xlu0 %314
  %v317 = vmul.f32 %v315, %v73
  %v318 = vadd.f32 %v312, %v317
  %v319 = vrot.slane %v318, 4
  %v320 = vadd.f32 %v318, %v319
  %v321 = vrot.slane %v320, 2
  %v322 = vadd.f32 %v320, %v321
  %v323 = vrot.slane %v322, 1
  %v324 = vadd.f32 %v322, %v323
  %v325 = vadd.f32 %v298, %v324
  %v326 = vmul.f32 %v318, %v318
  %v327 = vrot.slane %v326, 4
  %v328 = vadd.f32 %v326, %v327
  %v329 = vrot.slane %v328, 2
  %v330 = vadd.f32 %v328, %v329
  %v331 = vrot.slane %v330, 1
  %v332 = vadd.f32 %v330, %v331
  %v333 = vadd.f32 %v306, %v332
  %334 = vst [vmem:[#allocation2 + $0x48] sm:$0xff] %v318
  %335 = vset.pattern.permute.xlu0 20
  %336 = vperm.xlu0 %335, %v53
  %v337 = vpop.permute.xlu0 %336
  %v339 = vmul.f32 %v337, %v64
  %340 = vset.pattern.permute.xlu0 21
  %341 = vperm.xlu0 %340, %v53
  %v342 = vpop.permute.xlu0 %341
  %v344 = vmul.f32 %v342, %v73
  %v345 = vadd.f32 %v339, %v344
  %v346 = vrot.slane %v345, 4
  %v347 = vadd.f32 %v345, %v346
  %v348 = vrot.slane %v347, 2
  %v349 = vadd.f32 %v347, %v348
  %v350 = vrot.slane %v349, 1
  %v351 = vadd.f32 %v349, %v350
  %v352 = vadd.f32 %v325, %v351
  %v353 = vmul.f32 %v345, %v345
  %v354 = vrot.slane %v353, 4
  %v355 = vadd.f32 %v353, %v354
  %v356 = vrot.slane %v355, 2
  %v357 = vadd.f32 %v355, %v356
  %v358 = vrot.slane %v357, 1
  %v359 = vadd.f32 %v357, %v358
  %v360 = vadd.f32 %v333, %v359
  %361 = vst [vmem:[#allocation2 + $0x50] sm:$0xff] %v345
  %362 = vset.pattern.permute.xlu0 22
  %363 = vperm.xlu0 %362, %v53
  %v364 = vpop.permute.xlu0 %363
  %v366 = vmul.f32 %v364, %v64
  %367 = vset.pattern.permute.xlu0 23
  %368 = vperm.xlu0 %367, %v53
  %v369 = vpop.permute.xlu0 %368
  %v371 = vmul.f32 %v369, %v73
  %v372 = vadd.f32 %v366, %v371
  %v373 = vrot.slane %v372, 4
  %v374 = vadd.f32 %v372, %v373
  %v375 = vrot.slane %v374, 2
  %v376 = vadd.f32 %v374, %v375
  %v377 = vrot.slane %v376, 1
  %v378 = vadd.f32 %v376, %v377
  %v379 = vadd.f32 %v352, %v378
  %v380 = vmul.f32 %v372, %v372
  %v381 = vrot.slane %v380, 4
  %v382 = vadd.f32 %v380, %v381
  %v383 = vrot.slane %v382, 2
  %v384 = vadd.f32 %v382, %v383
  %v385 = vrot.slane %v384, 1
  %v386 = vadd.f32 %v384, %v385
  %v387 = vadd.f32 %v360, %v386
  %388 = vst [vmem:[#allocation2 + $0x58] sm:$0xff] %v372
  %389 = vset.pattern.permute.xlu0 24
  %390 = vperm.xlu0 %389, %v53
  %v391 = vpop.permute.xlu0 %390
  %v393 = vmul.f32 %v391, %v64
  %394 = vset.pattern.permute.xlu0 25
  %395 = vperm.xlu0 %394, %v53
  %v396 = vpop.permute.xlu0 %395
  %v398 = vmul.f32 %v396, %v73
  %v399 = vadd.f32 %v393, %v398
  %v400 = vrot.slane %v399, 4
  %v401 = vadd.f32 %v399, %v400
  %v402 = vrot.slane %v401, 2
  %v403 = vadd.f32 %v401, %v402
  %v404 = vrot.slane %v403, 1
  %v405 = vadd.f32 %v403, %v404
  %v406 = vadd.f32 %v379, %v405
  %v407 = vmul.f32 %v399, %v399
  %v408 = vrot.slane %v407, 4
  %v409 = vadd.f32 %v407, %v408
  %v410 = vrot.slane %v409, 2
  %v411 = vadd.f32 %v409, %v410
  %v412 = vrot.slane %v411, 1
  %v413 = vadd.f32 %v411, %v412
  %v414 = vadd.f32 %v387, %v413
  %415 = vst [vmem:[#allocation2 + $0x60] sm:$0xff] %v399
  %416 = vset.pattern.permute.xlu0 26
  %417 = vperm.xlu0 %416, %v53
  %v418 = vpop.permute.xlu0 %417
  %v420 = vmul.f32 %v418, %v64
  %421 = vset.pattern.permute.xlu0 27
  %422 = vperm.xlu0 %421, %v53
  %v423 = vpop.permute.xlu0 %422
  %v425 = vmul.f32 %v423, %v73
  %v426 = vadd.f32 %v420, %v425
  %v427 = vrot.slane %v426, 4
  %v428 = vadd.f32 %v426, %v427
  %v429 = vrot.slane %v428, 2
  %v430 = vadd.f32 %v428, %v429
  %v431 = vrot.slane %v430, 1
  %v432 = vadd.f32 %v430, %v431
  %v433 = vadd.f32 %v406, %v432
  %v434 = vmul.f32 %v426, %v426
  %v435 = vrot.slane %v434, 4
  %v436 = vadd.f32 %v434, %v435
  %v437 = vrot.slane %v436, 2
  %v438 = vadd.f32 %v436, %v437
  %v439 = vrot.slane %v438, 1
  %v440 = vadd.f32 %v438, %v439
  %v441 = vadd.f32 %v414, %v440
  %442 = vst [vmem:[#allocation2 + $0x68] sm:$0xff] %v426
  %443 = vset.pattern.permute.xlu0 28
  %444 = vperm.xlu0 %443, %v53
  %v445 = vpop.permute.xlu0 %444
  %v447 = vmul.f32 %v445, %v64
  %448 = vset.pattern.permute.xlu0 29
  %449 = vperm.xlu0 %448, %v53
  %v450 = vpop.permute.xlu0 %449
  %v452 = vmul.f32 %v450, %v73
  %v453 = vadd.f32 %v447, %v452
  %v454 = vrot.slane %v453, 4
  %v455 = vadd.f32 %v453, %v454
  %v456 = vrot.slane %v455, 2
  %v457 = vadd.f32 %v455, %v456
  %v458 = vrot.slane %v457, 1
  %v459 = vadd.f32 %v457, %v458
  %v460 = vadd.f32 %v433, %v459
  %v461 = vmul.f32 %v453, %v453
  %v462 = vrot.slane %v461, 4
  %v463 = vadd.f32 %v461, %v462
  %v464 = vrot.slane %v463, 2
  %v465 = vadd.f32 %v463, %v464
  %v466 = vrot.slane %v465, 1
  %v467 = vadd.f32 %v465, %v466
  %v468 = vadd.f32 %v441, %v467
  %469 = vst [vmem:[#allocation2 + $0x70] sm:$0xff] %v453
  %470 = vset.pattern.permute.xlu0 30
  %471 = vperm.xlu0 %470, %v53
  %v472 = vpop.permute.xlu0 %471
  %v474 = vmul.f32 %v472, %v64
  %475 = vset.pattern.permute.xlu0 31
  %476 = vperm.xlu0 %475, %v53
  %v477 = vpop.permute.xlu0 %476
  %v479 = vmul.f32 %v477, %v73
  %v480 = vadd.f32 %v474, %v479
  %v481 = vrot.slane %v480, 4
  %v482 = vadd.f32 %v480, %v481
  %v483 = vrot.slane %v482, 2
  %v484 = vadd.f32 %v482, %v483
  %v485 = vrot.slane %v484, 1
  %v486 = vadd.f32 %v484, %v485
  %v487 = vadd.f32 %v460, %v486
  %v488 = vmul.f32 %v480, %v480
  %v489 = vrot.slane %v488, 4
  %v490 = vadd.f32 %v488, %v489
  %v491 = vrot.slane %v490, 2
  %v492 = vadd.f32 %v490, %v491
  %v493 = vrot.slane %v492, 1
  %v494 = vadd.f32 %v492, %v493
  %v495 = vadd.f32 %v468, %v494
  %496 = vst [vmem:[#allocation2 + $0x78] sm:$0xff] %v480
  %v497 = vld [vmem:[%s2] sm:$0x1]
  %v498 = vld [vmem:[%s3] sm:$0x1]
  %v499 = vmul.f32 %v487, 0.0078125
  %v500 = vmul.f32 %v495, 0.0078125
  %v501 = vmul.f32 %v499, %v499
  %v502 = vsub.f32 %v500, %v501
  %v503 = vadd.f32 %v502, 1e-05
  %v504 = vrsqrt.pop %v503
  %v505 = vmul.f32 %v497, %v504
  %v506 = vmul.f32 %v499, %v505
  %v507 = vsub.f32 %v498, %v506
  %v508 = vld [vmem:[%s4] sm:$0xf]
  %v509 = vld [vmem:[%s4 + $0x4] sm:$0xf]
  %v510 = vld [vmem:[%s4 + $0x8] sm:$0xf]
  %v511 = vld [vmem:[%s4 + $0xc] sm:$0xf]
  %v512 = vld [vmem:[%s4 + $0x10] sm:$0xf]
  %v513 = vld [vmem:[%s4 + $0x14] sm:$0xf]
  %v514 = vld [vmem:[%s4 + $0x18] sm:$0xf]
  %v515 = vld [vmem:[%s4 + $0x1c] sm:$0xf]
  %v516 = vld [vmem:[%s4 + $0x20] sm:$0xf]
  %v517 = vld [vmem:[%s4 + $0x24] sm:$0xf]
  %v518 = vld [vmem:[%s4 + $0x28] sm:$0xf]
  %v519 = vld [vmem:[%s4 + $0x2c] sm:$0xf]
  %v520 = vld [vmem:[%s4 + $0x30] sm:$0xf]
  %v521 = vld [vmem:[%s4 + $0x34] sm:$0xf]
  %v522 = vld [vmem:[%s4 + $0x38] sm:$0xf]
  %v523 = vld [vmem:[%s4 + $0x3c] sm:$0xf]
  %v524 = vld [vmem:[%s4 + $0x40] sm:$0xf]
  %v525 = vld [vmem:[%s4 + $0x44] sm:$0xf]
  %v526 = vld [vmem:[%s4 + $0x48] sm:$0xf]
  %v527 = vld [vmem:[%s4 + $0x4c] sm:$0xf]
  %v528 = vld [vmem:[%s4 + $0x50] sm:$0xf]
  %v529 = vld [vmem:[%s4 + $0x54] sm:$0xf]
  %v530 = vld [vmem:[%s4 + $0x58] sm:$0xf]
  %v531 = vld [vmem:[%s4 + $0x5c] sm:$0xf]
  %v532 = vld [vmem:[%s4 + $0x60] sm:$0xf]
  %v533 = vld [vmem:[%s4 + $0x64] sm:$0xf]
  %v534 = vld [vmem:[%s4 + $0x68] sm:$0xf]
  %v535 = vld [vmem:[%s4 + $0x6c] sm:$0xf]
  %v536 = vld [vmem:[%s4 + $0x70] sm:$0xf]
  %v537 = vld [vmem:[%s4 + $0x74] sm:$0xf]
  %v538 = vld [vmem:[%s4 + $0x78] sm:$0xf]
  %v539 = vld [vmem:[%s4 + $0x7c] sm:$0xf]
  %v540 = vld [vmem:[#allocation2] sm:$0xff]
  %v541 = vld [vmem:[#allocation2 + $0x8] sm:$0xff]
  %v542 = vlaneseq
  %v543 = vshrl.u32 %v542, 7
  %v544 = vsub.s32 0, %v543
  %v545 = vrot.slane %v505, %v544
  %v546 = vmul.f32 %v540, %v545
  %v547 = vmul.f32 %v541, %v545
  %v548 = vlaneseq
  %v549 = vshrl.u32 %v548, 7
  %v550 = vsub.s32 0, %v549
  %v551 = vrot.slane %v507, %v550
  %v552 = vadd.f32 %v546, %v551
  %v553 = vadd.f32 %v547, %v551
  %vm554 = vcmp.ge.f32.partialorder %v552, 0.0
  %vm555 = vcmp.ge.f32.partialorder %v553, 0.0
  %v556 = vmul.f32 %v552, 0.1
  %v557 = vmul.f32 %v553, 0.1
  %v558 = vsel %vm554, %v552, %v556
  %v559 = vsel %vm555, %v553, %v557
  %v560 = vpack.c.bf16 %v558, %v558
  %v561 = vpack.c.bf16 %v559, %v559
  %v594 = vunpack.c.l.b16 %v508
  %v595 = vunpack.c.l.b16 %v509
  %v596 = vunpack.c.l.b16 %v510
  %v597 = vunpack.c.l.b16 %v511
  %v598 = vunpack.c.l.b16 %v512
  %v599 = vunpack.c.l.b16 %v513
  %v600 = vunpack.c.l.b16 %v514
  %v601 = vunpack.c.l.b16 %v515
  %v602 = vunpack.c.l.b16 %v516
  %v603 = vunpack.c.l.b16 %v517
  %v604 = vunpack.c.l.b16 %v518
  %v605 = vunpack.c.l.b16 %v519
  %v606 = vunpack.c.l.b16 %v520
  %v607 = vunpack.c.l.b16 %v521
  %v608 = vunpack.c.l.b16 %v522
  %v609 = vunpack.c.l.b16 %v523
  %v610 = vunpack.c.l.b16 %v524
  %v611 = vunpack.c.l.b16 %v525
  %v612 = vunpack.c.l.b16 %v526
  %v613 = vunpack.c.l.b16 %v527
  %v614 = vunpack.c.l.b16 %v528
  %v615 = vunpack.c.l.b16 %v529
  %v616 = vunpack.c.l.b16 %v530
  %v617 = vunpack.c.l.b16 %v531
  %v618 = vunpack.c.l.b16 %v532
  %v619 = vunpack.c.l.b16 %v533
  %v620 = vunpack.c.l.b16 %v534
  %v621 = vunpack.c.l.b16 %v535
  %v622 = vunpack.c.l.b16 %v536
  %v623 = vunpack.c.l.b16 %v537
  %v624 = vunpack.c.l.b16 %v538
  %v625 = vunpack.c.l.b16 %v539
  %v626 = vpack.c.b16 %v595, %v594
  %v627 = vpack.c.b16 %v597, %v596
  %v628 = vpack.c.b16 %v599, %v598
  %v629 = vpack.c.b16 %v601, %v600
  %v630 = vpack.c.b16 %v603, %v602
  %v631 = vpack.c.b16 %v605, %v604
  %v632 = vpack.c.b16 %v607, %v606
  %v633 = vpack.c.b16 %v609, %v608
  %v634 = vpack.c.b16 %v611, %v610
  %v635 = vpack.c.b16 %v613, %v612
  %v636 = vpack.c.b16 %v615, %v614
  %v637 = vpack.c.b16 %v617, %v616
  %v638 = vpack.c.b16 %v619, %v618
  %v639 = vpack.c.b16 %v621, %v620
  %v640 = vpack.c.b16 %v623, %v622
  %v641 = vpack.c.b16 %v625, %v624
  %658 = vmatprep.subr.bf16.mxu0 0
  %659 = vmatpush1.bf16.msra.mxu0 %v626
  %660 = vmatprep.subr.bf16.mxu0 0
  %661 = vmatpush1.bf16.msra.mxu0 %v627
  %662 = vmatprep.subr.bf16.mxu0 0
  %663 = vmatpush1.bf16.msra.mxu0 %v628
  %664 = vmatprep.subr.bf16.mxu0 0
  %665 = vmatpush1.bf16.msra.mxu0 %v629
  %666 = vmatprep.subr.bf16.mxu0 0
  %667 = vmatpush1.bf16.msra.mxu0 %v630
  %668 = vmatprep.subr.bf16.mxu0 0
  %669 = vmatpush1.bf16.msra.mxu0 %v631
  %670 = vmatprep.subr.bf16.mxu0 0
  %671 = vmatpush1.bf16.msra.mxu0 %v632
  %672 = vmatprep.subr.bf16.mxu0 0
  %673 = vmatpush1.bf16.msra.mxu0 %v633
  %674 = vmatprep.subr.bf16.mxu0 0
  %675 = vmatpush1.bf16.msra.mxu0 %v634
  %676 = vmatprep.subr.bf16.mxu0 0
  %677 = vmatpush1.bf16.msra.mxu0 %v635
  %678 = vmatprep.subr.bf16.mxu0 0
  %679 = vmatpush1.bf16.msra.mxu0 %v636
  %680 = vmatprep.subr.bf16.mxu0 0
  %681 = vmatpush1.bf16.msra.mxu0 %v637
  %682 = vmatprep.subr.bf16.mxu0 0
  %683 = vmatpush1.bf16.msra.mxu0 %v638
  %684 = vmatprep.subr.bf16.mxu0 0
  %685 = vmatpush1.bf16.msra.mxu0 %v639
  %686 = vmatprep.subr.bf16.mxu0 0
  %687 = vmatpush1.bf16.msra.mxu0 %v640
  %688 = vmatprep.subr.bf16.mxu0 0
  %689 = vmatpush1.bf16.msra.mxu0 %v641
  %690 = vmatprep.mubr.bf16.mxu0 %v561
  %691 = vmatmul.mubr.bf16.gmra.mrb[0].mxu0 %v560
  %v692 = vpop.f32.mrb[0].mxu0
  %v693 = vadd.f32 0.0, %v692
  %v694 = vpop.f32.mrb[0].mxu0
  %v695 = vpop.f32.mrb[0].mxu0
  %v696 = vpop.f32.mrb[0].mxu0
  %697 = vdwg.mxu0
  %v698 = vrot.slane %v693, 4
  %v699 = vadd.f32 %v693, %v698
  %v700 = vrot.slane %v699, 2
  %v701 = vadd.f32 %v699, %v700
  %v702 = vrot.slane %v701, 1
  %v703 = vadd.f32 %v701, %v702
  %v704 = vadd.f32 %v703, 0.0
  %v705 = vmul.f32 %v693, %v693
  %v706 = vrot.slane %v705, 4
  %v707 = vadd.f32 %v705, %v706
  %v708 = vrot.slane %v707, 2
  %v709 = vadd.f32 %v707, %v708
  %v710 = vrot.slane %v709, 1
  %v711 = vadd.f32 %v709, %v710
  %v712 = vadd.f32 %v711, 0.0
  %713 = vst [vmem:[#allocation3] sm:$0xff] %v693
  %v714 = vld [vmem:[#allocation2 + $0x10] sm:$0xff]
  %v715 = vld [vmem:[#allocation2 + $0x18] sm:$0xff]
  %v716 = vmul.f32 %v714, %v545
  %v717 = vmul.f32 %v715, %v545
  %v718 = vadd.f32 %v716, %v551
  %v719 = vadd.f32 %v717, %v551
  %vm720 = vcmp.ge.f32.partialorder %v718, 0.0
  %vm721 = vcmp.ge.f32.partialorder %v719, 0.0
  %v722 = vmul.f32 %v718, 0.1
  %v723 = vmul.f32 %v719, 0.1
  %v724 = vsel %vm720, %v718, %v722
  %v725 = vsel %vm721, %v719, %v723
  %v726 = vpack.c.bf16 %v724, %v724
  %v727 = vpack.c.bf16 %v725, %v725
  %728 = vmatprep.subr.bf16.mxu0 0
  %729 = vmatpush1.bf16.msra.mxu0 %v626
  %730 = vmatprep.subr.bf16.mxu0 0
  %731 = vmatpush1.bf16.msra.mxu0 %v627
  %732 = vmatprep.subr.bf16.mxu0 0
  %733 = vmatpush1.bf16.msra.mxu0 %v628
  %734 = vmatprep.subr.bf16.mxu0 0
  %735 = vmatpush1.bf16.msra.mxu0 %v629
  %736 = vmatprep.subr.bf16.mxu0 0
  %737 = vmatpush1.bf16.msra.mxu0 %v630
  %738 = vmatprep.subr.bf16.mxu0 0
  %739 = vmatpush1.bf16.msra.mxu0 %v631
  %740 = vmatprep.subr.bf16.mxu0 0
  %741 = vmatpush1.bf16.msra.mxu0 %v632
  %742 = vmatprep.subr.bf16.mxu0 0
  %743 = vmatpush1.bf16.msra.mxu0 %v633
  %744 = vmatprep.subr.bf16.mxu0 0
  %745 = vmatpush1.bf16.msra.mxu0 %v634
  %746 = vmatprep.subr.bf16.mxu0 0
  %747 = vmatpush1.bf16.msra.mxu0 %v635
  %748 = vmatprep.subr.bf16.mxu0 0
  %749 = vmatpush1.bf16.msra.mxu0 %v636
  %750 = vmatprep.subr.bf16.mxu0 0
  %751 = vmatpush1.bf16.msra.mxu0 %v637
  %752 = vmatprep.subr.bf16.mxu0 0
  %753 = vmatpush1.bf16.msra.mxu0 %v638
  %754 = vmatprep.subr.bf16.mxu0 0
  %755 = vmatpush1.bf16.msra.mxu0 %v639
  %756 = vmatprep.subr.bf16.mxu0 0
  %757 = vmatpush1.bf16.msra.mxu0 %v640
  %758 = vmatprep.subr.bf16.mxu0 0
  %759 = vmatpush1.bf16.msra.mxu0 %v641
  %760 = vmatprep.mubr.bf16.mxu0 %v727
  %761 = vmatmul.mubr.bf16.gmra.mrb[0].mxu0 %v726
  %v762 = vpop.f32.mrb[0].mxu0
  %v763 = vadd.f32 0.0, %v762
  %v764 = vpop.f32.mrb[0].mxu0
  %v765 = vpop.f32.mrb[0].mxu0
  %v766 = vpop.f32.mrb[0].mxu0
  %767 = vdwg.mxu0
  %v768 = vrot.slane %v763, 4
  %v769 = vadd.f32 %v763, %v768
  %v770 = vrot.slane %v769, 2
  %v771 = vadd.f32 %v769, %v770
  %v772 = vrot.slane %v771, 1
  %v773 = vadd.f32 %v771, %v772
  %v774 = vadd.f32 %v704, %v773
  %v775 = vmul.f32 %v763, %v763
  %v776 = vrot.slane %v775, 4
  %v777 = vadd.f32 %v775, %v776
  %v778 = vrot.slane %v777, 2
  %v779 = vadd.f32 %v777, %v778
  %v780 = vrot.slane %v779, 1
  %v781 = vadd.f32 %v779, %v780
  %v782 = vadd.f32 %v712, %v781
  %783 = vst [vmem:[#allocation3 + $0x8] sm:$0xff] %v763
  %v784 = vld [vmem:[#allocation2 + $0x20] sm:$0xff]
  %v785 = vld [vmem:[#allocation2 + $0x28] sm:$0xff]
  %v786 = vmul.f32 %v784, %v545
  %v787 = vmul.f32 %v785, %v545
  %v788 = vadd.f32 %v786, %v551
  %v789 = vadd.f32 %v787, %v551
  %vm790 = vcmp.ge.f32.partialorder %v788, 0.0
  %vm791 = vcmp.ge.f32.partialorder %v789, 0.0
  %v792 = vmul.f32 %v788, 0.1
  %v793 = vmul.f32 %v789, 0.1
  %v794 = vsel %vm790, %v788, %v792
  %v795 = vsel %vm791, %v789, %v793
  %v796 = vpack.c.bf16 %v794, %v794
  %v797 = vpack.c.bf16 %v795, %v795
  %798 = vmatprep.subr.bf16.mxu0 0
  %799 = vmatpush1.bf16.msra.mxu0 %v626
  %800 = vmatprep.subr.bf16.mxu0 0
  %801 = vmatpush1.bf16.msra.mxu0 %v627
  %802 = vmatprep.subr.bf16.mxu0 0
  %803 = vmatpush1.bf16.msra.mxu0 %v628
  %804 = vmatprep.subr.bf16.mxu0 0
  %805 = vmatpush1.bf16.msra.mxu0 %v629
  %806 = vmatprep.subr.bf16.mxu0 0
  %807 = vmatpush1.bf16.msra.mxu0 %v630
  %808 = vmatprep.subr.bf16.mxu0 0
  %809 = vmatpush1.bf16.msra.mxu0 %v631
  %810 = vmatprep.subr.bf16.mxu0 0
  %811 = vmatpush1.bf16.msra.mxu0 %v632
  %812 = vmatprep.subr.bf16.mxu0 0
  %813 = vmatpush1.bf16.msra.mxu0 %v633
  %814 = vmatprep.subr.bf16.mxu0 0
  %815 = vmatpush1.bf16.msra.mxu0 %v634
  %816 = vmatprep.subr.bf16.mxu0 0
  %817 = vmatpush1.bf16.msra.mxu0 %v635
  %818 = vmatprep.subr.bf16.mxu0 0
  %819 = vmatpush1.bf16.msra.mxu0 %v636
  %820 = vmatprep.subr.bf16.mxu0 0
  %821 = vmatpush1.bf16.msra.mxu0 %v637
  %822 = vmatprep.subr.bf16.mxu0 0
  %823 = vmatpush1.bf16.msra.mxu0 %v638
  %824 = vmatprep.subr.bf16.mxu0 0
  %825 = vmatpush1.bf16.msra.mxu0 %v639
  %826 = vmatprep.subr.bf16.mxu0 0
  %827 = vmatpush1.bf16.msra.mxu0 %v640
  %828 = vmatprep.subr.bf16.mxu0 0
  %829 = vmatpush1.bf16.msra.mxu0 %v641
  %830 = vmatprep.mubr.bf16.mxu0 %v797
  %831 = vmatmul.mubr.bf16.gmra.mrb[0].mxu0 %v796
  %v832 = vpop.f32.mrb[0].mxu0
  %v833 = vadd.f32 0.0, %v832
  %v834 = vpop.f32.mrb[0].mxu0
  %v835 = vpop.f32.mrb[0].mxu0
  %v836 = vpop.f32.mrb[0].mxu0
  %837 = vdwg.mxu0
  %v838 = vrot.slane %v833, 4
  %v839 = vadd.f32 %v833, %v838
  %v840 = vrot.slane %v839, 2
  %v841 = vadd.f32 %v839, %v840
  %v842 = vrot.slane %v841, 1
  %v843 = vadd.f32 %v841, %v842
  %v844 = vadd.f32 %v774, %v843
  %v845 = vmul.f32 %v833, %v833
  %v846 = vrot.slane %v845, 4
  %v847 = vadd.f32 %v845, %v846
  %v848 = vrot.slane %v847, 2
  %v849 = vadd.f32 %v847, %v848
  %v850 = vrot.slane %v849, 1
  %v851 = vadd.f32 %v849, %v850
  %v852 = vadd.f32 %v782, %v851
  %853 = vst [vmem:[#allocation3 + $0x10] sm:$0xff] %v833
  %v854 = vld [vmem:[#allocation2 + $0x30] sm:$0xff]
  %v855 = vld [vmem:[#allocation2 + $0x38] sm:$0xff]
  %v856 = vmul.f32 %v854, %v545
  %v857 = vmul.f32 %v855, %v545
  %v858 = vadd.f32 %v856, %v551
  %v859 = vadd.f32 %v857, %v551
  %vm860 = vcmp.ge.f32.partialorder %v858, 0.0
  %vm861 = vcmp.ge.f32.partialorder %v859, 0.0
  %v862 = vmul.f32 %v858, 0.1
  %v863 = vmul.f32 %v859, 0.1
  %v864 = vsel %vm860, %v858, %v862
  %v865 = vsel %vm861, %v859, %v863
  %v866 = vpack.c.bf16 %v864, %v864
  %v867 = vpack.c.bf16 %v865, %v865
  %868 = vmatprep.subr.bf16.mxu0 0
  %869 = vmatpush1.bf16.msra.mxu0 %v626
  %870 = vmatprep.subr.bf16.mxu0 0
  %871 = vmatpush1.bf16.msra.mxu0 %v627
  %872 = vmatprep.subr.bf16.mxu0 0
  %873 = vmatpush1.bf16.msra.mxu0 %v628
  %874 = vmatprep.subr.bf16.mxu0 0
  %875 = vmatpush1.bf16.msra.mxu0 %v629
  %876 = vmatprep.subr.bf16.mxu0 0
  %877 = vmatpush1.bf16.msra.mxu0 %v630
  %878 = vmatprep.subr.bf16.mxu0 0
  %879 = vmatpush1.bf16.msra.mxu0 %v631
  %880 = vmatprep.subr.bf16.mxu0 0
  %881 = vmatpush1.bf16.msra.mxu0 %v632
  %882 = vmatprep.subr.bf16.mxu0 0
  %883 = vmatpush1.bf16.msra.mxu0 %v633
  %884 = vmatprep.subr.bf16.mxu0 0
  %885 = vmatpush1.bf16.msra.mxu0 %v634
  %886 = vmatprep.subr.bf16.mxu0 0
  %887 = vmatpush1.bf16.msra.mxu0 %v635
  %888 = vmatprep.subr.bf16.mxu0 0
  %889 = vmatpush1.bf16.msra.mxu0 %v636
  %890 = vmatprep.subr.bf16.mxu0 0
  %891 = vmatpush1.bf16.msra.mxu0 %v637
  %892 = vmatprep.subr.bf16.mxu0 0
  %893 = vmatpush1.bf16.msra.mxu0 %v638
  %894 = vmatprep.subr.bf16.mxu0 0
  %895 = vmatpush1.bf16.msra.mxu0 %v639
  %896 = vmatprep.subr.bf16.mxu0 0
  %897 = vmatpush1.bf16.msra.mxu0 %v640
  %898 = vmatprep.subr.bf16.mxu0 0
  %899 = vmatpush1.bf16.msra.mxu0 %v641
  %900 = vmatprep.mubr.bf16.mxu0 %v867
  %901 = vmatmul.mubr.bf16.gmra.mrb[0].mxu0 %v866
  %v902 = vpop.f32.mrb[0].mxu0
  %v903 = vadd.f32 0.0, %v902
  %v904 = vpop.f32.mrb[0].mxu0
  %v905 = vpop.f32.mrb[0].mxu0
  %v906 = vpop.f32.mrb[0].mxu0
  %907 = vdwg.mxu0
  %v908 = vrot.slane %v903, 4
  %v909 = vadd.f32 %v903, %v908
  %v910 = vrot.slane %v909, 2
  %v911 = vadd.f32 %v909, %v910
  %v912 = vrot.slane %v911, 1
  %v913 = vadd.f32 %v911, %v912
  %v914 = vadd.f32 %v844, %v913
  %v915 = vmul.f32 %v903, %v903
  %v916 = vrot.slane %v915, 4
  %v917 = vadd.f32 %v915, %v916
  %v918 = vrot.slane %v917, 2
  %v919 = vadd.f32 %v917, %v918
  %v920 = vrot.slane %v919, 1
  %v921 = vadd.f32 %v919, %v920
  %v922 = vadd.f32 %v852, %v921
  %923 = vst [vmem:[#allocation3 + $0x18] sm:$0xff] %v903
  %v924 = vld [vmem:[#allocation2 + $0x40] sm:$0xff]
  %v925 = vld [vmem:[#allocation2 + $0x48] sm:$0xff]
  %v926 = vmul.f32 %v924, %v545
  %v927 = vmul.f32 %v925, %v545
  %v928 = vadd.f32 %v926, %v551
  %v929 = vadd.f32 %v927, %v551
  %vm930 = vcmp.ge.f32.partialorder %v928, 0.0
  %vm931 = vcmp.ge.f32.partialorder %v929, 0.0
  %v932 = vmul.f32 %v928, 0.1
  %v933 = vmul.f32 %v929, 0.1
  %v934 = vsel %vm930, %v928, %v932
  %v935 = vsel %vm931, %v929, %v933
  %v936 = vpack.c.bf16 %v934, %v934
  %v937 = vpack.c.bf16 %v935, %v935
  %938 = vmatprep.subr.bf16.mxu0 0
  %939 = vmatpush1.bf16.msra.mxu0 %v626
  %940 = vmatprep.subr.bf16.mxu0 0
  %941 = vmatpush1.bf16.msra.mxu0 %v627
  %942 = vmatprep.subr.bf16.mxu0 0
  %943 = vmatpush1.bf16.msra.mxu0 %v628
  %944 = vmatprep.subr.bf16.mxu0 0
  %945 = vmatpush1.bf16.msra.mxu0 %v629
  %946 = vmatprep.subr.bf16.mxu0 0
  %947 = vmatpush1.bf16.msra.mxu0 %v630
  %948 = vmatprep.subr.bf16.mxu0 0
  %949 = vmatpush1.bf16.msra.mxu0 %v631
  %950 = vmatprep.subr.bf16.mxu0 0
  %951 = vmatpush1.bf16.msra.mxu0 %v632
  %952 = vmatprep.subr.bf16.mxu0 0
  %953 = vmatpush1.bf16.msra.mxu0 %v633
  %954 = vmatprep.subr.bf16.mxu0 0
  %955 = vmatpush1.bf16.msra.mxu0 %v634
  %956 = vmatprep.subr.bf16.mxu0 0
  %957 = vmatpush1.bf16.msra.mxu0 %v635
  %958 = vmatprep.subr.bf16.mxu0 0
  %959 = vmatpush1.bf16.msra.mxu0 %v636
  %960 = vmatprep.subr.bf16.mxu0 0
  %961 = vmatpush1.bf16.msra.mxu0 %v637
  %962 = vmatprep.subr.bf16.mxu0 0
  %963 = vmatpush1.bf16.msra.mxu0 %v638
  %964 = vmatprep.subr.bf16.mxu0 0
  %965 = vmatpush1.bf16.msra.mxu0 %v639
  %966 = vmatprep.subr.bf16.mxu0 0
  %967 = vmatpush1.bf16.msra.mxu0 %v640
  %968 = vmatprep.subr.bf16.mxu0 0
  %969 = vmatpush1.bf16.msra.mxu0 %v641
  %970 = vmatprep.mubr.bf16.mxu0 %v937
  %971 = vmatmul.mubr.bf16.gmra.mrb[0].mxu0 %v936
  %v972 = vpop.f32.mrb[0].mxu0
  %v973 = vadd.f32 0.0, %v972
  %v974 = vpop.f32.mrb[0].mxu0
  %v975 = vpop.f32.mrb[0].mxu0
  %v976 = vpop.f32.mrb[0].mxu0
  %977 = vdwg.mxu0
  %v978 = vrot.slane %v973, 4
  %v979 = vadd.f32 %v973, %v978
  %v980 = vrot.slane %v979, 2
  %v981 = vadd.f32 %v979, %v980
  %v982 = vrot.slane %v981, 1
  %v983 = vadd.f32 %v981, %v982
  %v984 = vadd.f32 %v914, %v983
  %v985 = vmul.f32 %v973, %v973
  %v986 = vrot.slane %v985, 4
  %v987 = vadd.f32 %v985, %v986
  %v988 = vrot.slane %v987, 2
  %v989 = vadd.f32 %v987, %v988
  %v990 = vrot.slane %v989, 1
  %v991 = vadd.f32 %v989, %v990
  %v992 = vadd.f32 %v922, %v991
  %993 = vst [vmem:[#allocation3 + $0x20] sm:$0xff] %v973
  %v994 = vld [vmem:[#allocation2 + $0x50] sm:$0xff]
  %v995 = vld [vmem:[#allocation2 + $0x58] sm:$0xff]
  %v996 = vmul.f32 %v994, %v545
  %v997 = vmul.f32 %v995, %v545
  %v998 = vadd.f32 %v996, %v551
  %v999 = vadd.f32 %v997, %v551
  %vm1000 = vcmp.ge.f32.partialorder %v998, 0.0
  %vm1001 = vcmp.ge.f32.partialorder %v999, 0.0
  %v1002 = vmul.f32 %v998, 0.1
  %v1003 = vmul.f32 %v999, 0.1
  %v1004 = vsel %vm1000, %v998, %v1002
  %v1005 = vsel %vm1001, %v999, %v1003
  %v1006 = vpack.c.bf16 %v1004, %v1004
  %v1007 = vpack.c.bf16 %v1005, %v1005
  %1008 = vmatprep.subr.bf16.mxu0 0
  %1009 = vmatpush1.bf16.msra.mxu0 %v626
  %1010 = vmatprep.subr.bf16.mxu0 0
  %1011 = vmatpush1.bf16.msra.mxu0 %v627
  %1012 = vmatprep.subr.bf16.mxu0 0
  %1013 = vmatpush1.bf16.msra.mxu0 %v628
  %1014 = vmatprep.subr.bf16.mxu0 0
  %1015 = vmatpush1.bf16.msra.mxu0 %v629
  %1016 = vmatprep.subr.bf16.mxu0 0
  %1017 = vmatpush1.bf16.msra.mxu0 %v630
  %1018 = vmatprep.subr.bf16.mxu0 0
  %1019 = vmatpush1.bf16.msra.mxu0 %v631
  %1020 = vmatprep.subr.bf16.mxu0 0
  %1021 = vmatpush1.bf16.msra.mxu0 %v632
  %1022 = vmatprep.subr.bf16.mxu0 0
  %1023 = vmatpush1.bf16.msra.mxu0 %v633
  %1024 = vmatprep.subr.bf16.mxu0 0
  %1025 = vmatpush1.bf16.msra.mxu0 %v634
  %1026 = vmatprep.subr.bf16.mxu0 0
  %1027 = vmatpush1.bf16.msra.mxu0 %v635
  %1028 = vmatprep.subr.bf16.mxu0 0
  %1029 = vmatpush1.bf16.msra.mxu0 %v636
  %1030 = vmatprep.subr.bf16.mxu0 0
  %1031 = vmatpush1.bf16.msra.mxu0 %v637
  %1032 = vmatprep.subr.bf16.mxu0 0
  %1033 = vmatpush1.bf16.msra.mxu0 %v638
  %1034 = vmatprep.subr.bf16.mxu0 0
  %1035 = vmatpush1.bf16.msra.mxu0 %v639
  %1036 = vmatprep.subr.bf16.mxu0 0
  %1037 = vmatpush1.bf16.msra.mxu0 %v640
  %1038 = vmatprep.subr.bf16.mxu0 0
  %1039 = vmatpush1.bf16.msra.mxu0 %v641
  %1040 = vmatprep.mubr.bf16.mxu0 %v1007
  %1041 = vmatmul.mubr.bf16.gmra.mrb[0].mxu0 %v1006
  %v1042 = vpop.f32.mrb[0].mxu0
  %v1043 = vadd.f32 0.0, %v1042
  %v1044 = vpop.f32.mrb[0].mxu0
  %v1045 = vpop.f32.mrb[0].mxu0
  %v1046 = vpop.f32.mrb[0].mxu0
  %1047 = vdwg.mxu0
  %v1048 = vrot.slane %v1043, 4
  %v1049 = vadd.f32 %v1043, %v1048
  %v1050 = vrot.slane %v1049, 2
  %v1051 = vadd.f32 %v1049, %v1050
  %v1052 = vrot.slane %v1051, 1
  %v1053 = vadd.f32 %v1051, %v1052
  %v1054 = vadd.f32 %v984, %v1053
  %v1055 = vmul.f32 %v1043, %v1043
  %v1056 = vrot.slane %v1055, 4
  %v1057 = vadd.f32 %v1055, %v1056
  %v1058 = vrot.slane %v1057, 2
  %v1059 = vadd.f32 %v1057, %v1058
  %v1060 = vrot.slane %v1059, 1
  %v1061 = vadd.f32 %v1059, %v1060
  %v1062 = vadd.f32 %v992, %v1061
  %1063 = vst [vmem:[#allocation3 + $0x28] sm:$0xff] %v1043
  %v1064 = vld [vmem:[#allocation2 + $0x60] sm:$0xff]
  %v1065 = vld [vmem:[#allocation2 + $0x68] sm:$0xff]
  %v1066 = vmul.f32 %v1064, %v545
  %v1067 = vmul.f32 %v1065, %v545
  %v1068 = vadd.f32 %v1066, %v551
  %v1069 = vadd.f32 %v1067, %v551
  %vm1070 = vcmp.ge.f32.partialorder %v1068, 0.0
  %vm1071 = vcmp.ge.f32.partialorder %v1069, 0.0
  %v1072 = vmul.f32 %v1068, 0.1
  %v1073 = vmul.f32 %v1069, 0.1
  %v1074 = vsel %vm1070, %v1068, %v1072
  %v1075 = vsel %vm1071, %v1069, %v1073
  %v1076 = vpack.c.bf16 %v1074, %v1074
  %v1077 = vpack.c.bf16 %v1075, %v1075
  %1078 = vmatprep.subr.bf16.mxu0 0
  %1079 = vmatpush1.bf16.msra.mxu0 %v626
  %1080 = vmatprep.subr.bf16.mxu0 0
  %1081 = vmatpush1.bf16.msra.mxu0 %v627
  %1082 = vmatprep.subr.bf16.mxu0 0
  %1083 = vmatpush1.bf16.msra.mxu0 %v628
  %1084 = vmatprep.subr.bf16.mxu0 0
  %1085 = vmatpush1.bf16.msra.mxu0 %v629
  %1086 = vmatprep.subr.bf16.mxu0 0
  %1087 = vmatpush1.bf16.msra.mxu0 %v630
  %1088 = vmatprep.subr.bf16.mxu0 0
  %1089 = vmatpush1.bf16.msra.mxu0 %v631
  %1090 = vmatprep.subr.bf16.mxu0 0
  %1091 = vmatpush1.bf16.msra.mxu0 %v632
  %1092 = vmatprep.subr.bf16.mxu0 0
  %1093 = vmatpush1.bf16.msra.mxu0 %v633
  %1094 = vmatprep.subr.bf16.mxu0 0
  %1095 = vmatpush1.bf16.msra.mxu0 %v634
  %1096 = vmatprep.subr.bf16.mxu0 0
  %1097 = vmatpush1.bf16.msra.mxu0 %v635
  %1098 = vmatprep.subr.bf16.mxu0 0
  %1099 = vmatpush1.bf16.msra.mxu0 %v636
  %1100 = vmatprep.subr.bf16.mxu0 0
  %1101 = vmatpush1.bf16.msra.mxu0 %v637
  %1102 = vmatprep.subr.bf16.mxu0 0
  %1103 = vmatpush1.bf16.msra.mxu0 %v638
  %1104 = vmatprep.subr.bf16.mxu0 0
  %1105 = vmatpush1.bf16.msra.mxu0 %v639
  %1106 = vmatprep.subr.bf16.mxu0 0
  %1107 = vmatpush1.bf16.msra.mxu0 %v640
  %1108 = vmatprep.subr.bf16.mxu0 0
  %1109 = vmatpush1.bf16.msra.mxu0 %v641
  %1110 = vmatprep.mubr.bf16.mxu0 %v1077
  %1111 = vmatmul.mubr.bf16.gmra.mrb[0].mxu0 %v1076
  %v1112 = vpop.f32.mrb[0].mxu0
  %v1113 = vadd.f32 0.0, %v1112
  %v1114 = vpop.f32.mrb[0].mxu0
  %v1115 = vpop.f32.mrb[0].mxu0
  %v1116 = vpop.f32.mrb[0].mxu0
  %1117 = vdwg.mxu0
  %v1118 = vrot.slane %v1113, 4
  %v1119 = vadd.f32 %v1113, %v1118
  %v1120 = vrot.slane %v1119, 2
  %v1121 = vadd.f32 %v1119, %v1120
  %v1122 = vrot.slane %v1121, 1
  %v1123 = vadd.f32 %v1121, %v1122
  %v1124 = vadd.f32 %v1054, %v1123
  %v1125 = vmul.f32 %v1113, %v1113
  %v1126 = vrot.slane %v1125, 4
  %v1127 = vadd.f32 %v1125, %v1126
  %v1128 = vrot.slane %v1127, 2
  %v1129 = vadd.f32 %v1127, %v1128
  %v1130 = vrot.slane %v1129, 1
  %v1131 = vadd.f32 %v1129, %v1130
  %v1132 = vadd.f32 %v1062, %v1131
  %1133 = vst [vmem:[#allocation3 + $0x30] sm:$0xff] %v1113
  %v1134 = vld [vmem:[#allocation2 + $0x70] sm:$0xff]
  %v1135 = vld [vmem:[#allocation2 + $0x78] sm:$0xff]
  %v1136 = vmul.f32 %v1134, %v545
  %v1137 = vmul.f32 %v1135, %v545
  %v1138 = vadd.f32 %v1136, %v551
  %v1139 = vadd.f32 %v1137, %v551
  %vm1140 = vcmp.ge.f32.partialorder %v1138, 0.0
  %vm1141 = vcmp.ge.f32.partialorder %v1139, 0.0
  %v1142 = vmul.f32 %v1138, 0.1
  %v1143 = vmul.f32 %v1139, 0.1
  %v1144 = vsel %vm1140, %v1138, %v1142
  %v1145 = vsel %vm1141, %v1139, %v1143
  %v1146 = vpack.c.bf16 %v1144, %v1144
  %v1147 = vpack.c.bf16 %v1145, %v1145
  %1148 = vmatprep.subr.bf16.mxu0 0
  %1149 = vmatpush1.bf16.msra.mxu0 %v626
  %1150 = vmatprep.subr.bf16.mxu0 0
  %1151 = vmatpush1.bf16.msra.mxu0 %v627
  %1152 = vmatprep.subr.bf16.mxu0 0
  %1153 = vmatpush1.bf16.msra.mxu0 %v628
  %1154 = vmatprep.subr.bf16.mxu0 0
  %1155 = vmatpush1.bf16.msra.mxu0 %v629
  %1156 = vmatprep.subr.bf16.mxu0 0
  %1157 = vmatpush1.bf16.msra.mxu0 %v630
  %1158 = vmatprep.subr.bf16.mxu0 0
  %1159 = vmatpush1.bf16.msra.mxu0 %v631
  %1160 = vmatprep.subr.bf16.mxu0 0
  %1161 = vmatpush1.bf16.msra.mxu0 %v632
  %1162 = vmatprep.subr.bf16.mxu0 0
  %1163 = vmatpush1.bf16.msra.mxu0 %v633
  %1164 = vmatprep.subr.bf16.mxu0 0
  %1165 = vmatpush1.bf16.msra.mxu0 %v634
  %1166 = vmatprep.subr.bf16.mxu0 0
  %1167 = vmatpush1.bf16.msra.mxu0 %v635
  %1168 = vmatprep.subr.bf16.mxu0 0
  %1169 = vmatpush1.bf16.msra.mxu0 %v636
  %1170 = vmatprep.subr.bf16.mxu0 0
  %1171 = vmatpush1.bf16.msra.mxu0 %v637
  %1172 = vmatprep.subr.bf16.mxu0 0
  %1173 = vmatpush1.bf16.msra.mxu0 %v638
  %1174 = vmatprep.subr.bf16.mxu0 0
  %1175 = vmatpush1.bf16.msra.mxu0 %v639
  %1176 = vmatprep.subr.bf16.mxu0 0
  %1177 = vmatpush1.bf16.msra.mxu0 %v640
  %1178 = vmatprep.subr.bf16.mxu0 0
  %1179 = vmatpush1.bf16.msra.mxu0 %v641
  %1180 = vmatprep.mubr.bf16.mxu0 %v1147
  %1181 = vmatmul.mubr.bf16.gmra.mrb[0].mxu0 %v1146
  %v1182 = vpop.f32.mrb[0].mxu0
  %v1183 = vadd.f32 0.0, %v1182
  %v1184 = vpop.f32.mrb[0].mxu0
  %v1185 = vpop.f32.mrb[0].mxu0
  %v1186 = vpop.f32.mrb[0].mxu0
  %1187 = vdwg.mxu0
  %v1188 = vrot.slane %v1183, 4
  %v1189 = vadd.f32 %v1183, %v1188
  %v1190 = vrot.slane %v1189, 2
  %v1191 = vadd.f32 %v1189, %v1190
  %v1192 = vrot.slane %v1191, 1
  %v1193 = vadd.f32 %v1191, %v1192
  %v1194 = vadd.f32 %v1124, %v1193
  %v1195 = vmul.f32 %v1183, %v1183
  %v1196 = vrot.slane %v1195, 4
  %v1197 = vadd.f32 %v1195, %v1196
  %v1198 = vrot.slane %v1197, 2
  %v1199 = vadd.f32 %v1197, %v1198
  %v1200 = vrot.slane %v1199, 1
  %v1201 = vadd.f32 %v1199, %v1200
  %v1202 = vadd.f32 %v1132, %v1201
  %1203 = vst [vmem:[#allocation3 + $0x38] sm:$0xff] %v1183
  %v1204 = vld [vmem:[%s5] sm:$0x1]
  %v1205 = vld [vmem:[%s6] sm:$0x1]
  %v1206 = vmul.f32 %v1194, 0.015625
  %v1207 = vmul.f32 %v1202, 0.015625
  %v1208 = vmul.f32 %v1206, %v1206
  %v1209 = vsub.f32 %v1207, %v1208
  %v1210 = vadd.f32 %v1209, 1e-05
  %v1211 = vrsqrt.pop %v1210
  %v1212 = vmul.f32 %v1204, %v1211
  %v1213 = vmul.f32 %v1206, %v1212
  %v1214 = vsub.f32 %v1205, %v1213
  %v1215 = vld [vmem:[%s7] sm:$0xf]
  %v1216 = vld [vmem:[%s7 + $0x4] sm:$0xf]
  %v1217 = vld [vmem:[%s7 + $0x8] sm:$0xf]
  %v1218 = vld [vmem:[%s7 + $0xc] sm:$0xf]
  %v1219 = vld [vmem:[%s7 + $0x10] sm:$0xf]
  %v1220 = vld [vmem:[%s7 + $0x14] sm:$0xf]
  %v1221 = vld [vmem:[%s7 + $0x18] sm:$0xf]
  %v1222 = vld [vmem:[%s7 + $0x1c] sm:$0xf]
  %v1223 = vld [vmem:[%s7 + $0x20] sm:$0xf]
  %v1224 = vld [vmem:[%s7 + $0x24] sm:$0xf]
  %v1225 = vld [vmem:[%s7 + $0x28] sm:$0xf]
  %v1226 = vld [vmem:[%s7 + $0x2c] sm:$0xf]
  %v1227 = vld [vmem:[%s7 + $0x30] sm:$0xf]
  %v1228 = vld [vmem:[%s7 + $0x34] sm:$0xf]
  %v1229 = vld [vmem:[%s7 + $0x38] sm:$0xf]
  %v1230 = vld [vmem:[%s7 + $0x3c] sm:$0xf]
  %v1231 = vld [vmem:[%s7 + $0x40] sm:$0xf]
  %v1232 = vld [vmem:[%s7 + $0x44] sm:$0xf]
  %v1233 = vld [vmem:[%s7 + $0x48] sm:$0xf]
  %v1234 = vld [vmem:[%s7 + $0x4c] sm:$0xf]
  %v1235 = vld [vmem:[%s7 + $0x50] sm:$0xf]
  %v1236 = vld [vmem:[%s7 + $0x54] sm:$0xf]
  %v1237 = vld [vmem:[%s7 + $0x58] sm:$0xf]
  %v1238 = vld [vmem:[%s7 + $0x5c] sm:$0xf]
  %v1239 = vld [vmem:[%s7 + $0x60] sm:$0xf]
  %v1240 = vld [vmem:[%s7 + $0x64] sm:$0xf]
  %v1241 = vld [vmem:[%s7 + $0x68] sm:$0xf]
  %v1242 = vld [vmem:[%s7 + $0x6c] sm:$0xf]
  %v1243 = vld [vmem:[%s7 + $0x70] sm:$0xf]
  %v1244 = vld [vmem:[%s7 + $0x74] sm:$0xf]
  %v1245 = vld [vmem:[%s7 + $0x78] sm:$0xf]
  %v1246 = vld [vmem:[%s7 + $0x7c] sm:$0xf]
  %v1247 = vld [vmem:[#allocation3] sm:$0xff]
  %v1248 = vld [vmem:[#allocation3 + $0x8] sm:$0xff]
  %v1249 = vlaneseq
  %v1250 = vshrl.u32 %v1249, 7
  %v1251 = vsub.s32 0, %v1250
  %v1252 = vrot.slane %v1212, %v1251
  %v1253 = vmul.f32 %v1247, %v1252
  %v1254 = vmul.f32 %v1248, %v1252
  %v1255 = vlaneseq
  %v1256 = vshrl.u32 %v1255, 7
  %v1257 = vsub.s32 0, %v1256
  %v1258 = vrot.slane %v1214, %v1257
  %v1259 = vadd.f32 %v1253, %v1258
  %v1260 = vadd.f32 %v1254, %v1258
  %vm1261 = vcmp.ge.f32.partialorder %v1259, 0.0
  %vm1262 = vcmp.ge.f32.partialorder %v1260, 0.0
  %v1263 = vmul.f32 %v1259, 0.1
  %v1264 = vmul.f32 %v1260, 0.1
  %v1265 = vsel %vm1261, %v1259, %v1263
  %v1266 = vsel %vm1262, %v1260, %v1264
  %v1267 = vpack.c.bf16 %v1265, %v1265
  %v1268 = vpack.c.bf16 %v1266, %v1266
  %v1301 = vunpack.c.l.b16 %v1215
  %v1302 = vunpack.c.l.b16 %v1216
  %v1303 = vunpack.c.l.b16 %v1217
  %v1304 = vunpack.c.l.b16 %v1218
  %v1305 = vunpack.c.l.b16 %v1219
  %v1306 = vunpack.c.l.b16 %v1220
  %v1307 = vunpack.c.l.b16 %v1221
  %v1308 = vunpack.c.l.b16 %v1222
  %v1309 = vunpack.c.l.b16 %v1223
  %v1310 = vunpack.c.l.b16 %v1224
  %v1311 = vunpack.c.l.b16 %v1225
  %v1312 = vunpack.c.l.b16 %v1226
  %v1313 = vunpack.c.l.b16 %v1227
  %v1314 = vunpack.c.l.b16 %v1228
  %v1315 = vunpack.c.l.b16 %v1229
  %v1316 = vunpack.c.l.b16 %v1230
  %v1317 = vunpack.c.l.b16 %v1231
  %v1318 = vunpack.c.l.b16 %v1232
  %v1319 = vunpack.c.l.b16 %v1233
  %v1320 = vunpack.c.l.b16 %v1234
  %v1321 = vunpack.c.l.b16 %v1235
  %v1322 = vunpack.c.l.b16 %v1236
  %v1323 = vunpack.c.l.b16 %v1237
  %v1324 = vunpack.c.l.b16 %v1238
  %v1325 = vunpack.c.l.b16 %v1239
  %v1326 = vunpack.c.l.b16 %v1240
  %v1327 = vunpack.c.l.b16 %v1241
  %v1328 = vunpack.c.l.b16 %v1242
  %v1329 = vunpack.c.l.b16 %v1243
  %v1330 = vunpack.c.l.b16 %v1244
  %v1331 = vunpack.c.l.b16 %v1245
  %v1332 = vunpack.c.l.b16 %v1246
  %v1333 = vpack.c.b16 %v1302, %v1301
  %v1334 = vpack.c.b16 %v1304, %v1303
  %v1335 = vpack.c.b16 %v1306, %v1305
  %v1336 = vpack.c.b16 %v1308, %v1307
  %v1337 = vpack.c.b16 %v1310, %v1309
  %v1338 = vpack.c.b16 %v1312, %v1311
  %v1339 = vpack.c.b16 %v1314, %v1313
  %v1340 = vpack.c.b16 %v1316, %v1315
  %v1341 = vpack.c.b16 %v1318, %v1317
  %v1342 = vpack.c.b16 %v1320, %v1319
  %v1343 = vpack.c.b16 %v1322, %v1321
  %v1344 = vpack.c.b16 %v1324, %v1323
  %v1345 = vpack.c.b16 %v1326, %v1325
  %v1346 = vpack.c.b16 %v1328, %v1327
  %v1347 = vpack.c.b16 %v1330, %v1329
  %v1348 = vpack.c.b16 %v1332, %v1331
  %1365 = vmatprep.subr.bf16.mxu0 0
  %1366 = vmatpush1.bf16.msra.mxu0 %v1333
  %1367 = vmatprep.subr.bf16.mxu0 0
  %1368 = vmatpush1.bf16.msra.mxu0 %v1334
  %1369 = vmatprep.subr.bf16.mxu0 0
  %1370 = vmatpush1.bf16.msra.mxu0 %v1335
  %1371 = vmatprep.subr.bf16.mxu0 0
  %1372 = vmatpush1.bf16.msra.mxu0 %v1336
  %1373 = vmatprep.subr.bf16.mxu0 0
  %1374 = vmatpush1.bf16.msra.mxu0 %v1337
  %1375 = vmatprep.subr.bf16.mxu0 0
  %1376 = vmatpush1.bf16.msra.mxu0 %v1338
  %1377 = vmatprep.subr.bf16.mxu0 0
  %1378 = vmatpush1.bf16.msra.mxu0 %v1339
  %1379 = vmatprep.subr.bf16.mxu0 0
  %1380 = vmatpush1.bf16.msra.mxu0 %v1340
  %1381 = vmatprep.subr.bf16.mxu0 0
  %1382 = vmatpush1.bf16.msra.mxu0 %v1341
  %1383 = vmatprep.subr.bf16.mxu0 0
  %1384 = vmatpush1.bf16.msra.mxu0 %v1342
  %1385 = vmatprep.subr.bf16.mxu0 0
  %1386 = vmatpush1.bf16.msra.mxu0 %v1343
  %1387 = vmatprep.subr.bf16.mxu0 0
  %1388 = vmatpush1.bf16.msra.mxu0 %v1344
  %1389 = vmatprep.subr.bf16.mxu0 0
  %1390 = vmatpush1.bf16.msra.mxu0 %v1345
  %1391 = vmatprep.subr.bf16.mxu0 0
  %1392 = vmatpush1.bf16.msra.mxu0 %v1346
  %1393 = vmatprep.subr.bf16.mxu0 0
  %1394 = vmatpush1.bf16.msra.mxu0 %v1347
  %1395 = vmatprep.subr.bf16.mxu0 0
  %1396 = vmatpush1.bf16.msra.mxu0 %v1348
  %1397 = vmatprep.mubr.bf16.mxu0 %v1268
  %1398 = vmatmul.mubr.bf16.gmra.mrb[0].mxu0 %v1267
  %v1399 = vpop.f32.mrb[0].mxu0
  %v1400 = vadd.f32 0.0, %v1399
  %v1401 = vpop.f32.mrb[0].mxu0
  %v1402 = vpop.f32.mrb[0].mxu0
  %v1403 = vpop.f32.mrb[0].mxu0
  %1404 = vdwg.mxu0
  %v1405 = vrot.slane %v1400, 4
  %v1406 = vadd.f32 %v1400, %v1405
  %v1407 = vrot.slane %v1406, 2
  %v1408 = vadd.f32 %v1406, %v1407
  %v1409 = vrot.slane %v1408, 1
  %v1410 = vadd.f32 %v1408, %v1409
  %v1411 = vadd.f32 %v1410, 0.0
  %v1412 = vmul.f32 %v1400, %v1400
  %v1413 = vrot.slane %v1412, 4
  %v1414 = vadd.f32 %v1412, %v1413
  %v1415 = vrot.slane %v1414, 2
  %v1416 = vadd.f32 %v1414, %v1415
  %v1417 = vrot.slane %v1416, 1
  %v1418 = vadd.f32 %v1416, %v1417
  %v1419 = vadd.f32 %v1418, 0.0
  %1420 = vst [vmem:[#allocation4] sm:$0xff] %v1400
  %v1421 = vld [vmem:[#allocation3 + $0x10] sm:$0xff]
  %v1422 = vld [vmem:[#allocation3 + $0x18] sm:$0xff]
  %v1423 = vmul.f32 %v1421, %v1252
  %v1424 = vmul.f32 %v1422, %v1252
  %v1425 = vadd.f32 %v1423, %v1258
  %v1426 = vadd.f32 %v1424, %v1258
  %vm1427 = vcmp.ge.f32.partialorder %v1425, 0.0
  %vm1428 = vcmp.ge.f32.partialorder %v1426, 0.0
  %v1429 = vmul.f32 %v1425, 0.1
  %v1430 = vmul.f32 %v1426, 0.1
  %v1431 = vsel %vm1427, %v1425, %v1429
  %v1432 = vsel %vm1428, %v1426, %v1430
  %v1433 = vpack.c.bf16 %v1431, %v1431
  %v1434 = vpack.c.bf16 %v1432, %v1432
  %1435 = vmatprep.subr.bf16.mxu0 0
  %1436 = vmatpush1.bf16.msra.mxu0 %v1333
  %1437 = vmatprep.subr.bf16.mxu0 0
  %1438 = vmatpush1.bf16.msra.mxu0 %v1334
  %1439 = vmatprep.subr.bf16.mxu0 0
  %1440 = vmatpush1.bf16.msra.mxu0 %v1335
  %1441 = vmatprep.subr.bf16.mxu0 0
  %1442 = vmatpush1.bf16.msra.mxu0 %v1336
  %1443 = vmatprep.subr.bf16.mxu0 0
  %1444 = vmatpush1.bf16.msra.mxu0 %v1337
  %1445 = vmatprep.subr.bf16.mxu0 0
  %1446 = vmatpush1.bf16.msra.mxu0 %v1338
  %1447 = vmatprep.subr.bf16.mxu0 0
  %1448 = vmatpush1.bf16.msra.mxu0 %v1339
  %1449 = vmatprep.subr.bf16.mxu0 0
  %1450 = vmatpush1.bf16.msra.mxu0 %v1340
  %1451 = vmatprep.subr.bf16.mxu0 0
  %1452 = vmatpush1.bf16.msra.mxu0 %v1341
  %1453 = vmatprep.subr.bf16.mxu0 0
  %1454 = vmatpush1.bf16.msra.mxu0 %v1342
  %1455 = vmatprep.subr.bf16.mxu0 0
  %1456 = vmatpush1.bf16.msra.mxu0 %v1343
  %1457 = vmatprep.subr.bf16.mxu0 0
  %1458 = vmatpush1.bf16.msra.mxu0 %v1344
  %1459 = vmatprep.subr.bf16.mxu0 0
  %1460 = vmatpush1.bf16.msra.mxu0 %v1345
  %1461 = vmatprep.subr.bf16.mxu0 0
  %1462 = vmatpush1.bf16.msra.mxu0 %v1346
  %1463 = vmatprep.subr.bf16.mxu0 0
  %1464 = vmatpush1.bf16.msra.mxu0 %v1347
  %1465 = vmatprep.subr.bf16.mxu0 0
  %1466 = vmatpush1.bf16.msra.mxu0 %v1348
  %1467 = vmatprep.mubr.bf16.mxu0 %v1434
  %1468 = vmatmul.mubr.bf16.gmra.mrb[0].mxu0 %v1433
  %v1469 = vpop.f32.mrb[0].mxu0
  %v1470 = vadd.f32 0.0, %v1469
  %v1471 = vpop.f32.mrb[0].mxu0
  %v1472 = vpop.f32.mrb[0].mxu0
  %v1473 = vpop.f32.mrb[0].mxu0
  %1474 = vdwg.mxu0
  %v1475 = vrot.slane %v1470, 4
  %v1476 = vadd.f32 %v1470, %v1475
  %v1477 = vrot.slane %v1476, 2
  %v1478 = vadd.f32 %v1476, %v1477
  %v1479 = vrot.slane %v1478, 1
  %v1480 = vadd.f32 %v1478, %v1479
  %v1481 = vadd.f32 %v1411, %v1480
  %v1482 = vmul.f32 %v1470, %v1470
  %v1483 = vrot.slane %v1482, 4
  %v1484 = vadd.f32 %v1482, %v1483
  %v1485 = vrot.slane %v1484, 2
  %v1486 = vadd.f32 %v1484, %v1485
  %v1487 = vrot.slane %v1486, 1
  %v1488 = vadd.f32 %v1486, %v1487
  %v1489 = vadd.f32 %v1419, %v1488
  %1490 = vst [vmem:[#allocation4 + $0x8] sm:$0xff] %v1470
  %v1491 = vld [vmem:[#allocation3 + $0x20] sm:$0xff]
  %v1492 = vld [vmem:[#allocation3 + $0x28] sm:$0xff]
  %v1493 = vmul.f32 %v1491, %v1252
  %v1494 = vmul.f32 %v1492, %v1252
  %v1495 = vadd.f32 %v1493, %v1258
  %v1496 = vadd.f32 %v1494, %v1258
  %vm1497 = vcmp.ge.f32.partialorder %v1495, 0.0
  %vm1498 = vcmp.ge.f32.partialorder %v1496, 0.0
  %v1499 = vmul.f32 %v1495, 0.1
  %v1500 = vmul.f32 %v1496, 0.1
  %v1501 = vsel %vm1497, %v1495, %v1499
  %v1502 = vsel %vm1498, %v1496, %v1500
  %v1503 = vpack.c.bf16 %v1501, %v1501
  %v1504 = vpack.c.bf16 %v1502, %v1502
  %1505 = vmatprep.subr.bf16.mxu0 0
  %1506 = vmatpush1.bf16.msra.mxu0 %v1333
  %1507 = vmatprep.subr.bf16.mxu0 0
  %1508 = vmatpush1.bf16.msra.mxu0 %v1334
  %1509 = vmatprep.subr.bf16.mxu0 0
  %1510 = vmatpush1.bf16.msra.mxu0 %v1335
  %1511 = vmatprep.subr.bf16.mxu0 0
  %1512 = vmatpush1.bf16.msra.mxu0 %v1336
  %1513 = vmatprep.subr.bf16.mxu0 0
  %1514 = vmatpush1.bf16.msra.mxu0 %v1337
  %1515 = vmatprep.subr.bf16.mxu0 0
  %1516 = vmatpush1.bf16.msra.mxu0 %v1338
  %1517 = vmatprep.subr.bf16.mxu0 0
  %1518 = vmatpush1.bf16.msra.mxu0 %v1339
  %1519 = vmatprep.subr.bf16.mxu0 0
  %1520 = vmatpush1.bf16.msra.mxu0 %v1340
  %1521 = vmatprep.subr.bf16.mxu0 0
  %1522 = vmatpush1.bf16.msra.mxu0 %v1341
  %1523 = vmatprep.subr.bf16.mxu0 0
  %1524 = vmatpush1.bf16.msra.mxu0 %v1342
  %1525 = vmatprep.subr.bf16.mxu0 0
  %1526 = vmatpush1.bf16.msra.mxu0 %v1343
  %1527 = vmatprep.subr.bf16.mxu0 0
  %1528 = vmatpush1.bf16.msra.mxu0 %v1344
  %1529 = vmatprep.subr.bf16.mxu0 0
  %1530 = vmatpush1.bf16.msra.mxu0 %v1345
  %1531 = vmatprep.subr.bf16.mxu0 0
  %1532 = vmatpush1.bf16.msra.mxu0 %v1346
  %1533 = vmatprep.subr.bf16.mxu0 0
  %1534 = vmatpush1.bf16.msra.mxu0 %v1347
  %1535 = vmatprep.subr.bf16.mxu0 0
  %1536 = vmatpush1.bf16.msra.mxu0 %v1348
  %1537 = vmatprep.mubr.bf16.mxu0 %v1504
  %1538 = vmatmul.mubr.bf16.gmra.mrb[0].mxu0 %v1503
  %v1539 = vpop.f32.mrb[0].mxu0
  %v1540 = vadd.f32 0.0, %v1539
  %v1541 = vpop.f32.mrb[0].mxu0
  %v1542 = vpop.f32.mrb[0].mxu0
  %v1543 = vpop.f32.mrb[0].mxu0
  %1544 = vdwg.mxu0
  %v1545 = vrot.slane %v1540, 4
  %v1546 = vadd.f32 %v1540, %v1545
  %v1547 = vrot.slane %v1546, 2
  %v1548 = vadd.f32 %v1546, %v1547
  %v1549 = vrot.slane %v1548, 1
  %v1550 = vadd.f32 %v1548, %v1549
  %v1551 = vadd.f32 %v1481, %v1550
  %v1552 = vmul.f32 %v1540, %v1540
  %v1553 = vrot.slane %v1552, 4
  %v1554 = vadd.f32 %v1552, %v1553
  %v1555 = vrot.slane %v1554, 2
  %v1556 = vadd.f32 %v1554, %v1555
  %v1557 = vrot.slane %v1556, 1
  %v1558 = vadd.f32 %v1556, %v1557
  %v1559 = vadd.f32 %v1489, %v1558
  %1560 = vst [vmem:[#allocation4 + $0x10] sm:$0xff] %v1540
  %v1561 = vld [vmem:[#allocation3 + $0x30] sm:$0xff]
  %v1562 = vld [vmem:[#allocation3 + $0x38] sm:$0xff]
  %v1563 = vmul.f32 %v1561, %v1252
  %v1564 = vmul.f32 %v1562, %v1252
  %v1565 = vadd.f32 %v1563, %v1258
  %v1566 = vadd.f32 %v1564, %v1258
  %vm1567 = vcmp.ge.f32.partialorder %v1565, 0.0
  %vm1568 = vcmp.ge.f32.partialorder %v1566, 0.0
  %v1569 = vmul.f32 %v1565, 0.1
  %v1570 = vmul.f32 %v1566, 0.1
  %v1571 = vsel %vm1567, %v1565, %v1569
  %v1572 = vsel %vm1568, %v1566, %v1570
  %v1573 = vpack.c.bf16 %v1571, %v1571
  %v1574 = vpack.c.bf16 %v1572, %v1572
  %1575 = vmatprep.subr.bf16.mxu0 0
  %1576 = vmatpush1.bf16.msra.mxu0 %v1333
  %1577 = vmatprep.subr.bf16.mxu0 0
  %1578 = vmatpush1.bf16.msra.mxu0 %v1334
  %1579 = vmatprep.subr.bf16.mxu0 0
  %1580 = vmatpush1.bf16.msra.mxu0 %v1335
  %1581 = vmatprep.subr.bf16.mxu0 0
  %1582 = vmatpush1.bf16.msra.mxu0 %v1336
  %1583 = vmatprep.subr.bf16.mxu0 0
  %1584 = vmatpush1.bf16.msra.mxu0 %v1337
  %1585 = vmatprep.subr.bf16.mxu0 0
  %1586 = vmatpush1.bf16.msra.mxu0 %v1338
  %1587 = vmatprep.subr.bf16.mxu0 0
  %1588 = vmatpush1.bf16.msra.mxu0 %v1339
  %1589 = vmatprep.subr.bf16.mxu0 0
  %1590 = vmatpush1.bf16.msra.mxu0 %v1340
  %1591 = vmatprep.subr.bf16.mxu0 0
  %1592 = vmatpush1.bf16.msra.mxu0 %v1341
  %1593 = vmatprep.subr.bf16.mxu0 0
  %1594 = vmatpush1.bf16.msra.mxu0 %v1342
  %1595 = vmatprep.subr.bf16.mxu0 0
  %1596 = vmatpush1.bf16.msra.mxu0 %v1343
  %1597 = vmatprep.subr.bf16.mxu0 0
  %1598 = vmatpush1.bf16.msra.mxu0 %v1344
  %1599 = vmatprep.subr.bf16.mxu0 0
  %1600 = vmatpush1.bf16.msra.mxu0 %v1345
  %1601 = vmatprep.subr.bf16.mxu0 0
  %1602 = vmatpush1.bf16.msra.mxu0 %v1346
  %1603 = vmatprep.subr.bf16.mxu0 0
  %1604 = vmatpush1.bf16.msra.mxu0 %v1347
  %1605 = vmatprep.subr.bf16.mxu0 0
  %1606 = vmatpush1.bf16.msra.mxu0 %v1348
  %1607 = vmatprep.mubr.bf16.mxu0 %v1574
  %1608 = vmatmul.mubr.bf16.gmra.mrb[0].mxu0 %v1573
  %v1609 = vpop.f32.mrb[0].mxu0
  %v1610 = vadd.f32 0.0, %v1609
  %v1611 = vpop.f32.mrb[0].mxu0
  %v1612 = vpop.f32.mrb[0].mxu0
  %v1613 = vpop.f32.mrb[0].mxu0
  %1614 = vdwg.mxu0
  %v1615 = vrot.slane %v1610, 4
  %v1616 = vadd.f32 %v1610, %v1615
  %v1617 = vrot.slane %v1616, 2
  %v1618 = vadd.f32 %v1616, %v1617
  %v1619 = vrot.slane %v1618, 1
  %v1620 = vadd.f32 %v1618, %v1619
  %v1621 = vadd.f32 %v1551, %v1620
  %v1622 = vmul.f32 %v1610, %v1610
  %v1623 = vrot.slane %v1622, 4
  %v1624 = vadd.f32 %v1622, %v1623
  %v1625 = vrot.slane %v1624, 2
  %v1626 = vadd.f32 %v1624, %v1625
  %v1627 = vrot.slane %v1626, 1
  %v1628 = vadd.f32 %v1626, %v1627
  %v1629 = vadd.f32 %v1559, %v1628
  %1630 = vst [vmem:[#allocation4 + $0x18] sm:$0xff] %v1610
  %v1631 = vld [vmem:[%s8] sm:$0x1]
  %v1632 = vld [vmem:[%s9] sm:$0x1]
  %v1633 = vmul.f32 %v1621, 0.03125
  %v1634 = vmul.f32 %v1629, 0.03125
  %v1635 = vmul.f32 %v1633, %v1633
  %v1636 = vsub.f32 %v1634, %v1635
  %v1637 = vadd.f32 %v1636, 1e-05
  %v1638 = vrsqrt.pop %v1637
  %v1639 = vmul.f32 %v1631, %v1638
  %v1640 = vmul.f32 %v1633, %v1639
  %v1641 = vsub.f32 %v1632, %v1640
  %v1642 = vld [vmem:[%s10] sm:$0xff]
  %v1643 = vld [vmem:[%s10 + $0x8] sm:$0xff]
  %v1644 = vld [vmem:[%s10 + $0x10] sm:$0xff]
  %v1645 = vld [vmem:[%s10 + $0x18] sm:$0xff]
  %v1646 = vld [vmem:[%s10 + $0x20] sm:$0xff]
  %v1647 = vld [vmem:[%s10 + $0x28] sm:$0xff]
  %v1648 = vld [vmem:[%s10 + $0x30] sm:$0xff]
  %v1649 = vld [vmem:[%s10 + $0x38] sm:$0xff]
  %v1650 = vld [vmem:[%s10 + $0x40] sm:$0xff]
  %v1651 = vld [vmem:[%s10 + $0x48] sm:$0xff]
  %v1652 = vld [vmem:[%s10 + $0x50] sm:$0xff]
  %v1653 = vld [vmem:[%s10 + $0x58] sm:$0xff]
  %v1654 = vld [vmem:[%s10 + $0x60] sm:$0xff]
  %v1655 = vld [vmem:[%s10 + $0x68] sm:$0xff]
  %v1656 = vld [vmem:[%s10 + $0x70] sm:$0xff]
  %v1657 = vld [vmem:[%s10 + $0x78] sm:$0xff]
  %v1658 = vld [vmem:[%s10 + $0x80] sm:$0xff]
  %v1659 = vld [vmem:[%s10 + $0x88] sm:$0xff]
  %v1660 = vld [vmem:[%s10 + $0x90] sm:$0xff]
  %v1661 = vld [vmem:[%s10 + $0x98] sm:$0xff]
  %v1662 = vld [vmem:[%s10 + $0xa0] sm:$0xff]
  %v1663 = vld [vmem:[%s10 + $0xa8] sm:$0xff]
  %v1664 = vld [vmem:[%s10 + $0xb0] sm:$0xff]
  %v1665 = vld [vmem:[%s10 + $0xb8] sm:$0xff]
  %v1666 = vld [vmem:[%s10 + $0xc0] sm:$0xff]
  %v1667 = vld [vmem:[%s10 + $0xc8] sm:$0xff]
  %v1668 = vld [vmem:[%s10 + $0xd0] sm:$0xff]
  %v1669 = vld [vmem:[%s10 + $0xd8] sm:$0xff]
  %v1670 = vld [vmem:[%s10 + $0xe0] sm:$0xff]
  %v1671 = vld [vmem:[%s10 + $0xe8] sm:$0xff]
  %v1672 = vld [vmem:[%s10 + $0xf0] sm:$0xff]
  %v1673 = vld [vmem:[%s10 + $0xf8] sm:$0xff]
  %v1674 = vld [vmem:[#allocation4] sm:$0xff]
  %v1675 = vld [vmem:[#allocation4 + $0x8] sm:$0xff]
  %v1676 = vlaneseq
  %v1677 = vshrl.u32 %v1676, 7
  %v1678 = vsub.s32 0, %v1677
  %v1679 = vrot.slane %v1639, %v1678
  %v1680 = vmul.f32 %v1674, %v1679
  %v1681 = vmul.f32 %v1675, %v1679
  %v1682 = vlaneseq
  %v1683 = vshrl.u32 %v1682, 7
  %v1684 = vsub.s32 0, %v1683
  %v1685 = vrot.slane %v1641, %v1684
  %v1686 = vadd.f32 %v1680, %v1685
  %v1687 = vadd.f32 %v1681, %v1685
  %vm1688 = vcmp.ge.f32.partialorder %v1686, 0.0
  %vm1689 = vcmp.ge.f32.partialorder %v1687, 0.0
  %v1690 = vmul.f32 %v1686, 0.1
  %v1691 = vmul.f32 %v1687, 0.1
  %v1692 = vsel %vm1688, %v1686, %v1690
  %v1693 = vsel %vm1689, %v1687, %v1691
  %v1694 = vpack.c.bf16 %v1692, %v1692
  %v1695 = vpack.c.bf16 %v1693, %v1693
  %v1728 = vunpack.c.l.b16 %v1642
  %v1729 = vunpack.c.h.b16 %v1642
  %v1730 = vunpack.c.l.b16 %v1643
  %v1731 = vunpack.c.h.b16 %v1643
  %v1732 = vunpack.c.l.b16 %v1644
  %v1733 = vunpack.c.h.b16 %v1644
  %v1734 = vunpack.c.l.b16 %v1645
  %v1735 = vunpack.c.h.b16 %v1645
  %v1736 = vunpack.c.l.b16 %v1646
  %v1737 = vunpack.c.h.b16 %v1646
  %v1738 = vunpack.c.l.b16 %v1647
  %v1739 = vunpack.c.h.b16 %v1647
  %v1740 = vunpack.c.l.b16 %v1648
  %v1741 = vunpack.c.h.b16 %v1648
  %v1742 = vunpack.c.l.b16 %v1649
  %v1743 = vunpack.c.h.b16 %v1649
  %v1744 = vunpack.c.l.b16 %v1650
  %v1745 = vunpack.c.h.b16 %v1650
  %v1746 = vunpack.c.l.b16 %v1651
  %v1747 = vunpack.c.h.b16 %v1651
  %v1748 = vunpack.c.l.b16 %v1652
  %v1749 = vunpack.c.h.b16 %v1652
  %v1750 = vunpack.c.l.b16 %v1653
  %v1751 = vunpack.c.h.b16 %v1653
  %v1752 = vunpack.c.l.b16 %v1654
  %v1753 = vunpack.c.h.b16 %v1654
  %v1754 = vunpack.c.l.b16 %v1655
  %v1755 = vunpack.c.h.b16 %v1655
  %v1756 = vunpack.c.l.b16 %v1656
  %v1757 = vunpack.c.h.b16 %v1656
  %v1758 = vunpack.c.l.b16 %v1657
  %v1759 = vunpack.c.h.b16 %v1657
  %v1760 = vunpack.c.l.b16 %v1658
  %v1761 = vunpack.c.h.b16 %v1658
  %v1762 = vunpack.c.l.b16 %v1659
  %v1763 = vunpack.c.h.b16 %v1659
  %v1764 = vunpack.c.l.b16 %v1660
  %v1765 = vunpack.c.h.b16 %v1660
  %v1766 = vunpack.c.l.b16 %v1661
  %v1767 = vunpack.c.h.b16 %v1661
  %v1768 = vunpack.c.l.b16 %v1662
  %v1769 = vunpack.c.h.b16 %v1662
  %v1770 = vunpack.c.l.b16 %v1663
  %v1771 = vunpack.c.h.b16 %v1663
  %v1772 = vunpack.c.l.b16 %v1664
  %v1773 = vunpack.c.h.b16 %v1664
  %v1774 = vunpack.c.l.b16 %v1665
  %v1775 = vunpack.c.h.b16 %v1665
  %v1776 = vunpack.c.l.b16 %v1666
  %v1777 = vunpack.c.h.b16 %v1666
  %v1778 = vunpack.c.l.b16 %v1667
  %v1779 = vunpack.c.h.b16 %v1667
  %v1780 = vunpack.c.l.b16 %v1668
  %v1781 = vunpack.c.h.b16 %v1668
  %v1782 = vunpack.c.l.b16 %v1669
  %v1783 = vunpack.c.h.b16 %v1669
  %v1784 = vunpack.c.l.b16 %v1670
  %v1785 = vunpack.c.h.b16 %v1670
  %v1786 = vunpack.c.l.b16 %v1671
  %v1787 = vunpack.c.h.b16 %v1671
  %v1788 = vunpack.c.l.b16 %v1672
  %v1789 = vunpack.c.h.b16 %v1672
  %v1790 = vunpack.c.l.b16 %v1673
  %v1791 = vunpack.c.h.b16 %v1673
  %v1792 = vpack.c.b16 %v1730, %v1728
  %v1793 = vpack.c.b16 %v1731, %v1729
  %v1794 = vpack.c.b16 %v1734, %v1732
  %v1795 = vpack.c.b16 %v1735, %v1733
  %v1796 = vpack.c.b16 %v1738, %v1736
  %v1797 = vpack.c.b16 %v1739, %v1737
  %v1798 = vpack.c.b16 %v1742, %v1740
  %v1799 = vpack.c.b16 %v1743, %v1741
  %v1800 = vpack.c.b16 %v1746, %v1744
  %v1801 = vpack.c.b16 %v1747, %v1745
  %v1802 = vpack.c.b16 %v1750, %v1748
  %v1803 = vpack.c.b16 %v1751, %v1749
  %v1804 = vpack.c.b16 %v1754, %v1752
  %v1805 = vpack.c.b16 %v1755, %v1753
  %v1806 = vpack.c.b16 %v1758, %v1756
  %v1807 = vpack.c.b16 %v1759, %v1757
  %v1808 = vpack.c.b16 %v1762, %v1760
  %v1809 = vpack.c.b16 %v1763, %v1761
  %v1810 = vpack.c.b16 %v1766, %v1764
  %v1811 = vpack.c.b16 %v1767, %v1765
  %v1812 = vpack.c.b16 %v1770, %v1768
  %v1813 = vpack.c.b16 %v1771, %v1769
  %v1814 = vpack.c.b16 %v1774, %v1772
  %v1815 = vpack.c.b16 %v1775, %v1773
  %v1816 = vpack.c.b16 %v1778, %v1776
  %v1817 = vpack.c.b16 %v1779, %v1777
  %v1818 = vpack.c.b16 %v1782, %v1780
  %v1819 = vpack.c.b16 %v1783, %v1781
  %v1820 = vpack.c.b16 %v1786, %v1784
  %v1821 = vpack.c.b16 %v1787, %v1785
  %v1822 = vpack.c.b16 %v1790, %v1788
  %v1823 = vpack.c.b16 %v1791, %v1789
  %1856 = vmatprep.subr.bf16.mxu0 %v1793
  %1857 = vmatpush1.bf16.msra.mxu0 %v1792
  %1858 = vmatprep.subr.bf16.mxu0 %v1795
  %1859 = vmatpush1.bf16.msra.mxu0 %v1794
  %1860 = vmatprep.subr.bf16.mxu0 %v1797
  %1861 = vmatpush1.bf16.msra.mxu0 %v1796
  %1862 = vmatprep.subr.bf16.mxu0 %v1799
  %1863 = vmatpush1.bf16.msra.mxu0 %v1798
  %1864 = vmatprep.subr.bf16.mxu0 %v1801
  %1865 = vmatpush1.bf16.msra.mxu0 %v1800
  %1866 = vmatprep.subr.bf16.mxu0 %v1803
  %1867 = vmatpush1.bf16.msra.mxu0 %v1802
  %1868 = vmatprep.subr.bf16.mxu0 %v1805
  %1869 = vmatpush1.bf16.msra.mxu0 %v1804
  %1870 = vmatprep.subr.bf16.mxu0 %v1807
  %1871 = vmatpush1.bf16.msra.mxu0 %v1806
  %1872 = vmatprep.subr.bf16.mxu0 %v1809
  %1873 = vmatpush1.bf16.msra.mxu0 %v1808
  %1874 = vmatprep.subr.bf16.mxu0 %v1811
  %1875 = vmatpush1.bf16.msra.mxu0 %v1810
  %1876 = vmatprep.subr.bf16.mxu0 %v1813
  %1877 = vmatpush1.bf16.msra.mxu0 %v1812
  %1878 = vmatprep.subr.bf16.mxu0 %v1815
  %1879 = vmatpush1.bf16.msra.mxu0 %v1814
  %1880 = vmatprep.subr.bf16.mxu0 %v1817
  %1881 = vmatpush1.bf16.msra.mxu0 %v1816
  %1882 = vmatprep.subr.bf16.mxu0 %v1819
  %1883 = vmatpush1.bf16.msra.mxu0 %v1818
  %1884 = vmatprep.subr.bf16.mxu0 %v1821
  %1885 = vmatpush1.bf16.msra.mxu0 %v1820
  %1886 = vmatprep.subr.bf16.mxu0 %v1823
  %1887 = vmatpush1.bf16.msra.mxu0 %v1822
  %1888 = vmatprep.mubr.bf16.mxu0 %v1695
  %1889 = vmatmul.mubr.bf16.gmra.mrb[0].mxu0 %v1694
  %v1890 = vpop.f32.mrb[0].mxu0
  %v1891 = vadd.f32 0.0, %v1890
  %v1892 = vpop.f32.mrb[0].mxu0
  %v1893 = vadd.f32 0.0, %v1892
  %v1894 = vpop.f32.mrb[0].mxu0
  %v1895 = vpop.f32.mrb[0].mxu0
  %1896 = vdwg.mxu0
  %v1897 = vrot.slane %v1891, 4
  %v1898 = vadd.f32 %v1891, %v1897
  %v1899 = vrot.slane %v1898, 2
  %v1900 = vadd.f32 %v1898, %v1899
  %v1901 = vrot.slane %v1900, 1
  %v1902 = vadd.f32 %v1900, %v1901
  %v1903 = vrot.slane %v1893, 4
  %v1904 = vadd.f32 %v1893, %v1903
  %v1905 = vrot.slane %v1904, 2
  %v1906 = vadd.f32 %v1904, %v1905
  %v1907 = vrot.slane %v1906, 1
  %v1908 = vadd.f32 %v1906, %v1907
  %v1909 = vadd.f32 %v1902, 0.0
  %v1910 = vadd.f32 %v1908, 0.0
  %v1911 = vmul.f32 %v1891, %v1891
  %v1912 = vmul.f32 %v1893, %v1893
  %v1913 = vrot.slane %v1911, 4
  %v1914 = vadd.f32 %v1911, %v1913
  %v1915 = vrot.slane %v1914, 2
  %v1916 = vadd.f32 %v1914, %v1915
  %v1917 = vrot.slane %v1916, 1
  %v1918 = vadd.f32 %v1916, %v1917
  %v1919 = vrot.slane %v1912, 4
  %v1920 = vadd.f32 %v1912, %v1919
  %v1921 = vrot.slane %v1920, 2
  %v1922 = vadd.f32 %v1920, %v1921
  %v1923 = vrot.slane %v1922, 1
  %v1924 = vadd.f32 %v1922, %v1923
  %v1925 = vadd.f32 %v1918, 0.0
  %v1926 = vadd.f32 %v1924, 0.0
  %1927 = vst [vmem:[#allocation5] sm:$0xff] %v1891
  %1928 = vst [vmem:[#allocation5 + $0x8] sm:$0xff] %v1893
  %v1929 = vld [vmem:[#allocation4 + $0x10] sm:$0xff]
  %v1930 = vld [vmem:[#allocation4 + $0x18] sm:$0xff]
  %v1931 = vmul.f32 %v1929, %v1679
  %v1932 = vmul.f32 %v1930, %v1679
  %v1933 = vadd.f32 %v1931, %v1685
  %v1934 = vadd.f32 %v1932, %v1685
  %vm1935 = vcmp.ge.f32.partialorder %v1933, 0.0
  %vm1936 = vcmp.ge.f32.partialorder %v1934, 0.0
  %v1937 = vmul.f32 %v1933, 0.1
  %v1938 = vmul.f32 %v1934, 0.1
  %v1939 = vsel %vm1935, %v1933, %v1937
  %v1940 = vsel %vm1936, %v1934, %v1938
  %v1941 = vpack.c.bf16 %v1939, %v1939
  %v1942 = vpack.c.bf16 %v1940, %v1940
  %1943 = vmatprep.subr.bf16.mxu0 %v1793
  %1944 = vmatpush1.bf16.msra.mxu0 %v1792
  %1945 = vmatprep.subr.bf16.mxu0 %v1795
  %1946 = vmatpush1.bf16.msra.mxu0 %v1794
  %1947 = vmatprep.subr.bf16.mxu0 %v1797
  %1948 = vmatpush1.bf16.msra.mxu0 %v1796
  %1949 = vmatprep.subr.bf16.mxu0 %v1799
  %1950 = vmatpush1.bf16.msra.mxu0 %v1798
  %1951 = vmatprep.subr.bf16.mxu0 %v1801
  %1952 = vmatpush1.bf16.msra.mxu0 %v1800
  %1953 = vmatprep.subr.bf16.mxu0 %v1803
  %1954 = vmatpush1.bf16.msra.mxu0 %v1802
  %1955 = vmatprep.subr.bf16.mxu0 %v1805
  %1956 = vmatpush1.bf16.msra.mxu0 %v1804
  %1957 = vmatprep.subr.bf16.mxu0 %v1807
  %1958 = vmatpush1.bf16.msra.mxu0 %v1806
  %1959 = vmatprep.subr.bf16.mxu0 %v1809
  %1960 = vmatpush1.bf16.msra.mxu0 %v1808
  %1961 = vmatprep.subr.bf16.mxu0 %v1811
  %1962 = vmatpush1.bf16.msra.mxu0 %v1810
  %1963 = vmatprep.subr.bf16.mxu0 %v1813
  %1964 = vmatpush1.bf16.msra.mxu0 %v1812
  %1965 = vmatprep.subr.bf16.mxu0 %v1815
  %1966 = vmatpush1.bf16.msra.mxu0 %v1814
  %1967 = vmatprep.subr.bf16.mxu0 %v1817
  %1968 = vmatpush1.bf16.msra.mxu0 %v1816
  %1969 = vmatprep.subr.bf16.mxu0 %v1819
  %1970 = vmatpush1.bf16.msra.mxu0 %v1818
  %1971 = vmatprep.subr.bf16.mxu0 %v1821
  %1972 = vmatpush1.bf16.msra.mxu0 %v1820
  %1973 = vmatprep.subr.bf16.mxu0 %v1823
  %1974 = vmatpush1.bf16.msra.mxu0 %v1822
  %1975 = vmatprep.mubr.bf16.mxu0 %v1942
  %1976 = vmatmul.mubr.bf16.gmra.mrb[0].mxu0 %v1941
  %v1977 = vpop.f32.mrb[0].mxu0
  %v1978 = vadd.f32 0.0, %v1977
  %v1979 = vpop.f32.mrb[0].mxu0
  %v1980 = vadd.f32 0.0, %v1979
  %v1981 = vpop.f32.mrb[0].mxu0
  %v1982 = vpop.f32.mrb[0].mxu0
  %1983 = vdwg.mxu0
  %v1984 = vrot.slane %v1978, 4
  %v1985 = vadd.f32 %v1978, %v1984
  %v1986 = vrot.slane %v1985, 2
  %v1987 = vadd.f32 %v1985, %v1986
  %v1988 = vrot.slane %v1987, 1
  %v1989 = vadd.f32 %v1987, %v1988
  %v1990 = vrot.slane %v1980, 4
  %v1991 = vadd.f32 %v1980, %v1990
  %v1992 = vrot.slane %v1991, 2
  %v1993 = vadd.f32 %v1991, %v1992
  %v1994 = vrot.slane %v1993, 1
  %v1995 = vadd.f32 %v1993, %v1994
  %v1996 = vadd.f32 %v1909, %v1989
  %v1997 = vadd.f32 %v1910, %v1995
  %v1998 = vmul.f32 %v1978, %v1978
  %v1999 = vmul.f32 %v1980, %v1980
  %v2000 = vrot.slane %v1998, 4
  %v2001 = vadd.f32 %v1998, %v2000
  %v2002 = vrot.slane %v2001, 2
  %v2003 = vadd.f32 %v2001, %v2002
  %v2004 = vrot.slane %v2003, 1
  %v2005 = vadd.f32 %v2003, %v2004
  %v2006 = vrot.slane %v1999, 4
  %v2007 = vadd.f32 %v1999, %v2006
  %v2008 = vrot.slane %v2007, 2
  %v2009 = vadd.f32 %v2007, %v2008
  %v2010 = vrot.slane %v2009, 1
  %v2011 = vadd.f32 %v2009, %v2010
  %v2012 = vadd.f32 %v1925, %v2005
  %v2013 = vadd.f32 %v1926, %v2011
  %2014 = vst [vmem:[#allocation5 + $0x10] sm:$0xff] %v1978
  %2015 = vst [vmem:[#allocation5 + $0x18] sm:$0xff] %v1980
  %v2016 = vld [vmem:[%s11] sm:$0x3]
  %v2017 = vld [vmem:[%s12] sm:$0x3]
  %v2018 = vmul.f32 %v1996, 0.0625
  %v2019 = vmul.f32 %v1997, 0.0625
  %v2020 = vmul.f32 %v2012, 0.0625
  %v2021 = vmul.f32 %v2013, 0.0625
  %v2022 = vmul.f32 %v2018, %v2018
  %v2023 = vmul.f32 %v2019, %v2019
  %v2024 = vsub.f32 %v2020, %v2022
  %v2025 = vsub.f32 %v2021, %v2023
  %v2026 = vadd.f32 %v2024, 1e-05
  %v2027 = vadd.f32 %v2025, 1e-05
  %v2028 = vrsqrt.pop %v2026
  %v2029 = vrsqrt.pop %v2027
  %v2032 = vcombine.low %v2028, %v2029
  %v2034 = vunpack.c.l.s4 1966171168
  %v2035 = vunpack.c.0.s8 %v2034
  %v2036 = vlaneseq
  %v2037 = vshrl.u32 %v2036, 7
  %v2038 = vsub.s32 %v2035, %v2037
  %v2039 = vrot.slane %v2032, %v2038
  %v2041 = vunpack.c.l.s4 1966171168
  %v2042 = vunpack.c.0.s8 %v2041
  %v2043 = vlaneseq
  %v2044 = vshrl.u32 %v2043, 7
  %v2045 = vsub.s32 %v2042, %v2044
  %v2046 = vrot.slane %v2039, %v2045
  %v2048 = vmul.f32 %v2016, %v2046
  %v2050 = vlaneseq
  %v2051 = vshrl.u32 %v2050, 7
  %v2052 = vsub.s32 0, %v2051
  %v2053 = vrot.slane %v2048, %v2052
  %v2054 = vlaneseq
  %v2055 = vshrl.u32 %v2054, 7
  %v2056 = vsub.s32 1, %v2055
  %v2057 = vrot.slane %v2048, %v2056
  %v2060 = vmul.f32 %v2018, %v2053
  %v2061 = vmul.f32 %v2019, %v2057
  %v2064 = vcombine.low %v2060, %v2061
  %v2066 = vunpack.c.l.s4 1966171168
  %v2067 = vunpack.c.0.s8 %v2066
  %v2068 = vlaneseq
  %v2069 = vshrl.u32 %v2068, 7
  %v2070 = vsub.s32 %v2067, %v2069
  %v2071 = vrot.slane %v2064, %v2070
  %v2073 = vunpack.c.l.s4 1966171168
  %v2074 = vunpack.c.0.s8 %v2073
  %v2075 = vlaneseq
  %v2076 = vshrl.u32 %v2075, 7
  %v2077 = vsub.s32 %v2074, %v2076
  %v2078 = vrot.slane %v2071, %v2077
  %v2080 = vsub.f32 %v2017, %v2078
  %v2082 = vlaneseq
  %v2083 = vshrl.u32 %v2082, 7
  %v2084 = vsub.s32 0, %v2083
  %v2085 = vrot.slane %v2080, %v2084
  %v2086 = vlaneseq
  %v2087 = vshrl.u32 %v2086, 7
  %v2088 = vsub.s32 1, %v2087
  %v2089 = vrot.slane %v2080, %v2088
  %v2092 = vld [vmem:[#allocation5] sm:$0xff]
  %v2093 = vld [vmem:[#allocation5 + $0x8] sm:$0xff]
  %v2094 = vld [vmem:[#allocation5 + $0x10] sm:$0xff]
  %v2095 = vld [vmem:[#allocation5 + $0x18] sm:$0xff]
  %v2096 = vlaneseq
  %v2097 = vshrl.u32 %v2096, 7
  %v2098 = vsub.s32 0, %v2097
  %v2099 = vrot.slane %v2053, %v2098
  %v2100 = vlaneseq
  %v2101 = vshrl.u32 %v2100, 7
  %v2102 = vsub.s32 0, %v2101
  %v2103 = vrot.slane %v2057, %v2102
  %v2104 = vmul.f32 %v2092, %v2099
  %v2105 = vmul.f32 %v2093, %v2103
  %v2106 = vmul.f32 %v2094, %v2099
  %v2107 = vmul.f32 %v2095, %v2103
  %v2108 = vlaneseq
  %v2109 = vshrl.u32 %v2108, 7
  %v2110 = vsub.s32 0, %v2109
  %v2111 = vrot.slane %v2085, %v2110
  %v2112 = vlaneseq
  %v2113 = vshrl.u32 %v2112, 7
  %v2114 = vsub.s32 0, %v2113
  %v2115 = vrot.slane %v2089, %v2114
  %v2116 = vadd.f32 %v2104, %v2111
  %v2117 = vadd.f32 %v2105, %v2115
  %v2118 = vadd.f32 %v2106, %v2111
  %v2119 = vadd.f32 %v2107, %v2115
  %vm2120 = vcmp.ge.f32.partialorder %v2116, 0.0
  %vm2121 = vcmp.ge.f32.partialorder %v2117, 0.0
  %vm2122 = vcmp.ge.f32.partialorder %v2118, 0.0
  %vm2123 = vcmp.ge.f32.partialorder %v2119, 0.0
  %v2124 = vmul.f32 %v2116, 0.01
  %v2125 = vmul.f32 %v2117, 0.01
  %v2126 = vmul.f32 %v2118, 0.01
  %v2127 = vmul.f32 %v2119, 0.01
  %v2128 = vsel %vm2120, %v2116, %v2124
  %v2129 = vsel %vm2121, %v2117, %v2125
  %v2130 = vsel %vm2122, %v2118, %v2126
  %v2131 = vsel %vm2123, %v2119, %v2127
  %v2132 = vld [vmem:[%s13] sm:$0xf]
  %v2134 = vlaneseq
  %v2135 = vshrl.u32 %v2134, 7
  %v2136 = vsub.s32 0, %v2135
  %v2137 = vrot.slane %v2132, %v2136
  %v2138 = vlaneseq
  %v2139 = vshrl.u32 %v2138, 7
  %v2140 = vsub.s32 1, %v2139
  %v2141 = vrot.slane %v2132, %v2140
  %v2142 = vlaneseq
  %v2143 = vshrl.u32 %v2142, 7
  %v2144 = vsub.s32 2, %v2143
  %v2145 = vrot.slane %v2132, %v2144
  %v2146 = vlaneseq
  %v2147 = vshrl.u32 %v2146, 7
  %v2148 = vsub.s32 3, %v2147
  %v2149 = vrot.slane %v2132, %v2148
  %v2154 = vmul.f32 %v2128, %v2137
  %v2155 = vmul.f32 %v2129, %v2141
  %v2156 = vmul.f32 %v2130, %v2145
  %v2157 = vmul.f32 %v2131, %v2149
  %v2158 = vadd.f32 %v2154, %v2155
  %v2159 = vadd.f32 %v2158, %v2156
  %v2160 = vadd.f32 %v2159, %v2157
  %2161 = vadd.xlane.f32.xlu0 %v2160
  %v2162 = vpop.xlane.xlu0 %2161
  %v2163 = vld [vmem:[#allocation6] sm:$0x1]
  %v2165 = vlaneseq
  %v2166 = vshrl.u32 %v2165, 7
  %v2167 = vsub.s32 0, %v2166
  %v2168 = vrot.slane %v2163, %v2167
  %v2170 = vadd.f32 %v2162, %v2168
  %vm2171 = vcmp.ge.f32.partialorder %v2170, 0.0
  %v2172 = vmul.f32 %v2170, 0.01
  %v2173 = vsel %vm2171, %v2170, %v2172
  %vm2174 = vcmask 7168
  %2175 = vst.msk [vmem:[%s15] sm:$0xff] %vm2174, %v2173
  // Predicated region
  $region62: #{discriminator_forward.1} parent=0 // pred_check
    _
  $region63: #{discriminator_forward.1} parent=0 // pred_check_branch
    %2177 = sbr.rel (0) target = $region65
  $region64: #{discriminator_forward.1} parent=0 // pred_region
    _
  $region65: #{discriminator_forward.1} parent=0 // pred_fallthru
    _
  // Predicated region
  $region66: #{discriminator_forward.1} parent=0 // pred_check
    _
  $region67: #{discriminator_forward.1} parent=0 // pred_check_branch
    %2179 = sbr.rel (0) target = $region69
  $region68: #{discriminator_forward.1} parent=0 // pred_region
    _
  $region69: #{discriminator_forward.1} parent=0 // pred_fallthru
    _

</llo_original>
